<compile_context>
chip_gen: v6e
topology: v6e:2x2x1
jax: 0.10.0
libtpu: 0.0.40
codegen_flags: <defaults>
</compile_context>

<pallas_src>
import functools
import math

import jax
import jax.numpy as jnp
from jax import lax
from jax.experimental import pallas as pl
from jax.experimental.pallas import tpu as pltpu

# ----------------------------- small GPT-2 config ---------------------------
VOCAB = 128          # gpt2 vocab_size stand-in (lane-dense logits)
N_EMBD = 32          # hidden size
N_HEAD = 4
N_LAYER = 2
N_POS = 32           # max positions
PAD_ID = 0           # config.pad_token_id = 0
EOS_ID = VOCAB - 1   # config.eos_token_id stand-in
LN_EPS = 1e-5
NEG_INF = -1e9
HEAD_DIM = N_EMBD // N_HEAD

# ---- packed per-layer weight slab layout ----
# w_sq slab: 8 (E, E) matrices per layer
IW_Q, IW_K, IW_V, IW_AO, IW_QC, IW_KC, IW_VC, IW_CO = range(8)
N_WSQ = 8
# vecs slab: 15 (E,) vectors per layer (LN gammas/betas + projection biases)
(IV_LN1G, IV_LN1B, IV_BQ, IV_BK, IV_BV, IV_BAO,
 IV_LNXG, IV_LNXB, IV_BQC, IV_BKC, IV_BVC, IV_BCO,
 IV_LN2G, IV_LN2B, IV_BPR) = range(15)
N_VEC = 15


# --------------------------- in-kernel helper math ---------------------------
def _layernorm(x, g, b):
    mu = jnp.mean(x, axis=-1, keepdims=True)
    xc = x - mu
    var = jnp.mean(xc * xc, axis=-1, keepdims=True)
    return xc * lax.rsqrt(var + LN_EPS) * g + b


def _gelu(x):  # GPT-2 gelu_new (tanh approximation)
    return 0.5 * x * (1.0 + jnp.tanh(0.7978845608028654
                                     * (x + 0.044715 * x * x * x)))


def _mha(q, k, v, bias, scale):
    # q: (Nq, E) f32, k/v: (Nk, E) f32, bias broadcastable to (Nq, Nk).
    # Heads are static lane slices; per-head outputs are concatenated once
    # (no scratch, no masked partial stores).
    outs = []
    for h in range(N_HEAD):
        lo, hi = h * HEAD_DIM, (h + 1) * HEAD_DIM
        qh = q[:, lo:hi].astype(jnp.bfloat16)
        kh = k[:, lo:hi].astype(jnp.bfloat16)
        vh = v[:, lo:hi].astype(jnp.bfloat16)
        s = lax.dot_general(qh, kh, (((1,), (1,)), ((), ())),
                            preferred_element_type=jnp.float32) * scale + bias
        m = jnp.max(s, axis=-1, keepdims=True)
        p = jnp.exp(s - m)
        p = p * pl.reciprocal(jnp.sum(p, axis=-1, keepdims=True), approx=True)
        outs.append(jnp.dot(p.astype(jnp.bfloat16), vh,
                            preferred_element_type=jnp.float32))
    return jnp.concatenate(outs, axis=-1)                 # (Nq, E)


# ------------------------------- fused kernel --------------------------------
def _decoder_kernel(
    # per-batch data (blocked on grid axis b)
    tokmeta_ref,      # (1, T, 2) int32: [...,0]=input_ids, [...,1]=labels
    kmask_ref,        # (1, 1, T) int32: decoder attention_mask (key-row layout)
    cmask_ref,        # (1, 1, S) int32: encoder attention_mask
    enc_ref,          # (1, S, E) bf16: encoder_hidden_states
    # global / stacked params (full-array blocks, resident across grid)
    wte_ref,          # (V, E)  bf16   (tied LM head)
    wpe_ref,          # (P, E)  f32
    lnf_ref,          # (2, E)  f32    [gamma; beta]
    w_sq_ref,         # (L*8, E, E)   bf16
    vecs_ref,         # (L*15, E)     f32
    w_fc_ref,         # (L, E, 4E)    bf16
    b_fc_ref,         # (L, 4E)       f32
    w_pr_ref,         # (L, 4E, E)    bf16
    # output: (1, T+1, V)  rows 0..T-1 = logits, row T lanes 0/1 = [loss_sum, cnt]
    out_ref,
):
    E = N_EMBD
    T = tokmeta_ref.shape[1]
    S = cmask_ref.shape[2]
    scale = 1.0 / math.sqrt(HEAD_DIM)

    meta = tokmeta_ref[0]                                  # (T, 2)
    ids = meta[:, 0:1]                                     # (T, 1)
    labels = meta[:, 1:2]                                  # (T, 1)
    kmask = kmask_ref[0]                                   # (1, T)
    cmask = cmask_ref[0]                                   # (1, S)
    enc = enc_ref[0]                                       # (S, E) bf16

    # ---- token embedding via one-hot MXU matmul (toy V=128; see TODO) ----
    ids_in = jnp.where(ids == EOS_ID, PAD_ID, ids)         # eos -> pad (masked_fill_)
    vcol = lax.broadcasted_iota(jnp.int32, (T, VOCAB), 1)
    tok_oh = jnp.where(vcol == ids_in, 1.0, 0.0).astype(jnp.bfloat16)
    h = jnp.dot(tok_oh, wte_ref[...], preferred_element_type=jnp.float32)
    # positional embedding: positions within a batch are exactly 0..T-1
    h = h + wpe_ref[0:T, :]

    # ---- attention biases, built in-kernel (causal + key padding / cross) ----
    qpos = lax.broadcasted_iota(jnp.int32, (T, T), 0)
    kpos = lax.broadcasted_iota(jnp.int32, (T, T), 1)
    self_bias = jnp.where((qpos >= kpos) & (kmask > 0), 0.0, NEG_INF)   # (T, T)
    cross_bias = jnp.where(cmask > 0, 0.0, NEG_INF)                      # (1, S)

    for l in range(N_LAYER):
        wb = l * N_WSQ
        vb = l * N_VEC

        def W(i, wb=wb):
            return w_sq_ref[wb + i]                        # (E, E) bf16

        def Vv(i, vb=vb):
            return vecs_ref[vb + i:vb + i + 1, :]          # (1, E) f32

        # --- causal self-attention (pre-LN); separate q/k/v matmuls ---
        x = _layernorm(h, Vv(IV_LN1G), Vv(IV_LN1B))
        xb = x.astype(jnp.bfloat16)
        q = jnp.dot(xb, W(IW_Q), preferred_element_type=jnp.float32) + Vv(IV_BQ)
        k = jnp.dot(xb, W(IW_K), preferred_element_type=jnp.float32) + Vv(IV_BK)
        v = jnp.dot(xb, W(IW_V), preferred_element_type=jnp.float32) + Vv(IV_BV)
        a = _mha(q, k, v, self_bias, scale)
        h = h + jnp.dot(a.astype(jnp.bfloat16), W(IW_AO),
                        preferred_element_type=jnp.float32) + Vv(IV_BAO)

        # --- cross-attention to encoder_hidden_states ---
        x = _layernorm(h, Vv(IV_LNXG), Vv(IV_LNXB))
        xb = x.astype(jnp.bfloat16)
        q = jnp.dot(xb, W(IW_QC), preferred_element_type=jnp.float32) + Vv(IV_BQC)
        k = jnp.dot(enc, W(IW_KC), preferred_element_type=jnp.float32) + Vv(IV_BKC)
        v = jnp.dot(enc, W(IW_VC), preferred_element_type=jnp.float32) + Vv(IV_BVC)
        a = _mha(q, k, v, cross_bias, scale)
        h = h + jnp.dot(a.astype(jnp.bfloat16), W(IW_CO),
                        preferred_element_type=jnp.float32) + Vv(IV_BCO)

        # --- MLP with fused tanh-GELU ---
        x = _layernorm(h, Vv(IV_LN2G), Vv(IV_LN2B))
        x = _gelu(jnp.dot(x.astype(jnp.bfloat16), w_fc_ref[l],
                          preferred_element_type=jnp.float32)
                  + b_fc_ref[l:l + 1, :])
        h = h + jnp.dot(x.astype(jnp.bfloat16), w_pr_ref[l],
                        preferred_element_type=jnp.float32) + Vv(IV_BPR)

    # ---- final LN + tied LM head (contract against wte, no transpose copy) --
    hf = _layernorm(h, lnf_ref[0:1, :], lnf_ref[1:2, :])
    logits = lax.dot_general(hf.astype(jnp.bfloat16), wte_ref[...],
                             (((1,), (1,)), ((), ())),
                             preferred_element_type=jnp.float32)    # (T, V)
    out_ref[0, 0:T, :] = logits

    # ---- fused cross-entropy partials (ignore_index = PAD_ID) ----
    m = jnp.max(logits, axis=-1, keepdims=True)
    lse = jnp.log(jnp.sum(jnp.exp(logits - m), axis=-1, keepdims=True)) + m
    true_logit = jnp.sum(jnp.where(vcol == labels, logits, 0.0),
                         axis=-1, keepdims=True)
    valid = (labels != PAD_ID).astype(jnp.float32)
    loss_sum = jnp.sum((lse - true_logit) * valid)
    cnt = jnp.sum(valid)
    lane = lax.broadcasted_iota(jnp.int32, (1, VOCAB), 1)
    out_ref[0, T:T + 1, :] = jnp.where(
        lane == 0, loss_sum, jnp.where(lane == 1, cnt, 0.0))


# --------------------------- params (synthetic init) -------------------------
def init_params(key):
    def norm(k, shape, std=0.02):
        return (std * jax.random.normal(k, shape, dtype=jnp.float32)
                ).astype(jnp.bfloat16)

    keys = iter(jax.random.split(key, 8))
    L, E = N_LAYER, N_EMBD

    vecs = jnp.zeros((L * N_VEC, E), jnp.float32)
    for l in range(L):
        for g_idx in (IV_LN1G, IV_LNXG, IV_LN2G):
            vecs = vecs.at[l * N_VEC + g_idx].set(1.0)

    return {
        # bf16 for MXU-fed weights; f32 for LN params / biases / wpe
        "wte": norm(next(keys), (VOCAB, E)),
        "wpe": 0.02 * jax.random.normal(next(keys), (N_POS, E), jnp.float32),
        "ln_f": jnp.concatenate([jnp.ones((1, E), jnp.float32),
                                 jnp.zeros((1, E), jnp.float32)], axis=0),
        "w_sq": norm(next(keys), (L * N_WSQ, E, E)),
        "vecs": vecs,
        "w_fc": norm(next(keys), (L, E, 4 * E)),
        "b_fc": jnp.zeros((L, 4 * E), jnp.float32),
        "w_pr": norm(next(keys), (L, 4 * E, E)),
    }


# -------------------------------- forward pass -------------------------------
@functools.partial(jax.jit, static_argnames=("mode",))
def gpt_visual_dialog_decoder_forward(params, input_ids, attention_mask,
                                      encoder_hidden_states,
                                      encoder_attention_mask, mode="train"):
    B, T = input_ids.shape
    S = encoder_hidden_states.shape[1]

    # labels-is-None path of the reference: shift-left labels (last col = pad),
    # built from the RAW input_ids (eos stays a target); eos->pad replacement
    # for the embedding happens inside the kernel.
    labels = jnp.zeros_like(input_ids)
    labels = labels.at[:, :-1].set(input_ids[:, 1:])

    tokmeta = jnp.stack([input_ids.astype(jnp.int32),
                         labels.astype(jnp.int32)], axis=-1)   # (B, T, 2)
    kmask = attention_mask.astype(jnp.int32).reshape(B, 1, T)
    cmask = encoder_attention_mask.astype(jnp.int32).reshape(B, 1, S)
    enc = encoder_hidden_states.astype(jnp.bfloat16)            # (B, S, E) bf16

    def full_spec(x):
        nd = x.ndim
        return pl.BlockSpec(x.shape, lambda b, nd=nd: (0,) * nd)

    def batch_spec(shape):
        nd = len(shape)
        return pl.BlockSpec((1,) + tuple(shape[1:]),
                            lambda b, nd=nd: (b,) + (0,) * (nd - 1))

    operands = (
        tokmeta, kmask, cmask, enc,
        params["wte"], params["wpe"], params["ln_f"],
        params["w_sq"], params["vecs"], params["w_fc"], params["b_fc"],
        params["w_pr"],
    )
    in_specs = [
        batch_spec(tokmeta.shape), batch_spec(kmask.shape),
        batch_spec(cmask.shape), batch_spec(enc.shape),
        full_spec(params["wte"]), full_spec(params["wpe"]),
        full_spec(params["ln_f"]), full_spec(params["w_sq"]),
        full_spec(params["vecs"]), full_spec(params["w_fc"]),
        full_spec(params["b_fc"]), full_spec(params["w_pr"]),
    ]

    out_shape = jax.ShapeDtypeStruct((B, T + 1, VOCAB), jnp.float32)
    out = pl.pallas_call(
        _decoder_kernel,
        grid=(B,),
        out_shape=out_shape,
        in_specs=in_specs,
        out_specs=batch_spec(out_shape.shape),
        compiler_params=pltpu.CompilerParams(
            dimension_semantics=("parallel",),
            vmem_limit_bytes=32 * 1024 * 1024),
    )(*operands)

    logits = out[:, :T, :]                                   # (B, T, V)
    loss_sum = jnp.sum(out[:, T, 0])
    cnt = jnp.sum(out[:, T, 1])
    loss_val = loss_sum / jnp.maximum(cnt, 1.0)
    loss = loss_val if ("train" in mode or "eval" in mode) else None

    return {"loss": loss, "logits": logits, "past_key_values": None,
            "decoder_hidden_states": None, "decoder_attentions": None,
            "cross_attentions": None}


# ------------------------------------ main ------------------------------------
if __name__ == "__main__":
    key = jax.random.PRNGKey(0)
    k_par, k_ids, k_enc = jax.random.split(key, 3)
    params = init_params(k_par)

    B, T, S = 2, 8, 8
    input_ids = jax.random.randint(k_ids, (B, T), 1, VOCAB, dtype=jnp.int32)
    input_ids = input_ids.at[0, -1].set(EOS_ID)           # exercise eos->pad fill
    attention_mask = jnp.ones((B, T), jnp.int32).at[1, -2:].set(0)
    encoder_hidden_states = 0.02 * jax.random.normal(
        k_enc, (B, S, N_EMBD), dtype=jnp.float32)
    encoder_attention_mask = jnp.ones((B, S), jnp.int32).at[1, -3:].set(0)

    out = gpt_visual_dialog_decoder_forward(
        params, input_ids, attention_mask, encoder_hidden_states,
        encoder_attention_mask, mode="train")
    jax.block_until_ready((out["loss"], out["logits"]))
    assert out["logits"].shape == (B, T, VOCAB)
    assert bool(jnp.all(jnp.isfinite(out["logits"])))
    assert bool(jnp.isfinite(out["loss"]))
    print("KERNEL_OK")
</pallas_src>

<mosaic_0001>
module attributes {stable_mosaic.version = 11 : i64} {
  func.func @_decoder_kernel(%arg0: i32, %arg1: memref<1x8x2xi32, #tpu.memory_space<vmem>>, %arg2: memref<1x1x8xi32, #tpu.memory_space<vmem>>, %arg3: memref<1x1x8xi32, #tpu.memory_space<vmem>>, %arg4: memref<1x8x32xbf16, #tpu.memory_space<vmem>>, %arg5: memref<128x32xbf16, #tpu.memory_space<vmem>>, %arg6: memref<32x32xf32, #tpu.memory_space<vmem>>, %arg7: memref<2x32xf32, #tpu.memory_space<vmem>>, %arg8: memref<16x32x32xbf16, #tpu.memory_space<vmem>>, %arg9: memref<30x32xf32, #tpu.memory_space<vmem>>, %arg10: memref<2x32x128xbf16, #tpu.memory_space<vmem>>, %arg11: memref<2x128xf32, #tpu.memory_space<vmem>>, %arg12: memref<2x128x32xbf16, #tpu.memory_space<vmem>>, %arg13: memref<1x9x128xf32, #tpu.memory_space<vmem>>) attributes {dimension_semantics = [#tpu.dimension_semantics<parallel>], iteration_bounds = array<i64: 2>, scalar_prefetch = 0 : i64, scratch_operands = 0 : i64, tpu.core_type = #tpu.core_type<tc>, window_params = [{transform_indices = @transform_0, window_bounds = array<i64: 1, 8, 2>}, {transform_indices = @transform_1, window_bounds = array<i64: 1, 1, 8>}, {transform_indices = @transform_2, window_bounds = array<i64: 1, 1, 8>}, {transform_indices = @transform_3, window_bounds = array<i64: 1, 8, 32>}, {pipeline_mode = #tpu.pipeline_mode<synchronous>, transform_indices = @transform_4, window_bounds = array<i64: 128, 32>}, {pipeline_mode = #tpu.pipeline_mode<synchronous>, transform_indices = @transform_5, window_bounds = array<i64: 32, 32>}, {pipeline_mode = #tpu.pipeline_mode<synchronous>, transform_indices = @transform_6, window_bounds = array<i64: 2, 32>}, {pipeline_mode = #tpu.pipeline_mode<synchronous>, transform_indices = @transform_7, window_bounds = array<i64: 16, 32, 32>}, {pipeline_mode = #tpu.pipeline_mode<synchronous>, transform_indices = @transform_8, window_bounds = array<i64: 30, 32>}, {pipeline_mode = #tpu.pipeline_mode<synchronous>, transform_indices = @transform_9, window_bounds = array<i64: 2, 32, 128>}, {pipeline_mode = #tpu.pipeline_mode<synchronous>, transform_indices = @transform_10, window_bounds = array<i64: 2, 128>}, {pipeline_mode = #tpu.pipeline_mode<synchronous>, transform_indices = @transform_11, window_bounds = array<i64: 2, 128, 32>}, {transform_indices = @transform_12, window_bounds = array<i64: 1, 9, 128>}]} {
    %c0 = arith.constant 0 : index
    %c0_0 = arith.constant 0 : index
    %c0_1 = arith.constant 0 : index
    %0 = vector.load %arg1[%c0, %c0_0, %c0_1] : memref<1x8x2xi32, #tpu.memory_space<vmem>>, vector<1x8x2xi32>
    %1 = vector.shape_cast %0 : vector<1x8x2xi32> to vector<8x2xi32>
    %2 = vector.extract_strided_slice %1 {offsets = [0, 0], sizes = [8, 1], strides = [1, 1]} : vector<8x2xi32> to vector<8x1xi32>
    %3 = vector.extract_strided_slice %1 {offsets = [0, 1], sizes = [8, 1], strides = [1, 1]} : vector<8x2xi32> to vector<8x1xi32>
    %c0_2 = arith.constant 0 : index
    %c0_3 = arith.constant 0 : index
    %c0_4 = arith.constant 0 : index
    %4 = vector.load %arg2[%c0_2, %c0_3, %c0_4] : memref<1x1x8xi32, #tpu.memory_space<vmem>>, vector<1x1x8xi32>
    %5 = vector.shape_cast %4 : vector<1x1x8xi32> to vector<1x8xi32>
    %c0_5 = arith.constant 0 : index
    %c0_6 = arith.constant 0 : index
    %c0_7 = arith.constant 0 : index
    %6 = vector.load %arg3[%c0_5, %c0_6, %c0_7] : memref<1x1x8xi32, #tpu.memory_space<vmem>>, vector<1x1x8xi32>
    %7 = vector.shape_cast %6 : vector<1x1x8xi32> to vector<1x8xi32>
    %c0_8 = arith.constant 0 : index
    %c0_9 = arith.constant 0 : index
    %c0_10 = arith.constant 0 : index
    %8 = vector.load %arg4[%c0_8, %c0_9, %c0_10] : memref<1x8x32xbf16, #tpu.memory_space<vmem>>, vector<1x8x32xbf16>
    %9 = vector.shape_cast %8 : vector<1x8x32xbf16> to vector<8x32xbf16>
    %c127_i32 = arith.constant 127 : i32
    %10 = vector.broadcast %c127_i32 : i32 to vector<8x1xi32>
    %11 = arith.cmpi eq, %2, %10 : vector<8x1xi32>
    %c0_i32 = arith.constant 0 : i32
    %12 = vector.broadcast %c0_i32 : i32 to vector<8x1xi32>
    %13 = arith.select %11, %12, %2 : vector<8x1xi1>, vector<8x1xi32>
    %14 = tpu.iota {dimensions = array<i32: 1>} : vector<8x128xi32>
    %15 = vector.broadcast %13 : vector<8x1xi32> to vector<8x128xi32>
    %16 = arith.cmpi eq, %14, %15 : vector<8x128xi32>
    %cst = arith.constant 1.000000e+00 : f32
    %cst_11 = arith.constant 0.000000e+00 : f32
    %17 = vector.broadcast %cst : f32 to vector<8x128xf32>
    %18 = vector.broadcast %cst_11 : f32 to vector<8x128xf32>
    %19 = arith.select %16, %17, %18 : vector<8x128xi1>, vector<8x128xf32>
    %20 = arith.truncf %19 : vector<8x128xf32> to vector<8x128xbf16>
    %c0_12 = arith.constant 0 : index
    %c0_13 = arith.constant 0 : index
    %21 = vector.load %arg5[%c0_12, %c0_13] : memref<128x32xbf16, #tpu.memory_space<vmem>>, vector<128x32xbf16>
    %cst_14 = arith.constant dense<0.000000e+00> : vector<8x32xf32>
    %22 = tpu.matmul %20, %21, %cst_14 {dimension_numbers = #tpu.dot_dimension_numbers<[1], [0], [0], [1], [0, 0, 1, 1], [], []>} : vector<8x128xbf16>, vector<128x32xbf16>, vector<8x32xf32> -> vector<8x32xf32>
    %c0_15 = arith.constant 0 : index
    %c0_16 = arith.constant 0 : index
    %23 = vector.load %arg6[%c0_15, %c0_16] : memref<32x32xf32, #tpu.memory_space<vmem>>, vector<8x32xf32>
    %24 = arith.addf %22, %23 : vector<8x32xf32>
    %25 = tpu.iota {dimensions = array<i32: 0>} : vector<8x8xi32>
    %26 = tpu.iota {dimensions = array<i32: 1>} : vector<8x8xi32>
    %27 = arith.cmpi sge, %25, %26 : vector<8x8xi32>
    %c0_i32_17 = arith.constant 0 : i32
    %28 = vector.broadcast %c0_i32_17 : i32 to vector<1x8xi32>
    %29 = arith.cmpi sgt, %5, %28 : vector<1x8xi32>
    %30 = vector.broadcast %29 : vector<1x8xi1> to vector<8x8xi1>
    %31 = arith.andi %27, %30 : vector<8x8xi1>
    %cst_18 = arith.constant 0.000000e+00 : f32
    %cst_19 = arith.constant -1.000000e+09 : f32
    %32 = vector.broadcast %cst_18 : f32 to vector<8x8xf32>
    %33 = vector.broadcast %cst_19 : f32 to vector<8x8xf32>
    %34 = arith.select %31, %32, %33 : vector<8x8xi1>, vector<8x8xf32>
    %c0_i32_20 = arith.constant 0 : i32
    %35 = vector.broadcast %c0_i32_20 : i32 to vector<1x8xi32>
    %36 = arith.cmpi sgt, %7, %35 : vector<1x8xi32>
    %cst_21 = arith.constant 0.000000e+00 : f32
    %cst_22 = arith.constant -1.000000e+09 : f32
    %37 = vector.broadcast %cst_21 : f32 to vector<1x8xf32>
    %38 = vector.broadcast %cst_22 : f32 to vector<1x8xf32>
    %39 = arith.select %36, %37, %38 : vector<1x8xi1>, vector<1x8xf32>
    %c0_23 = arith.constant 0 : index
    %c0_24 = arith.constant 0 : index
    %40 = vector.load %arg9[%c0_23, %c0_24] : memref<30x32xf32, #tpu.memory_space<vmem>>, vector<1x32xf32>
    %c1 = arith.constant 1 : index
    %c0_25 = arith.constant 0 : index
    %41 = vector.load %arg9[%c1, %c0_25] : memref<30x32xf32, #tpu.memory_space<vmem>>, vector<1x32xf32>
    %cst_26 = arith.constant dense<0.000000e+00> : vector<8xf32>
    %42 = vector.multi_reduction <add>, %24, %cst_26 [1] : vector<8x32xf32> to vector<8xf32>
    %43 = vector.shape_cast %42 : vector<8xf32> to vector<8x1xf32>
    %cst_27 = arith.constant 3.200000e+01 : f32
    %44 = vector.broadcast %cst_27 : f32 to vector<8x1xf32>
    %45 = arith.divf %43, %44 : vector<8x1xf32>
    %46 = vector.broadcast %45 : vector<8x1xf32> to vector<8x32xf32>
    %47 = arith.subf %24, %46 : vector<8x32xf32>
    %48 = arith.mulf %47, %47 : vector<8x32xf32>
    %cst_28 = arith.constant dense<0.000000e+00> : vector<8xf32>
    %49 = vector.multi_reduction <add>, %48, %cst_28 [1] : vector<8x32xf32> to vector<8xf32>
    %50 = vector.shape_cast %49 : vector<8xf32> to vector<8x1xf32>
    %cst_29 = arith.constant 3.200000e+01 : f32
    %51 = vector.broadcast %cst_29 : f32 to vector<8x1xf32>
    %52 = arith.divf %50, %51 : vector<8x1xf32>
    %cst_30 = arith.constant 9.99999974E-6 : f32
    %53 = vector.broadcast %cst_30 : f32 to vector<8x1xf32>
    %54 = arith.addf %52, %53 : vector<8x1xf32>
    %55 = math.rsqrt %54 : vector<8x1xf32>
    %56 = vector.broadcast %55 : vector<8x1xf32> to vector<8x32xf32>
    %57 = arith.mulf %47, %56 : vector<8x32xf32>
    %58 = vector.broadcast %40 : vector<1x32xf32> to vector<8x32xf32>
    %59 = arith.mulf %57, %58 : vector<8x32xf32>
    %60 = vector.broadcast %41 : vector<1x32xf32> to vector<8x32xf32>
    %61 = arith.addf %59, %60 : vector<8x32xf32>
    %62 = arith.truncf %61 : vector<8x32xf32> to vector<8x32xbf16>
    %c0_31 = arith.constant 0 : index
    %c0_32 = arith.constant 0 : index
    %c0_33 = arith.constant 0 : index
    %63 = vector.load %arg8[%c0_31, %c0_32, %c0_33] : memref<16x32x32xbf16, #tpu.memory_space<vmem>>, vector<1x32x32xbf16>
    %64 = vector.shape_cast %63 : vector<1x32x32xbf16> to vector<32x32xbf16>
    %cst_34 = arith.constant dense<0.000000e+00> : vector<8x32xf32>
    %65 = tpu.matmul %62, %64, %cst_34 {dimension_numbers = #tpu.dot_dimension_numbers<[1], [0], [0], [1], [0, 0, 1, 1], [], []>} : vector<8x32xbf16>, vector<32x32xbf16>, vector<8x32xf32> -> vector<8x32xf32>
    %c2 = arith.constant 2 : index
    %c0_35 = arith.constant 0 : index
    %66 = vector.load %arg9[%c2, %c0_35] : memref<30x32xf32, #tpu.memory_space<vmem>>, vector<1x32xf32>
    %67 = vector.broadcast %66 : vector<1x32xf32> to vector<8x32xf32>
    %68 = arith.addf %65, %67 : vector<8x32xf32>
    %c1_36 = arith.constant 1 : index
    %c0_37 = arith.constant 0 : index
    %c0_38 = arith.constant 0 : index
    %69 = vector.load %arg8[%c1_36, %c0_37, %c0_38] : memref<16x32x32xbf16, #tpu.memory_space<vmem>>, vector<1x32x32xbf16>
    %70 = vector.shape_cast %69 : vector<1x32x32xbf16> to vector<32x32xbf16>
    %cst_39 = arith.constant dense<0.000000e+00> : vector<8x32xf32>
    %71 = tpu.matmul %62, %70, %cst_39 {dimension_numbers = #tpu.dot_dimension_numbers<[1], [0], [0], [1], [0, 0, 1, 1], [], []>} : vector<8x32xbf16>, vector<32x32xbf16>, vector<8x32xf32> -> vector<8x32xf32>
    %c3 = arith.constant 3 : index
    %c0_40 = arith.constant 0 : index
    %72 = vector.load %arg9[%c3, %c0_40] : memref<30x32xf32, #tpu.memory_space<vmem>>, vector<1x32xf32>
    %73 = vector.broadcast %72 : vector<1x32xf32> to vector<8x32xf32>
    %74 = arith.addf %71, %73 : vector<8x32xf32>
    %c2_41 = arith.constant 2 : index
    %c0_42 = arith.constant 0 : index
    %c0_43 = arith.constant 0 : index
    %75 = vector.load %arg8[%c2_41, %c0_42, %c0_43] : memref<16x32x32xbf16, #tpu.memory_space<vmem>>, vector<1x32x32xbf16>
    %76 = vector.shape_cast %75 : vector<1x32x32xbf16> to vector<32x32xbf16>
    %cst_44 = arith.constant dense<0.000000e+00> : vector<8x32xf32>
    %77 = tpu.matmul %62, %76, %cst_44 {dimension_numbers = #tpu.dot_dimension_numbers<[1], [0], [0], [1], [0, 0, 1, 1], [], []>} : vector<8x32xbf16>, vector<32x32xbf16>, vector<8x32xf32> -> vector<8x32xf32>
    %c4 = arith.constant 4 : index
    %c0_45 = arith.constant 0 : index
    %78 = vector.load %arg9[%c4, %c0_45] : memref<30x32xf32, #tpu.memory_space<vmem>>, vector<1x32xf32>
    %79 = vector.broadcast %78 : vector<1x32xf32> to vector<8x32xf32>
    %80 = arith.addf %77, %79 : vector<8x32xf32>
    %81 = vector.extract_strided_slice %68 {offsets = [0, 0], sizes = [8, 8], strides = [1, 1]} : vector<8x32xf32> to vector<8x8xf32>
    %82 = arith.truncf %81 : vector<8x8xf32> to vector<8x8xbf16>
    %83 = vector.extract_strided_slice %74 {offsets = [0, 0], sizes = [8, 8], strides = [1, 1]} : vector<8x32xf32> to vector<8x8xf32>
    %84 = arith.truncf %83 : vector<8x8xf32> to vector<8x8xbf16>
    %85 = vector.extract_strided_slice %80 {offsets = [0, 0], sizes = [8, 8], strides = [1, 1]} : vector<8x32xf32> to vector<8x8xf32>
    %86 = arith.truncf %85 : vector<8x8xf32> to vector<8x8xbf16>
    %cst_46 = arith.constant dense<0.000000e+00> : vector<8x8xf32>
    %87 = tpu.matmul %82, %84, %cst_46 {dimension_numbers = #tpu.dot_dimension_numbers<[1], [1], [0], [0], [0, 0, 1, 0], [], []>} : vector<8x8xbf16>, vector<8x8xbf16>, vector<8x8xf32> -> vector<8x8xf32>
    %cst_47 = arith.constant 0.353553385 : f32
    %88 = vector.broadcast %cst_47 : f32 to vector<8x8xf32>
    %89 = arith.mulf %87, %88 : vector<8x8xf32>
    %90 = arith.addf %89, %34 : vector<8x8xf32>
    %cst_48 = arith.constant dense<0xFF800000> : vector<8xf32>
    %91 = vector.multi_reduction <maximumf>, %90, %cst_48 [1] : vector<8x8xf32> to vector<8xf32>
    %92 = vector.shape_cast %91 : vector<8xf32> to vector<8x1xf32>
    %93 = vector.broadcast %92 : vector<8x1xf32> to vector<8x8xf32>
    %94 = arith.subf %90, %93 : vector<8x8xf32>
    %95 = math.exp %94 : vector<8x8xf32>
    %cst_49 = arith.constant dense<0.000000e+00> : vector<8xf32>
    %96 = vector.multi_reduction <add>, %95, %cst_49 [1] : vector<8x8xf32> to vector<8xf32>
    %97 = vector.shape_cast %96 : vector<8xf32> to vector<8x1xf32>
    %98 = tpu.reciprocal %97 {approx = true} : vector<8x1xf32> -> vector<8x1xf32>
    %99 = vector.broadcast %98 : vector<8x1xf32> to vector<8x8xf32>
    %100 = arith.mulf %95, %99 : vector<8x8xf32>
    %101 = arith.truncf %100 : vector<8x8xf32> to vector<8x8xbf16>
    %cst_50 = arith.constant dense<0.000000e+00> : vector<8x8xf32>
    %102 = tpu.matmul %101, %86, %cst_50 {dimension_numbers = #tpu.dot_dimension_numbers<[1], [0], [0], [1], [0, 0, 1, 1], [], []>} : vector<8x8xbf16>, vector<8x8xbf16>, vector<8x8xf32> -> vector<8x8xf32>
    %103 = vector.extract_strided_slice %68 {offsets = [0, 8], sizes = [8, 8], strides = [1, 1]} : vector<8x32xf32> to vector<8x8xf32>
    %104 = arith.truncf %103 : vector<8x8xf32> to vector<8x8xbf16>
    %105 = vector.extract_strided_slice %74 {offsets = [0, 8], sizes = [8, 8], strides = [1, 1]} : vector<8x32xf32> to vector<8x8xf32>
    %106 = arith.truncf %105 : vector<8x8xf32> to vector<8x8xbf16>
    %107 = vector.extract_strided_slice %80 {offsets = [0, 8], sizes = [8, 8], strides = [1, 1]} : vector<8x32xf32> to vector<8x8xf32>
    %108 = arith.truncf %107 : vector<8x8xf32> to vector<8x8xbf16>
    %cst_51 = arith.constant dense<0.000000e+00> : vector<8x8xf32>
    %109 = tpu.matmul %104, %106, %cst_51 {dimension_numbers = #tpu.dot_dimension_numbers<[1], [1], [0], [0], [0, 0, 1, 0], [], []>} : vector<8x8xbf16>, vector<8x8xbf16>, vector<8x8xf32> -> vector<8x8xf32>
    %cst_52 = arith.constant 0.353553385 : f32
    %110 = vector.broadcast %cst_52 : f32 to vector<8x8xf32>
    %111 = arith.mulf %109, %110 : vector<8x8xf32>
    %112 = arith.addf %111, %34 : vector<8x8xf32>
    %cst_53 = arith.constant dense<0xFF800000> : vector<8xf32>
    %113 = vector.multi_reduction <maximumf>, %112, %cst_53 [1] : vector<8x8xf32> to vector<8xf32>
    %114 = vector.shape_cast %113 : vector<8xf32> to vector<8x1xf32>
    %115 = vector.broadcast %114 : vector<8x1xf32> to vector<8x8xf32>
    %116 = arith.subf %112, %115 : vector<8x8xf32>
    %117 = math.exp %116 : vector<8x8xf32>
    %cst_54 = arith.constant dense<0.000000e+00> : vector<8xf32>
    %118 = vector.multi_reduction <add>, %117, %cst_54 [1] : vector<8x8xf32> to vector<8xf32>
    %119 = vector.shape_cast %118 : vector<8xf32> to vector<8x1xf32>
    %120 = tpu.reciprocal %119 {approx = true} : vector<8x1xf32> -> vector<8x1xf32>
    %121 = vector.broadcast %120 : vector<8x1xf32> to vector<8x8xf32>
    %122 = arith.mulf %117, %121 : vector<8x8xf32>
    %123 = arith.truncf %122 : vector<8x8xf32> to vector<8x8xbf16>
    %cst_55 = arith.constant dense<0.000000e+00> : vector<8x8xf32>
    %124 = tpu.matmul %123, %108, %cst_55 {dimension_numbers = #tpu.dot_dimension_numbers<[1], [0], [0], [1], [0, 0, 1, 1], [], []>} : vector<8x8xbf16>, vector<8x8xbf16>, vector<8x8xf32> -> vector<8x8xf32>
    %125 = vector.extract_strided_slice %68 {offsets = [0, 16], sizes = [8, 8], strides = [1, 1]} : vector<8x32xf32> to vector<8x8xf32>
    %126 = arith.truncf %125 : vector<8x8xf32> to vector<8x8xbf16>
    %127 = vector.extract_strided_slice %74 {offsets = [0, 16], sizes = [8, 8], strides = [1, 1]} : vector<8x32xf32> to vector<8x8xf32>
    %128 = arith.truncf %127 : vector<8x8xf32> to vector<8x8xbf16>
    %129 = vector.extract_strided_slice %80 {offsets = [0, 16], sizes = [8, 8], strides = [1, 1]} : vector<8x32xf32> to vector<8x8xf32>
    %130 = arith.truncf %129 : vector<8x8xf32> to vector<8x8xbf16>
    %cst_56 = arith.constant dense<0.000000e+00> : vector<8x8xf32>
    %131 = tpu.matmul %126, %128, %cst_56 {dimension_numbers = #tpu.dot_dimension_numbers<[1], [1], [0], [0], [0, 0, 1, 0], [], []>} : vector<8x8xbf16>, vector<8x8xbf16>, vector<8x8xf32> -> vector<8x8xf32>
    %cst_57 = arith.constant 0.353553385 : f32
    %132 = vector.broadcast %cst_57 : f32 to vector<8x8xf32>
    %133 = arith.mulf %131, %132 : vector<8x8xf32>
    %134 = arith.addf %133, %34 : vector<8x8xf32>
    %cst_58 = arith.constant dense<0xFF800000> : vector<8xf32>
    %135 = vector.multi_reduction <maximumf>, %134, %cst_58 [1] : vector<8x8xf32> to vector<8xf32>
    %136 = vector.shape_cast %135 : vector<8xf32> to vector<8x1xf32>
    %137 = vector.broadcast %136 : vector<8x1xf32> to vector<8x8xf32>
    %138 = arith.subf %134, %137 : vector<8x8xf32>
    %139 = math.exp %138 : vector<8x8xf32>
    %cst_59 = arith.constant dense<0.000000e+00> : vector<8xf32>
    %140 = vector.multi_reduction <add>, %139, %cst_59 [1] : vector<8x8xf32> to vector<8xf32>
    %141 = vector.shape_cast %140 : vector<8xf32> to vector<8x1xf32>
    %142 = tpu.reciprocal %141 {approx = true} : vector<8x1xf32> -> vector<8x1xf32>
    %143 = vector.broadcast %142 : vector<8x1xf32> to vector<8x8xf32>
    %144 = arith.mulf %139, %143 : vector<8x8xf32>
    %145 = arith.truncf %144 : vector<8x8xf32> to vector<8x8xbf16>
    %cst_60 = arith.constant dense<0.000000e+00> : vector<8x8xf32>
    %146 = tpu.matmul %145, %130, %cst_60 {dimension_numbers = #tpu.dot_dimension_numbers<[1], [0], [0], [1], [0, 0, 1, 1], [], []>} : vector<8x8xbf16>, vector<8x8xbf16>, vector<8x8xf32> -> vector<8x8xf32>
    %147 = vector.extract_strided_slice %68 {offsets = [0, 24], sizes = [8, 8], strides = [1, 1]} : vector<8x32xf32> to vector<8x8xf32>
    %148 = arith.truncf %147 : vector<8x8xf32> to vector<8x8xbf16>
    %149 = vector.extract_strided_slice %74 {offsets = [0, 24], sizes = [8, 8], strides = [1, 1]} : vector<8x32xf32> to vector<8x8xf32>
    %150 = arith.truncf %149 : vector<8x8xf32> to vector<8x8xbf16>
    %151 = vector.extract_strided_slice %80 {offsets = [0, 24], sizes = [8, 8], strides = [1, 1]} : vector<8x32xf32> to vector<8x8xf32>
    %152 = arith.truncf %151 : vector<8x8xf32> to vector<8x8xbf16>
    %cst_61 = arith.constant dense<0.000000e+00> : vector<8x8xf32>
    %153 = tpu.matmul %148, %150, %cst_61 {dimension_numbers = #tpu.dot_dimension_numbers<[1], [1], [0], [0], [0, 0, 1, 0], [], []>} : vector<8x8xbf16>, vector<8x8xbf16>, vector<8x8xf32> -> vector<8x8xf32>
    %cst_62 = arith.constant 0.353553385 : f32
    %154 = vector.broadcast %cst_62 : f32 to vector<8x8xf32>
    %155 = arith.mulf %153, %154 : vector<8x8xf32>
    %156 = arith.addf %155, %34 : vector<8x8xf32>
    %cst_63 = arith.constant dense<0xFF800000> : vector<8xf32>
    %157 = vector.multi_reduction <maximumf>, %156, %cst_63 [1] : vector<8x8xf32> to vector<8xf32>
    %158 = vector.shape_cast %157 : vector<8xf32> to vector<8x1xf32>
    %159 = vector.broadcast %158 : vector<8x1xf32> to vector<8x8xf32>
    %160 = arith.subf %156, %159 : vector<8x8xf32>
    %161 = math.exp %160 : vector<8x8xf32>
    %cst_64 = arith.constant dense<0.000000e+00> : vector<8xf32>
    %162 = vector.multi_reduction <add>, %161, %cst_64 [1] : vector<8x8xf32> to vector<8xf32>
    %163 = vector.shape_cast %162 : vector<8xf32> to vector<8x1xf32>
    %164 = tpu.reciprocal %163 {approx = true} : vector<8x1xf32> -> vector<8x1xf32>
    %165 = vector.broadcast %164 : vector<8x1xf32> to vector<8x8xf32>
    %166 = arith.mulf %161, %165 : vector<8x8xf32>
    %167 = arith.truncf %166 : vector<8x8xf32> to vector<8x8xbf16>
    %cst_65 = arith.constant dense<0.000000e+00> : vector<8x8xf32>
    %168 = tpu.matmul %167, %152, %cst_65 {dimension_numbers = #tpu.dot_dimension_numbers<[1], [0], [0], [1], [0, 0, 1, 1], [], []>} : vector<8x8xbf16>, vector<8x8xbf16>, vector<8x8xf32> -> vector<8x8xf32>
    %169 = tpu.concatenate %102, %124, %146, %168 in 1 : vector<8x8xf32>, vector<8x8xf32>, vector<8x8xf32>, vector<8x8xf32> -> vector<8x32xf32>
    %170 = arith.truncf %169 : vector<8x32xf32> to vector<8x32xbf16>
    %c3_66 = arith.constant 3 : index
    %c0_67 = arith.constant 0 : index
    %c0_68 = arith.constant 0 : index
    %171 = vector.load %arg8[%c3_66, %c0_67, %c0_68] : memref<16x32x32xbf16, #tpu.memory_space<vmem>>, vector<1x32x32xbf16>
    %172 = vector.shape_cast %171 : vector<1x32x32xbf16> to vector<32x32xbf16>
    %cst_69 = arith.constant dense<0.000000e+00> : vector<8x32xf32>
    %173 = tpu.matmul %170, %172, %cst_69 {dimension_numbers = #tpu.dot_dimension_numbers<[1], [0], [0], [1], [0, 0, 1, 1], [], []>} : vector<8x32xbf16>, vector<32x32xbf16>, vector<8x32xf32> -> vector<8x32xf32>
    %174 = arith.addf %24, %173 : vector<8x32xf32>
    %c5 = arith.constant 5 : index
    %c0_70 = arith.constant 0 : index
    %175 = vector.load %arg9[%c5, %c0_70] : memref<30x32xf32, #tpu.memory_space<vmem>>, vector<1x32xf32>
    %176 = vector.broadcast %175 : vector<1x32xf32> to vector<8x32xf32>
    %177 = arith.addf %174, %176 : vector<8x32xf32>
    %c6 = arith.constant 6 : index
    %c0_71 = arith.constant 0 : index
    %178 = vector.load %arg9[%c6, %c0_71] : memref<30x32xf32, #tpu.memory_space<vmem>>, vector<1x32xf32>
    %c7 = arith.constant 7 : index
    %c0_72 = arith.constant 0 : index
    %179 = vector.load %arg9[%c7, %c0_72] : memref<30x32xf32, #tpu.memory_space<vmem>>, vector<1x32xf32>
    %cst_73 = arith.constant dense<0.000000e+00> : vector<8xf32>
    %180 = vector.multi_reduction <add>, %177, %cst_73 [1] : vector<8x32xf32> to vector<8xf32>
    %181 = vector.shape_cast %180 : vector<8xf32> to vector<8x1xf32>
    %cst_74 = arith.constant 3.200000e+01 : f32
    %182 = vector.broadcast %cst_74 : f32 to vector<8x1xf32>
    %183 = arith.divf %181, %182 : vector<8x1xf32>
    %184 = vector.broadcast %183 : vector<8x1xf32> to vector<8x32xf32>
    %185 = arith.subf %177, %184 : vector<8x32xf32>
    %186 = arith.mulf %185, %185 : vector<8x32xf32>
    %cst_75 = arith.constant dense<0.000000e+00> : vector<8xf32>
    %187 = vector.multi_reduction <add>, %186, %cst_75 [1] : vector<8x32xf32> to vector<8xf32>
    %188 = vector.shape_cast %187 : vector<8xf32> to vector<8x1xf32>
    %cst_76 = arith.constant 3.200000e+01 : f32
    %189 = vector.broadcast %cst_76 : f32 to vector<8x1xf32>
    %190 = arith.divf %188, %189 : vector<8x1xf32>
    %cst_77 = arith.constant 9.99999974E-6 : f32
    %191 = vector.broadcast %cst_77 : f32 to vector<8x1xf32>
    %192 = arith.addf %190, %191 : vector<8x1xf32>
    %193 = math.rsqrt %192 : vector<8x1xf32>
    %194 = vector.broadcast %193 : vector<8x1xf32> to vector<8x32xf32>
    %195 = arith.mulf %185, %194 : vector<8x32xf32>
    %196 = vector.broadcast %178 : vector<1x32xf32> to vector<8x32xf32>
    %197 = arith.mulf %195, %196 : vector<8x32xf32>
    %198 = vector.broadcast %179 : vector<1x32xf32> to vector<8x32xf32>
    %199 = arith.addf %197, %198 : vector<8x32xf32>
    %200 = arith.truncf %199 : vector<8x32xf32> to vector<8x32xbf16>
    %c4_78 = arith.constant 4 : index
    %c0_79 = arith.constant 0 : index
    %c0_80 = arith.constant 0 : index
    %201 = vector.load %arg8[%c4_78, %c0_79, %c0_80] : memref<16x32x32xbf16, #tpu.memory_space<vmem>>, vector<1x32x32xbf16>
    %202 = vector.shape_cast %201 : vector<1x32x32xbf16> to vector<32x32xbf16>
    %cst_81 = arith.constant dense<0.000000e+00> : vector<8x32xf32>
    %203 = tpu.matmul %200, %202, %cst_81 {dimension_numbers = #tpu.dot_dimension_numbers<[1], [0], [0], [1], [0, 0, 1, 1], [], []>} : vector<8x32xbf16>, vector<32x32xbf16>, vector<8x32xf32> -> vector<8x32xf32>
    %c8 = arith.constant 8 : index
    %c0_82 = arith.constant 0 : index
    %204 = vector.load %arg9[%c8, %c0_82] : memref<30x32xf32, #tpu.memory_space<vmem>>, vector<1x32xf32>
    %205 = vector.broadcast %204 : vector<1x32xf32> to vector<8x32xf32>
    %206 = arith.addf %203, %205 : vector<8x32xf32>
    %c5_83 = arith.constant 5 : index
    %c0_84 = arith.constant 0 : index
    %c0_85 = arith.constant 0 : index
    %207 = vector.load %arg8[%c5_83, %c0_84, %c0_85] : memref<16x32x32xbf16, #tpu.memory_space<vmem>>, vector<1x32x32xbf16>
    %208 = vector.shape_cast %207 : vector<1x32x32xbf16> to vector<32x32xbf16>
    %cst_86 = arith.constant dense<0.000000e+00> : vector<8x32xf32>
    %209 = tpu.matmul %9, %208, %cst_86 {dimension_numbers = #tpu.dot_dimension_numbers<[1], [0], [0], [1], [0, 0, 1, 1], [], []>} : vector<8x32xbf16>, vector<32x32xbf16>, vector<8x32xf32> -> vector<8x32xf32>
    %c9 = arith.constant 9 : index
    %c0_87 = arith.constant 0 : index
    %210 = vector.load %arg9[%c9, %c0_87] : memref<30x32xf32, #tpu.memory_space<vmem>>, vector<1x32xf32>
    %211 = vector.broadcast %210 : vector<1x32xf32> to vector<8x32xf32>
    %212 = arith.addf %209, %211 : vector<8x32xf32>
    %c6_88 = arith.constant 6 : index
    %c0_89 = arith.constant 0 : index
    %c0_90 = arith.constant 0 : index
    %213 = vector.load %arg8[%c6_88, %c0_89, %c0_90] : memref<16x32x32xbf16, #tpu.memory_space<vmem>>, vector<1x32x32xbf16>
    %214 = vector.shape_cast %213 : vector<1x32x32xbf16> to vector<32x32xbf16>
    %cst_91 = arith.constant dense<0.000000e+00> : vector<8x32xf32>
    %215 = tpu.matmul %9, %214, %cst_91 {dimension_numbers = #tpu.dot_dimension_numbers<[1], [0], [0], [1], [0, 0, 1, 1], [], []>} : vector<8x32xbf16>, vector<32x32xbf16>, vector<8x32xf32> -> vector<8x32xf32>
    %c10 = arith.constant 10 : index
    %c0_92 = arith.constant 0 : index
    %216 = vector.load %arg9[%c10, %c0_92] : memref<30x32xf32, #tpu.memory_space<vmem>>, vector<1x32xf32>
    %217 = vector.broadcast %216 : vector<1x32xf32> to vector<8x32xf32>
    %218 = arith.addf %215, %217 : vector<8x32xf32>
    %219 = vector.extract_strided_slice %206 {offsets = [0, 0], sizes = [8, 8], strides = [1, 1]} : vector<8x32xf32> to vector<8x8xf32>
    %220 = arith.truncf %219 : vector<8x8xf32> to vector<8x8xbf16>
    %221 = vector.extract_strided_slice %212 {offsets = [0, 0], sizes = [8, 8], strides = [1, 1]} : vector<8x32xf32> to vector<8x8xf32>
    %222 = arith.truncf %221 : vector<8x8xf32> to vector<8x8xbf16>
    %223 = vector.extract_strided_slice %218 {offsets = [0, 0], sizes = [8, 8], strides = [1, 1]} : vector<8x32xf32> to vector<8x8xf32>
    %224 = arith.truncf %223 : vector<8x8xf32> to vector<8x8xbf16>
    %cst_93 = arith.constant dense<0.000000e+00> : vector<8x8xf32>
    %225 = tpu.matmul %220, %222, %cst_93 {dimension_numbers = #tpu.dot_dimension_numbers<[1], [1], [0], [0], [0, 0, 1, 0], [], []>} : vector<8x8xbf16>, vector<8x8xbf16>, vector<8x8xf32> -> vector<8x8xf32>
    %cst_94 = arith.constant 0.353553385 : f32
    %226 = vector.broadcast %cst_94 : f32 to vector<8x8xf32>
    %227 = arith.mulf %225, %226 : vector<8x8xf32>
    %228 = vector.broadcast %39 : vector<1x8xf32> to vector<8x8xf32>
    %229 = arith.addf %227, %228 : vector<8x8xf32>
    %cst_95 = arith.constant dense<0xFF800000> : vector<8xf32>
    %230 = vector.multi_reduction <maximumf>, %229, %cst_95 [1] : vector<8x8xf32> to vector<8xf32>
    %231 = vector.shape_cast %230 : vector<8xf32> to vector<8x1xf32>
    %232 = vector.broadcast %231 : vector<8x1xf32> to vector<8x8xf32>
    %233 = arith.subf %229, %232 : vector<8x8xf32>
    %234 = math.exp %233 : vector<8x8xf32>
    %cst_96 = arith.constant dense<0.000000e+00> : vector<8xf32>
    %235 = vector.multi_reduction <add>, %234, %cst_96 [1] : vector<8x8xf32> to vector<8xf32>
    %236 = vector.shape_cast %235 : vector<8xf32> to vector<8x1xf32>
    %237 = tpu.reciprocal %236 {approx = true} : vector<8x1xf32> -> vector<8x1xf32>
    %238 = vector.broadcast %237 : vector<8x1xf32> to vector<8x8xf32>
    %239 = arith.mulf %234, %238 : vector<8x8xf32>
    %240 = arith.truncf %239 : vector<8x8xf32> to vector<8x8xbf16>
    %cst_97 = arith.constant dense<0.000000e+00> : vector<8x8xf32>
    %241 = tpu.matmul %240, %224, %cst_97 {dimension_numbers = #tpu.dot_dimension_numbers<[1], [0], [0], [1], [0, 0, 1, 1], [], []>} : vector<8x8xbf16>, vector<8x8xbf16>, vector<8x8xf32> -> vector<8x8xf32>
    %242 = vector.extract_strided_slice %206 {offsets = [0, 8], sizes = [8, 8], strides = [1, 1]} : vector<8x32xf32> to vector<8x8xf32>
    %243 = arith.truncf %242 : vector<8x8xf32> to vector<8x8xbf16>
    %244 = vector.extract_strided_slice %212 {offsets = [0, 8], sizes = [8, 8], strides = [1, 1]} : vector<8x32xf32> to vector<8x8xf32>
    %245 = arith.truncf %244 : vector<8x8xf32> to vector<8x8xbf16>
    %246 = vector.extract_strided_slice %218 {offsets = [0, 8], sizes = [8, 8], strides = [1, 1]} : vector<8x32xf32> to vector<8x8xf32>
    %247 = arith.truncf %246 : vector<8x8xf32> to vector<8x8xbf16>
    %cst_98 = arith.constant dense<0.000000e+00> : vector<8x8xf32>
    %248 = tpu.matmul %243, %245, %cst_98 {dimension_numbers = #tpu.dot_dimension_numbers<[1], [1], [0], [0], [0, 0, 1, 0], [], []>} : vector<8x8xbf16>, vector<8x8xbf16>, vector<8x8xf32> -> vector<8x8xf32>
    %cst_99 = arith.constant 0.353553385 : f32
    %249 = vector.broadcast %cst_99 : f32 to vector<8x8xf32>
    %250 = arith.mulf %248, %249 : vector<8x8xf32>
    %251 = vector.broadcast %39 : vector<1x8xf32> to vector<8x8xf32>
    %252 = arith.addf %250, %251 : vector<8x8xf32>
    %cst_100 = arith.constant dense<0xFF800000> : vector<8xf32>
    %253 = vector.multi_reduction <maximumf>, %252, %cst_100 [1] : vector<8x8xf32> to vector<8xf32>
    %254 = vector.shape_cast %253 : vector<8xf32> to vector<8x1xf32>
    %255 = vector.broadcast %254 : vector<8x1xf32> to vector<8x8xf32>
    %256 = arith.subf %252, %255 : vector<8x8xf32>
    %257 = math.exp %256 : vector<8x8xf32>
    %cst_101 = arith.constant dense<0.000000e+00> : vector<8xf32>
    %258 = vector.multi_reduction <add>, %257, %cst_101 [1] : vector<8x8xf32> to vector<8xf32>
    %259 = vector.shape_cast %258 : vector<8xf32> to vector<8x1xf32>
    %260 = tpu.reciprocal %259 {approx = true} : vector<8x1xf32> -> vector<8x1xf32>
    %261 = vector.broadcast %260 : vector<8x1xf32> to vector<8x8xf32>
    %262 = arith.mulf %257, %261 : vector<8x8xf32>
    %263 = arith.truncf %262 : vector<8x8xf32> to vector<8x8xbf16>
    %cst_102 = arith.constant dense<0.000000e+00> : vector<8x8xf32>
    %264 = tpu.matmul %263, %247, %cst_102 {dimension_numbers = #tpu.dot_dimension_numbers<[1], [0], [0], [1], [0, 0, 1, 1], [], []>} : vector<8x8xbf16>, vector<8x8xbf16>, vector<8x8xf32> -> vector<8x8xf32>
    %265 = vector.extract_strided_slice %206 {offsets = [0, 16], sizes = [8, 8], strides = [1, 1]} : vector<8x32xf32> to vector<8x8xf32>
    %266 = arith.truncf %265 : vector<8x8xf32> to vector<8x8xbf16>
    %267 = vector.extract_strided_slice %212 {offsets = [0, 16], sizes = [8, 8], strides = [1, 1]} : vector<8x32xf32> to vector<8x8xf32>
    %268 = arith.truncf %267 : vector<8x8xf32> to vector<8x8xbf16>
    %269 = vector.extract_strided_slice %218 {offsets = [0, 16], sizes = [8, 8], strides = [1, 1]} : vector<8x32xf32> to vector<8x8xf32>
    %270 = arith.truncf %269 : vector<8x8xf32> to vector<8x8xbf16>
    %cst_103 = arith.constant dense<0.000000e+00> : vector<8x8xf32>
    %271 = tpu.matmul %266, %268, %cst_103 {dimension_numbers = #tpu.dot_dimension_numbers<[1], [1], [0], [0], [0, 0, 1, 0], [], []>} : vector<8x8xbf16>, vector<8x8xbf16>, vector<8x8xf32> -> vector<8x8xf32>
    %cst_104 = arith.constant 0.353553385 : f32
    %272 = vector.broadcast %cst_104 : f32 to vector<8x8xf32>
    %273 = arith.mulf %271, %272 : vector<8x8xf32>
    %274 = vector.broadcast %39 : vector<1x8xf32> to vector<8x8xf32>
    %275 = arith.addf %273, %274 : vector<8x8xf32>
    %cst_105 = arith.constant dense<0xFF800000> : vector<8xf32>
    %276 = vector.multi_reduction <maximumf>, %275, %cst_105 [1] : vector<8x8xf32> to vector<8xf32>
    %277 = vector.shape_cast %276 : vector<8xf32> to vector<8x1xf32>
    %278 = vector.broadcast %277 : vector<8x1xf32> to vector<8x8xf32>
    %279 = arith.subf %275, %278 : vector<8x8xf32>
    %280 = math.exp %279 : vector<8x8xf32>
    %cst_106 = arith.constant dense<0.000000e+00> : vector<8xf32>
    %281 = vector.multi_reduction <add>, %280, %cst_106 [1] : vector<8x8xf32> to vector<8xf32>
    %282 = vector.shape_cast %281 : vector<8xf32> to vector<8x1xf32>
    %283 = tpu.reciprocal %282 {approx = true} : vector<8x1xf32> -> vector<8x1xf32>
    %284 = vector.broadcast %283 : vector<8x1xf32> to vector<8x8xf32>
    %285 = arith.mulf %280, %284 : vector<8x8xf32>
    %286 = arith.truncf %285 : vector<8x8xf32> to vector<8x8xbf16>
    %cst_107 = arith.constant dense<0.000000e+00> : vector<8x8xf32>
    %287 = tpu.matmul %286, %270, %cst_107 {dimension_numbers = #tpu.dot_dimension_numbers<[1], [0], [0], [1], [0, 0, 1, 1], [], []>} : vector<8x8xbf16>, vector<8x8xbf16>, vector<8x8xf32> -> vector<8x8xf32>
    %288 = vector.extract_strided_slice %206 {offsets = [0, 24], sizes = [8, 8], strides = [1, 1]} : vector<8x32xf32> to vector<8x8xf32>
    %289 = arith.truncf %288 : vector<8x8xf32> to vector<8x8xbf16>
    %290 = vector.extract_strided_slice %212 {offsets = [0, 24], sizes = [8, 8], strides = [1, 1]} : vector<8x32xf32> to vector<8x8xf32>
    %291 = arith.truncf %290 : vector<8x8xf32> to vector<8x8xbf16>
    %292 = vector.extract_strided_slice %218 {offsets = [0, 24], sizes = [8, 8], strides = [1, 1]} : vector<8x32xf32> to vector<8x8xf32>
    %293 = arith.truncf %292 : vector<8x8xf32> to vector<8x8xbf16>
    %cst_108 = arith.constant dense<0.000000e+00> : vector<8x8xf32>
    %294 = tpu.matmul %289, %291, %cst_108 {dimension_numbers = #tpu.dot_dimension_numbers<[1], [1], [0], [0], [0, 0, 1, 0], [], []>} : vector<8x8xbf16>, vector<8x8xbf16>, vector<8x8xf32> -> vector<8x8xf32>
    %cst_109 = arith.constant 0.353553385 : f32
    %295 = vector.broadcast %cst_109 : f32 to vector<8x8xf32>
    %296 = arith.mulf %294, %295 : vector<8x8xf32>
    %297 = vector.broadcast %39 : vector<1x8xf32> to vector<8x8xf32>
    %298 = arith.addf %296, %297 : vector<8x8xf32>
    %cst_110 = arith.constant dense<0xFF800000> : vector<8xf32>
    %299 = vector.multi_reduction <maximumf>, %298, %cst_110 [1] : vector<8x8xf32> to vector<8xf32>
    %300 = vector.shape_cast %299 : vector<8xf32> to vector<8x1xf32>
    %301 = vector.broadcast %300 : vector<8x1xf32> to vector<8x8xf32>
    %302 = arith.subf %298, %301 : vector<8x8xf32>
    %303 = math.exp %302 : vector<8x8xf32>
    %cst_111 = arith.constant dense<0.000000e+00> : vector<8xf32>
    %304 = vector.multi_reduction <add>, %303, %cst_111 [1] : vector<8x8xf32> to vector<8xf32>
    %305 = vector.shape_cast %304 : vector<8xf32> to vector<8x1xf32>
    %306 = tpu.reciprocal %305 {approx = true} : vector<8x1xf32> -> vector<8x1xf32>
    %307 = vector.broadcast %306 : vector<8x1xf32> to vector<8x8xf32>
    %308 = arith.mulf %303, %307 : vector<8x8xf32>
    %309 = arith.truncf %308 : vector<8x8xf32> to vector<8x8xbf16>
    %cst_112 = arith.constant dense<0.000000e+00> : vector<8x8xf32>
    %310 = tpu.matmul %309, %293, %cst_112 {dimension_numbers = #tpu.dot_dimension_numbers<[1], [0], [0], [1], [0, 0, 1, 1], [], []>} : vector<8x8xbf16>, vector<8x8xbf16>, vector<8x8xf32> -> vector<8x8xf32>
    %311 = tpu.concatenate %241, %264, %287, %310 in 1 : vector<8x8xf32>, vector<8x8xf32>, vector<8x8xf32>, vector<8x8xf32> -> vector<8x32xf32>
    %312 = arith.truncf %311 : vector<8x32xf32> to vector<8x32xbf16>
    %c7_113 = arith.constant 7 : index
    %c0_114 = arith.constant 0 : index
    %c0_115 = arith.constant 0 : index
    %313 = vector.load %arg8[%c7_113, %c0_114, %c0_115] : memref<16x32x32xbf16, #tpu.memory_space<vmem>>, vector<1x32x32xbf16>
    %314 = vector.shape_cast %313 : vector<1x32x32xbf16> to vector<32x32xbf16>
    %cst_116 = arith.constant dense<0.000000e+00> : vector<8x32xf32>
    %315 = tpu.matmul %312, %314, %cst_116 {dimension_numbers = #tpu.dot_dimension_numbers<[1], [0], [0], [1], [0, 0, 1, 1], [], []>} : vector<8x32xbf16>, vector<32x32xbf16>, vector<8x32xf32> -> vector<8x32xf32>
    %316 = arith.addf %177, %315 : vector<8x32xf32>
    %c11 = arith.constant 11 : index
    %c0_117 = arith.constant 0 : index
    %317 = vector.load %arg9[%c11, %c0_117] : memref<30x32xf32, #tpu.memory_space<vmem>>, vector<1x32xf32>
    %318 = vector.broadcast %317 : vector<1x32xf32> to vector<8x32xf32>
    %319 = arith.addf %316, %318 : vector<8x32xf32>
    %c12 = arith.constant 12 : index
    %c0_118 = arith.constant 0 : index
    %320 = vector.load %arg9[%c12, %c0_118] : memref<30x32xf32, #tpu.memory_space<vmem>>, vector<1x32xf32>
    %c13 = arith.constant 13 : index
    %c0_119 = arith.constant 0 : index
    %321 = vector.load %arg9[%c13, %c0_119] : memref<30x32xf32, #tpu.memory_space<vmem>>, vector<1x32xf32>
    %cst_120 = arith.constant dense<0.000000e+00> : vector<8xf32>
    %322 = vector.multi_reduction <add>, %319, %cst_120 [1] : vector<8x32xf32> to vector<8xf32>
    %323 = vector.shape_cast %322 : vector<8xf32> to vector<8x1xf32>
    %cst_121 = arith.constant 3.200000e+01 : f32
    %324 = vector.broadcast %cst_121 : f32 to vector<8x1xf32>
    %325 = arith.divf %323, %324 : vector<8x1xf32>
    %326 = vector.broadcast %325 : vector<8x1xf32> to vector<8x32xf32>
    %327 = arith.subf %319, %326 : vector<8x32xf32>
    %328 = arith.mulf %327, %327 : vector<8x32xf32>
    %cst_122 = arith.constant dense<0.000000e+00> : vector<8xf32>
    %329 = vector.multi_reduction <add>, %328, %cst_122 [1] : vector<8x32xf32> to vector<8xf32>
    %330 = vector.shape_cast %329 : vector<8xf32> to vector<8x1xf32>
    %cst_123 = arith.constant 3.200000e+01 : f32
    %331 = vector.broadcast %cst_123 : f32 to vector<8x1xf32>
    %332 = arith.divf %330, %331 : vector<8x1xf32>
    %cst_124 = arith.constant 9.99999974E-6 : f32
    %333 = vector.broadcast %cst_124 : f32 to vector<8x1xf32>
    %334 = arith.addf %332, %333 : vector<8x1xf32>
    %335 = math.rsqrt %334 : vector<8x1xf32>
    %336 = vector.broadcast %335 : vector<8x1xf32> to vector<8x32xf32>
    %337 = arith.mulf %327, %336 : vector<8x32xf32>
    %338 = vector.broadcast %320 : vector<1x32xf32> to vector<8x32xf32>
    %339 = arith.mulf %337, %338 : vector<8x32xf32>
    %340 = vector.broadcast %321 : vector<1x32xf32> to vector<8x32xf32>
    %341 = arith.addf %339, %340 : vector<8x32xf32>
    %342 = arith.truncf %341 : vector<8x32xf32> to vector<8x32xbf16>
    %c0_125 = arith.constant 0 : index
    %c0_126 = arith.constant 0 : index
    %c0_127 = arith.constant 0 : index
    %343 = vector.load %arg10[%c0_125, %c0_126, %c0_127] : memref<2x32x128xbf16, #tpu.memory_space<vmem>>, vector<1x32x128xbf16>
    %344 = vector.shape_cast %343 : vector<1x32x128xbf16> to vector<32x128xbf16>
    %cst_128 = arith.constant dense<0.000000e+00> : vector<8x128xf32>
    %345 = tpu.matmul %342, %344, %cst_128 {dimension_numbers = #tpu.dot_dimension_numbers<[1], [0], [0], [1], [0, 0, 1, 1], [], []>} : vector<8x32xbf16>, vector<32x128xbf16>, vector<8x128xf32> -> vector<8x128xf32>
    %c0_129 = arith.constant 0 : index
    %c0_130 = arith.constant 0 : index
    %346 = vector.load %arg11[%c0_129, %c0_130] : memref<2x128xf32, #tpu.memory_space<vmem>>, vector<1x128xf32>
    %347 = vector.broadcast %346 : vector<1x128xf32> to vector<8x128xf32>
    %348 = arith.addf %345, %347 : vector<8x128xf32>
    %cst_131 = arith.constant 5.000000e-01 : f32
    %349 = vector.broadcast %cst_131 : f32 to vector<8x128xf32>
    %350 = arith.mulf %349, %348 : vector<8x128xf32>
    %cst_132 = arith.constant 4.471500e-02 : f32
    %351 = vector.broadcast %cst_132 : f32 to vector<8x128xf32>
    %352 = arith.mulf %351, %348 : vector<8x128xf32>
    %353 = arith.mulf %352, %348 : vector<8x128xf32>
    %354 = arith.mulf %353, %348 : vector<8x128xf32>
    %355 = arith.addf %348, %354 : vector<8x128xf32>
    %cst_133 = arith.constant 0.797884583 : f32
    %356 = vector.broadcast %cst_133 : f32 to vector<8x128xf32>
    %357 = arith.mulf %356, %355 : vector<8x128xf32>
    %358 = math.tanh %357 : vector<8x128xf32>
    %cst_134 = arith.constant 1.000000e+00 : f32
    %359 = vector.broadcast %cst_134 : f32 to vector<8x128xf32>
    %360 = arith.addf %359, %358 : vector<8x128xf32>
    %361 = arith.mulf %350, %360 : vector<8x128xf32>
    %362 = arith.truncf %361 : vector<8x128xf32> to vector<8x128xbf16>
    %c0_135 = arith.constant 0 : index
    %c0_136 = arith.constant 0 : index
    %c0_137 = arith.constant 0 : index
    %363 = vector.load %arg12[%c0_135, %c0_136, %c0_137] : memref<2x128x32xbf16, #tpu.memory_space<vmem>>, vector<1x128x32xbf16>
    %364 = vector.shape_cast %363 : vector<1x128x32xbf16> to vector<128x32xbf16>
    %cst_138 = arith.constant dense<0.000000e+00> : vector<8x32xf32>
    %365 = tpu.matmul %362, %364, %cst_138 {dimension_numbers = #tpu.dot_dimension_numbers<[1], [0], [0], [1], [0, 0, 1, 1], [], []>} : vector<8x128xbf16>, vector<128x32xbf16>, vector<8x32xf32> -> vector<8x32xf32>
    %366 = arith.addf %319, %365 : vector<8x32xf32>
    %c14 = arith.constant 14 : index
    %c0_139 = arith.constant 0 : index
    %367 = vector.load %arg9[%c14, %c0_139] : memref<30x32xf32, #tpu.memory_space<vmem>>, vector<1x32xf32>
    %368 = vector.broadcast %367 : vector<1x32xf32> to vector<8x32xf32>
    %369 = arith.addf %366, %368 : vector<8x32xf32>
    %c15 = arith.constant 15 : index
    %c0_140 = arith.constant 0 : index
    %370 = vector.load %arg9[%c15, %c0_140] : memref<30x32xf32, #tpu.memory_space<vmem>>, vector<1x32xf32>
    %c16 = arith.constant 16 : index
    %c0_141 = arith.constant 0 : index
    %371 = vector.load %arg9[%c16, %c0_141] : memref<30x32xf32, #tpu.memory_space<vmem>>, vector<1x32xf32>
    %cst_142 = arith.constant dense<0.000000e+00> : vector<8xf32>
    %372 = vector.multi_reduction <add>, %369, %cst_142 [1] : vector<8x32xf32> to vector<8xf32>
    %373 = vector.shape_cast %372 : vector<8xf32> to vector<8x1xf32>
    %cst_143 = arith.constant 3.200000e+01 : f32
    %374 = vector.broadcast %cst_143 : f32 to vector<8x1xf32>
    %375 = arith.divf %373, %374 : vector<8x1xf32>
    %376 = vector.broadcast %375 : vector<8x1xf32> to vector<8x32xf32>
    %377 = arith.subf %369, %376 : vector<8x32xf32>
    %378 = arith.mulf %377, %377 : vector<8x32xf32>
    %cst_144 = arith.constant dense<0.000000e+00> : vector<8xf32>
    %379 = vector.multi_reduction <add>, %378, %cst_144 [1] : vector<8x32xf32> to vector<8xf32>
    %380 = vector.shape_cast %379 : vector<8xf32> to vector<8x1xf32>
    %cst_145 = arith.constant 3.200000e+01 : f32
    %381 = vector.broadcast %cst_145 : f32 to vector<8x1xf32>
    %382 = arith.divf %380, %381 : vector<8x1xf32>
    %cst_146 = arith.constant 9.99999974E-6 : f32
    %383 = vector.broadcast %cst_146 : f32 to vector<8x1xf32>
    %384 = arith.addf %382, %383 : vector<8x1xf32>
    %385 = math.rsqrt %384 : vector<8x1xf32>
    %386 = vector.broadcast %385 : vector<8x1xf32> to vector<8x32xf32>
    %387 = arith.mulf %377, %386 : vector<8x32xf32>
    %388 = vector.broadcast %370 : vector<1x32xf32> to vector<8x32xf32>
    %389 = arith.mulf %387, %388 : vector<8x32xf32>
    %390 = vector.broadcast %371 : vector<1x32xf32> to vector<8x32xf32>
    %391 = arith.addf %389, %390 : vector<8x32xf32>
    %392 = arith.truncf %391 : vector<8x32xf32> to vector<8x32xbf16>
    %c8_147 = arith.constant 8 : index
    %c0_148 = arith.constant 0 : index
    %c0_149 = arith.constant 0 : index
    %393 = vector.load %arg8[%c8_147, %c0_148, %c0_149] : memref<16x32x32xbf16, #tpu.memory_space<vmem>>, vector<1x32x32xbf16>
    %394 = vector.shape_cast %393 : vector<1x32x32xbf16> to vector<32x32xbf16>
    %cst_150 = arith.constant dense<0.000000e+00> : vector<8x32xf32>
    %395 = tpu.matmul %392, %394, %cst_150 {dimension_numbers = #tpu.dot_dimension_numbers<[1], [0], [0], [1], [0, 0, 1, 1], [], []>} : vector<8x32xbf16>, vector<32x32xbf16>, vector<8x32xf32> -> vector<8x32xf32>
    %c17 = arith.constant 17 : index
    %c0_151 = arith.constant 0 : index
    %396 = vector.load %arg9[%c17, %c0_151] : memref<30x32xf32, #tpu.memory_space<vmem>>, vector<1x32xf32>
    %397 = vector.broadcast %396 : vector<1x32xf32> to vector<8x32xf32>
    %398 = arith.addf %395, %397 : vector<8x32xf32>
    %c9_152 = arith.constant 9 : index
    %c0_153 = arith.constant 0 : index
    %c0_154 = arith.constant 0 : index
    %399 = vector.load %arg8[%c9_152, %c0_153, %c0_154] : memref<16x32x32xbf16, #tpu.memory_space<vmem>>, vector<1x32x32xbf16>
    %400 = vector.shape_cast %399 : vector<1x32x32xbf16> to vector<32x32xbf16>
    %cst_155 = arith.constant dense<0.000000e+00> : vector<8x32xf32>
    %401 = tpu.matmul %392, %400, %cst_155 {dimension_numbers = #tpu.dot_dimension_numbers<[1], [0], [0], [1], [0, 0, 1, 1], [], []>} : vector<8x32xbf16>, vector<32x32xbf16>, vector<8x32xf32> -> vector<8x32xf32>
    %c18 = arith.constant 18 : index
    %c0_156 = arith.constant 0 : index
    %402 = vector.load %arg9[%c18, %c0_156] : memref<30x32xf32, #tpu.memory_space<vmem>>, vector<1x32xf32>
    %403 = vector.broadcast %402 : vector<1x32xf32> to vector<8x32xf32>
    %404 = arith.addf %401, %403 : vector<8x32xf32>
    %c10_157 = arith.constant 10 : index
    %c0_158 = arith.constant 0 : index
    %c0_159 = arith.constant 0 : index
    %405 = vector.load %arg8[%c10_157, %c0_158, %c0_159] : memref<16x32x32xbf16, #tpu.memory_space<vmem>>, vector<1x32x32xbf16>
    %406 = vector.shape_cast %405 : vector<1x32x32xbf16> to vector<32x32xbf16>
    %cst_160 = arith.constant dense<0.000000e+00> : vector<8x32xf32>
    %407 = tpu.matmul %392, %406, %cst_160 {dimension_numbers = #tpu.dot_dimension_numbers<[1], [0], [0], [1], [0, 0, 1, 1], [], []>} : vector<8x32xbf16>, vector<32x32xbf16>, vector<8x32xf32> -> vector<8x32xf32>
    %c19 = arith.constant 19 : index
    %c0_161 = arith.constant 0 : index
    %408 = vector.load %arg9[%c19, %c0_161] : memref<30x32xf32, #tpu.memory_space<vmem>>, vector<1x32xf32>
    %409 = vector.broadcast %408 : vector<1x32xf32> to vector<8x32xf32>
    %410 = arith.addf %407, %409 : vector<8x32xf32>
    %411 = vector.extract_strided_slice %398 {offsets = [0, 0], sizes = [8, 8], strides = [1, 1]} : vector<8x32xf32> to vector<8x8xf32>
    %412 = arith.truncf %411 : vector<8x8xf32> to vector<8x8xbf16>
    %413 = vector.extract_strided_slice %404 {offsets = [0, 0], sizes = [8, 8], strides = [1, 1]} : vector<8x32xf32> to vector<8x8xf32>
    %414 = arith.truncf %413 : vector<8x8xf32> to vector<8x8xbf16>
    %415 = vector.extract_strided_slice %410 {offsets = [0, 0], sizes = [8, 8], strides = [1, 1]} : vector<8x32xf32> to vector<8x8xf32>
    %416 = arith.truncf %415 : vector<8x8xf32> to vector<8x8xbf16>
    %cst_162 = arith.constant dense<0.000000e+00> : vector<8x8xf32>
    %417 = tpu.matmul %412, %414, %cst_162 {dimension_numbers = #tpu.dot_dimension_numbers<[1], [1], [0], [0], [0, 0, 1, 0], [], []>} : vector<8x8xbf16>, vector<8x8xbf16>, vector<8x8xf32> -> vector<8x8xf32>
    %cst_163 = arith.constant 0.353553385 : f32
    %418 = vector.broadcast %cst_163 : f32 to vector<8x8xf32>
    %419 = arith.mulf %417, %418 : vector<8x8xf32>
    %420 = arith.addf %419, %34 : vector<8x8xf32>
    %cst_164 = arith.constant dense<0xFF800000> : vector<8xf32>
    %421 = vector.multi_reduction <maximumf>, %420, %cst_164 [1] : vector<8x8xf32> to vector<8xf32>
    %422 = vector.shape_cast %421 : vector<8xf32> to vector<8x1xf32>
    %423 = vector.broadcast %422 : vector<8x1xf32> to vector<8x8xf32>
    %424 = arith.subf %420, %423 : vector<8x8xf32>
    %425 = math.exp %424 : vector<8x8xf32>
    %cst_165 = arith.constant dense<0.000000e+00> : vector<8xf32>
    %426 = vector.multi_reduction <add>, %425, %cst_165 [1] : vector<8x8xf32> to vector<8xf32>
    %427 = vector.shape_cast %426 : vector<8xf32> to vector<8x1xf32>
    %428 = tpu.reciprocal %427 {approx = true} : vector<8x1xf32> -> vector<8x1xf32>
    %429 = vector.broadcast %428 : vector<8x1xf32> to vector<8x8xf32>
    %430 = arith.mulf %425, %429 : vector<8x8xf32>
    %431 = arith.truncf %430 : vector<8x8xf32> to vector<8x8xbf16>
    %cst_166 = arith.constant dense<0.000000e+00> : vector<8x8xf32>
    %432 = tpu.matmul %431, %416, %cst_166 {dimension_numbers = #tpu.dot_dimension_numbers<[1], [0], [0], [1], [0, 0, 1, 1], [], []>} : vector<8x8xbf16>, vector<8x8xbf16>, vector<8x8xf32> -> vector<8x8xf32>
    %433 = vector.extract_strided_slice %398 {offsets = [0, 8], sizes = [8, 8], strides = [1, 1]} : vector<8x32xf32> to vector<8x8xf32>
    %434 = arith.truncf %433 : vector<8x8xf32> to vector<8x8xbf16>
    %435 = vector.extract_strided_slice %404 {offsets = [0, 8], sizes = [8, 8], strides = [1, 1]} : vector<8x32xf32> to vector<8x8xf32>
    %436 = arith.truncf %435 : vector<8x8xf32> to vector<8x8xbf16>
    %437 = vector.extract_strided_slice %410 {offsets = [0, 8], sizes = [8, 8], strides = [1, 1]} : vector<8x32xf32> to vector<8x8xf32>
    %438 = arith.truncf %437 : vector<8x8xf32> to vector<8x8xbf16>
    %cst_167 = arith.constant dense<0.000000e+00> : vector<8x8xf32>
    %439 = tpu.matmul %434, %436, %cst_167 {dimension_numbers = #tpu.dot_dimension_numbers<[1], [1], [0], [0], [0, 0, 1, 0], [], []>} : vector<8x8xbf16>, vector<8x8xbf16>, vector<8x8xf32> -> vector<8x8xf32>
    %cst_168 = arith.constant 0.353553385 : f32
    %440 = vector.broadcast %cst_168 : f32 to vector<8x8xf32>
    %441 = arith.mulf %439, %440 : vector<8x8xf32>
    %442 = arith.addf %441, %34 : vector<8x8xf32>
    %cst_169 = arith.constant dense<0xFF800000> : vector<8xf32>
    %443 = vector.multi_reduction <maximumf>, %442, %cst_169 [1] : vector<8x8xf32> to vector<8xf32>
    %444 = vector.shape_cast %443 : vector<8xf32> to vector<8x1xf32>
    %445 = vector.broadcast %444 : vector<8x1xf32> to vector<8x8xf32>
    %446 = arith.subf %442, %445 : vector<8x8xf32>
    %447 = math.exp %446 : vector<8x8xf32>
    %cst_170 = arith.constant dense<0.000000e+00> : vector<8xf32>
    %448 = vector.multi_reduction <add>, %447, %cst_170 [1] : vector<8x8xf32> to vector<8xf32>
    %449 = vector.shape_cast %448 : vector<8xf32> to vector<8x1xf32>
    %450 = tpu.reciprocal %449 {approx = true} : vector<8x1xf32> -> vector<8x1xf32>
    %451 = vector.broadcast %450 : vector<8x1xf32> to vector<8x8xf32>
    %452 = arith.mulf %447, %451 : vector<8x8xf32>
    %453 = arith.truncf %452 : vector<8x8xf32> to vector<8x8xbf16>
    %cst_171 = arith.constant dense<0.000000e+00> : vector<8x8xf32>
    %454 = tpu.matmul %453, %438, %cst_171 {dimension_numbers = #tpu.dot_dimension_numbers<[1], [0], [0], [1], [0, 0, 1, 1], [], []>} : vector<8x8xbf16>, vector<8x8xbf16>, vector<8x8xf32> -> vector<8x8xf32>
    %455 = vector.extract_strided_slice %398 {offsets = [0, 16], sizes = [8, 8], strides = [1, 1]} : vector<8x32xf32> to vector<8x8xf32>
    %456 = arith.truncf %455 : vector<8x8xf32> to vector<8x8xbf16>
    %457 = vector.extract_strided_slice %404 {offsets = [0, 16], sizes = [8, 8], strides = [1, 1]} : vector<8x32xf32> to vector<8x8xf32>
    %458 = arith.truncf %457 : vector<8x8xf32> to vector<8x8xbf16>
    %459 = vector.extract_strided_slice %410 {offsets = [0, 16], sizes = [8, 8], strides = [1, 1]} : vector<8x32xf32> to vector<8x8xf32>
    %460 = arith.truncf %459 : vector<8x8xf32> to vector<8x8xbf16>
    %cst_172 = arith.constant dense<0.000000e+00> : vector<8x8xf32>
    %461 = tpu.matmul %456, %458, %cst_172 {dimension_numbers = #tpu.dot_dimension_numbers<[1], [1], [0], [0], [0, 0, 1, 0], [], []>} : vector<8x8xbf16>, vector<8x8xbf16>, vector<8x8xf32> -> vector<8x8xf32>
    %cst_173 = arith.constant 0.353553385 : f32
    %462 = vector.broadcast %cst_173 : f32 to vector<8x8xf32>
    %463 = arith.mulf %461, %462 : vector<8x8xf32>
    %464 = arith.addf %463, %34 : vector<8x8xf32>
    %cst_174 = arith.constant dense<0xFF800000> : vector<8xf32>
    %465 = vector.multi_reduction <maximumf>, %464, %cst_174 [1] : vector<8x8xf32> to vector<8xf32>
    %466 = vector.shape_cast %465 : vector<8xf32> to vector<8x1xf32>
    %467 = vector.broadcast %466 : vector<8x1xf32> to vector<8x8xf32>
    %468 = arith.subf %464, %467 : vector<8x8xf32>
    %469 = math.exp %468 : vector<8x8xf32>
    %cst_175 = arith.constant dense<0.000000e+00> : vector<8xf32>
    %470 = vector.multi_reduction <add>, %469, %cst_175 [1] : vector<8x8xf32> to vector<8xf32>
    %471 = vector.shape_cast %470 : vector<8xf32> to vector<8x1xf32>
    %472 = tpu.reciprocal %471 {approx = true} : vector<8x1xf32> -> vector<8x1xf32>
    %473 = vector.broadcast %472 : vector<8x1xf32> to vector<8x8xf32>
    %474 = arith.mulf %469, %473 : vector<8x8xf32>
    %475 = arith.truncf %474 : vector<8x8xf32> to vector<8x8xbf16>
    %cst_176 = arith.constant dense<0.000000e+00> : vector<8x8xf32>
    %476 = tpu.matmul %475, %460, %cst_176 {dimension_numbers = #tpu.dot_dimension_numbers<[1], [0], [0], [1], [0, 0, 1, 1], [], []>} : vector<8x8xbf16>, vector<8x8xbf16>, vector<8x8xf32> -> vector<8x8xf32>
    %477 = vector.extract_strided_slice %398 {offsets = [0, 24], sizes = [8, 8], strides = [1, 1]} : vector<8x32xf32> to vector<8x8xf32>
    %478 = arith.truncf %477 : vector<8x8xf32> to vector<8x8xbf16>
    %479 = vector.extract_strided_slice %404 {offsets = [0, 24], sizes = [8, 8], strides = [1, 1]} : vector<8x32xf32> to vector<8x8xf32>
    %480 = arith.truncf %479 : vector<8x8xf32> to vector<8x8xbf16>
    %481 = vector.extract_strided_slice %410 {offsets = [0, 24], sizes = [8, 8], strides = [1, 1]} : vector<8x32xf32> to vector<8x8xf32>
    %482 = arith.truncf %481 : vector<8x8xf32> to vector<8x8xbf16>
    %cst_177 = arith.constant dense<0.000000e+00> : vector<8x8xf32>
    %483 = tpu.matmul %478, %480, %cst_177 {dimension_numbers = #tpu.dot_dimension_numbers<[1], [1], [0], [0], [0, 0, 1, 0], [], []>} : vector<8x8xbf16>, vector<8x8xbf16>, vector<8x8xf32> -> vector<8x8xf32>
    %cst_178 = arith.constant 0.353553385 : f32
    %484 = vector.broadcast %cst_178 : f32 to vector<8x8xf32>
    %485 = arith.mulf %483, %484 : vector<8x8xf32>
    %486 = arith.addf %485, %34 : vector<8x8xf32>
    %cst_179 = arith.constant dense<0xFF800000> : vector<8xf32>
    %487 = vector.multi_reduction <maximumf>, %486, %cst_179 [1] : vector<8x8xf32> to vector<8xf32>
    %488 = vector.shape_cast %487 : vector<8xf32> to vector<8x1xf32>
    %489 = vector.broadcast %488 : vector<8x1xf32> to vector<8x8xf32>
    %490 = arith.subf %486, %489 : vector<8x8xf32>
    %491 = math.exp %490 : vector<8x8xf32>
    %cst_180 = arith.constant dense<0.000000e+00> : vector<8xf32>
    %492 = vector.multi_reduction <add>, %491, %cst_180 [1] : vector<8x8xf32> to vector<8xf32>
    %493 = vector.shape_cast %492 : vector<8xf32> to vector<8x1xf32>
    %494 = tpu.reciprocal %493 {approx = true} : vector<8x1xf32> -> vector<8x1xf32>
    %495 = vector.broadcast %494 : vector<8x1xf32> to vector<8x8xf32>
    %496 = arith.mulf %491, %495 : vector<8x8xf32>
    %497 = arith.truncf %496 : vector<8x8xf32> to vector<8x8xbf16>
    %cst_181 = arith.constant dense<0.000000e+00> : vector<8x8xf32>
    %498 = tpu.matmul %497, %482, %cst_181 {dimension_numbers = #tpu.dot_dimension_numbers<[1], [0], [0], [1], [0, 0, 1, 1], [], []>} : vector<8x8xbf16>, vector<8x8xbf16>, vector<8x8xf32> -> vector<8x8xf32>
    %499 = tpu.concatenate %432, %454, %476, %498 in 1 : vector<8x8xf32>, vector<8x8xf32>, vector<8x8xf32>, vector<8x8xf32> -> vector<8x32xf32>
    %500 = arith.truncf %499 : vector<8x32xf32> to vector<8x32xbf16>
    %c11_182 = arith.constant 11 : index
    %c0_183 = arith.constant 0 : index
    %c0_184 = arith.constant 0 : index
    %501 = vector.load %arg8[%c11_182, %c0_183, %c0_184] : memref<16x32x32xbf16, #tpu.memory_space<vmem>>, vector<1x32x32xbf16>
    %502 = vector.shape_cast %501 : vector<1x32x32xbf16> to vector<32x32xbf16>
    %cst_185 = arith.constant dense<0.000000e+00> : vector<8x32xf32>
    %503 = tpu.matmul %500, %502, %cst_185 {dimension_numbers = #tpu.dot_dimension_numbers<[1], [0], [0], [1], [0, 0, 1, 1], [], []>} : vector<8x32xbf16>, vector<32x32xbf16>, vector<8x32xf32> -> vector<8x32xf32>
    %504 = arith.addf %369, %503 : vector<8x32xf32>
    %c20 = arith.constant 20 : index
    %c0_186 = arith.constant 0 : index
    %505 = vector.load %arg9[%c20, %c0_186] : memref<30x32xf32, #tpu.memory_space<vmem>>, vector<1x32xf32>
    %506 = vector.broadcast %505 : vector<1x32xf32> to vector<8x32xf32>
    %507 = arith.addf %504, %506 : vector<8x32xf32>
    %c21 = arith.constant 21 : index
    %c0_187 = arith.constant 0 : index
    %508 = vector.load %arg9[%c21, %c0_187] : memref<30x32xf32, #tpu.memory_space<vmem>>, vector<1x32xf32>
    %c22 = arith.constant 22 : index
    %c0_188 = arith.constant 0 : index
    %509 = vector.load %arg9[%c22, %c0_188] : memref<30x32xf32, #tpu.memory_space<vmem>>, vector<1x32xf32>
    %cst_189 = arith.constant dense<0.000000e+00> : vector<8xf32>
    %510 = vector.multi_reduction <add>, %507, %cst_189 [1] : vector<8x32xf32> to vector<8xf32>
    %511 = vector.shape_cast %510 : vector<8xf32> to vector<8x1xf32>
    %cst_190 = arith.constant 3.200000e+01 : f32
    %512 = vector.broadcast %cst_190 : f32 to vector<8x1xf32>
    %513 = arith.divf %511, %512 : vector<8x1xf32>
    %514 = vector.broadcast %513 : vector<8x1xf32> to vector<8x32xf32>
    %515 = arith.subf %507, %514 : vector<8x32xf32>
    %516 = arith.mulf %515, %515 : vector<8x32xf32>
    %cst_191 = arith.constant dense<0.000000e+00> : vector<8xf32>
    %517 = vector.multi_reduction <add>, %516, %cst_191 [1] : vector<8x32xf32> to vector<8xf32>
    %518 = vector.shape_cast %517 : vector<8xf32> to vector<8x1xf32>
    %cst_192 = arith.constant 3.200000e+01 : f32
    %519 = vector.broadcast %cst_192 : f32 to vector<8x1xf32>
    %520 = arith.divf %518, %519 : vector<8x1xf32>
    %cst_193 = arith.constant 9.99999974E-6 : f32
    %521 = vector.broadcast %cst_193 : f32 to vector<8x1xf32>
    %522 = arith.addf %520, %521 : vector<8x1xf32>
    %523 = math.rsqrt %522 : vector<8x1xf32>
    %524 = vector.broadcast %523 : vector<8x1xf32> to vector<8x32xf32>
    %525 = arith.mulf %515, %524 : vector<8x32xf32>
    %526 = vector.broadcast %508 : vector<1x32xf32> to vector<8x32xf32>
    %527 = arith.mulf %525, %526 : vector<8x32xf32>
    %528 = vector.broadcast %509 : vector<1x32xf32> to vector<8x32xf32>
    %529 = arith.addf %527, %528 : vector<8x32xf32>
    %530 = arith.truncf %529 : vector<8x32xf32> to vector<8x32xbf16>
    %c12_194 = arith.constant 12 : index
    %c0_195 = arith.constant 0 : index
    %c0_196 = arith.constant 0 : index
    %531 = vector.load %arg8[%c12_194, %c0_195, %c0_196] : memref<16x32x32xbf16, #tpu.memory_space<vmem>>, vector<1x32x32xbf16>
    %532 = vector.shape_cast %531 : vector<1x32x32xbf16> to vector<32x32xbf16>
    %cst_197 = arith.constant dense<0.000000e+00> : vector<8x32xf32>
    %533 = tpu.matmul %530, %532, %cst_197 {dimension_numbers = #tpu.dot_dimension_numbers<[1], [0], [0], [1], [0, 0, 1, 1], [], []>} : vector<8x32xbf16>, vector<32x32xbf16>, vector<8x32xf32> -> vector<8x32xf32>
    %c23 = arith.constant 23 : index
    %c0_198 = arith.constant 0 : index
    %534 = vector.load %arg9[%c23, %c0_198] : memref<30x32xf32, #tpu.memory_space<vmem>>, vector<1x32xf32>
    %535 = vector.broadcast %534 : vector<1x32xf32> to vector<8x32xf32>
    %536 = arith.addf %533, %535 : vector<8x32xf32>
    %c13_199 = arith.constant 13 : index
    %c0_200 = arith.constant 0 : index
    %c0_201 = arith.constant 0 : index
    %537 = vector.load %arg8[%c13_199, %c0_200, %c0_201] : memref<16x32x32xbf16, #tpu.memory_space<vmem>>, vector<1x32x32xbf16>
    %538 = vector.shape_cast %537 : vector<1x32x32xbf16> to vector<32x32xbf16>
    %cst_202 = arith.constant dense<0.000000e+00> : vector<8x32xf32>
    %539 = tpu.matmul %9, %538, %cst_202 {dimension_numbers = #tpu.dot_dimension_numbers<[1], [0], [0], [1], [0, 0, 1, 1], [], []>} : vector<8x32xbf16>, vector<32x32xbf16>, vector<8x32xf32> -> vector<8x32xf32>
    %c24 = arith.constant 24 : index
    %c0_203 = arith.constant 0 : index
    %540 = vector.load %arg9[%c24, %c0_203] : memref<30x32xf32, #tpu.memory_space<vmem>>, vector<1x32xf32>
    %541 = vector.broadcast %540 : vector<1x32xf32> to vector<8x32xf32>
    %542 = arith.addf %539, %541 : vector<8x32xf32>
    %c14_204 = arith.constant 14 : index
    %c0_205 = arith.constant 0 : index
    %c0_206 = arith.constant 0 : index
    %543 = vector.load %arg8[%c14_204, %c0_205, %c0_206] : memref<16x32x32xbf16, #tpu.memory_space<vmem>>, vector<1x32x32xbf16>
    %544 = vector.shape_cast %543 : vector<1x32x32xbf16> to vector<32x32xbf16>
    %cst_207 = arith.constant dense<0.000000e+00> : vector<8x32xf32>
    %545 = tpu.matmul %9, %544, %cst_207 {dimension_numbers = #tpu.dot_dimension_numbers<[1], [0], [0], [1], [0, 0, 1, 1], [], []>} : vector<8x32xbf16>, vector<32x32xbf16>, vector<8x32xf32> -> vector<8x32xf32>
    %c25 = arith.constant 25 : index
    %c0_208 = arith.constant 0 : index
    %546 = vector.load %arg9[%c25, %c0_208] : memref<30x32xf32, #tpu.memory_space<vmem>>, vector<1x32xf32>
    %547 = vector.broadcast %546 : vector<1x32xf32> to vector<8x32xf32>
    %548 = arith.addf %545, %547 : vector<8x32xf32>
    %549 = vector.extract_strided_slice %536 {offsets = [0, 0], sizes = [8, 8], strides = [1, 1]} : vector<8x32xf32> to vector<8x8xf32>
    %550 = arith.truncf %549 : vector<8x8xf32> to vector<8x8xbf16>
    %551 = vector.extract_strided_slice %542 {offsets = [0, 0], sizes = [8, 8], strides = [1, 1]} : vector<8x32xf32> to vector<8x8xf32>
    %552 = arith.truncf %551 : vector<8x8xf32> to vector<8x8xbf16>
    %553 = vector.extract_strided_slice %548 {offsets = [0, 0], sizes = [8, 8], strides = [1, 1]} : vector<8x32xf32> to vector<8x8xf32>
    %554 = arith.truncf %553 : vector<8x8xf32> to vector<8x8xbf16>
    %cst_209 = arith.constant dense<0.000000e+00> : vector<8x8xf32>
    %555 = tpu.matmul %550, %552, %cst_209 {dimension_numbers = #tpu.dot_dimension_numbers<[1], [1], [0], [0], [0, 0, 1, 0], [], []>} : vector<8x8xbf16>, vector<8x8xbf16>, vector<8x8xf32> -> vector<8x8xf32>
    %cst_210 = arith.constant 0.353553385 : f32
    %556 = vector.broadcast %cst_210 : f32 to vector<8x8xf32>
    %557 = arith.mulf %555, %556 : vector<8x8xf32>
    %558 = vector.broadcast %39 : vector<1x8xf32> to vector<8x8xf32>
    %559 = arith.addf %557, %558 : vector<8x8xf32>
    %cst_211 = arith.constant dense<0xFF800000> : vector<8xf32>
    %560 = vector.multi_reduction <maximumf>, %559, %cst_211 [1] : vector<8x8xf32> to vector<8xf32>
    %561 = vector.shape_cast %560 : vector<8xf32> to vector<8x1xf32>
    %562 = vector.broadcast %561 : vector<8x1xf32> to vector<8x8xf32>
    %563 = arith.subf %559, %562 : vector<8x8xf32>
    %564 = math.exp %563 : vector<8x8xf32>
    %cst_212 = arith.constant dense<0.000000e+00> : vector<8xf32>
    %565 = vector.multi_reduction <add>, %564, %cst_212 [1] : vector<8x8xf32> to vector<8xf32>
    %566 = vector.shape_cast %565 : vector<8xf32> to vector<8x1xf32>
    %567 = tpu.reciprocal %566 {approx = true} : vector<8x1xf32> -> vector<8x1xf32>
    %568 = vector.broadcast %567 : vector<8x1xf32> to vector<8x8xf32>
    %569 = arith.mulf %564, %568 : vector<8x8xf32>
    %570 = arith.truncf %569 : vector<8x8xf32> to vector<8x8xbf16>
    %cst_213 = arith.constant dense<0.000000e+00> : vector<8x8xf32>
    %571 = tpu.matmul %570, %554, %cst_213 {dimension_numbers = #tpu.dot_dimension_numbers<[1], [0], [0], [1], [0, 0, 1, 1], [], []>} : vector<8x8xbf16>, vector<8x8xbf16>, vector<8x8xf32> -> vector<8x8xf32>
    %572 = vector.extract_strided_slice %536 {offsets = [0, 8], sizes = [8, 8], strides = [1, 1]} : vector<8x32xf32> to vector<8x8xf32>
    %573 = arith.truncf %572 : vector<8x8xf32> to vector<8x8xbf16>
    %574 = vector.extract_strided_slice %542 {offsets = [0, 8], sizes = [8, 8], strides = [1, 1]} : vector<8x32xf32> to vector<8x8xf32>
    %575 = arith.truncf %574 : vector<8x8xf32> to vector<8x8xbf16>
    %576 = vector.extract_strided_slice %548 {offsets = [0, 8], sizes = [8, 8], strides = [1, 1]} : vector<8x32xf32> to vector<8x8xf32>
    %577 = arith.truncf %576 : vector<8x8xf32> to vector<8x8xbf16>
    %cst_214 = arith.constant dense<0.000000e+00> : vector<8x8xf32>
    %578 = tpu.matmul %573, %575, %cst_214 {dimension_numbers = #tpu.dot_dimension_numbers<[1], [1], [0], [0], [0, 0, 1, 0], [], []>} : vector<8x8xbf16>, vector<8x8xbf16>, vector<8x8xf32> -> vector<8x8xf32>
    %cst_215 = arith.constant 0.353553385 : f32
    %579 = vector.broadcast %cst_215 : f32 to vector<8x8xf32>
    %580 = arith.mulf %578, %579 : vector<8x8xf32>
    %581 = vector.broadcast %39 : vector<1x8xf32> to vector<8x8xf32>
    %582 = arith.addf %580, %581 : vector<8x8xf32>
    %cst_216 = arith.constant dense<0xFF800000> : vector<8xf32>
    %583 = vector.multi_reduction <maximumf>, %582, %cst_216 [1] : vector<8x8xf32> to vector<8xf32>
    %584 = vector.shape_cast %583 : vector<8xf32> to vector<8x1xf32>
    %585 = vector.broadcast %584 : vector<8x1xf32> to vector<8x8xf32>
    %586 = arith.subf %582, %585 : vector<8x8xf32>
    %587 = math.exp %586 : vector<8x8xf32>
    %cst_217 = arith.constant dense<0.000000e+00> : vector<8xf32>
    %588 = vector.multi_reduction <add>, %587, %cst_217 [1] : vector<8x8xf32> to vector<8xf32>
    %589 = vector.shape_cast %588 : vector<8xf32> to vector<8x1xf32>
    %590 = tpu.reciprocal %589 {approx = true} : vector<8x1xf32> -> vector<8x1xf32>
    %591 = vector.broadcast %590 : vector<8x1xf32> to vector<8x8xf32>
    %592 = arith.mulf %587, %591 : vector<8x8xf32>
    %593 = arith.truncf %592 : vector<8x8xf32> to vector<8x8xbf16>
    %cst_218 = arith.constant dense<0.000000e+00> : vector<8x8xf32>
    %594 = tpu.matmul %593, %577, %cst_218 {dimension_numbers = #tpu.dot_dimension_numbers<[1], [0], [0], [1], [0, 0, 1, 1], [], []>} : vector<8x8xbf16>, vector<8x8xbf16>, vector<8x8xf32> -> vector<8x8xf32>
    %595 = vector.extract_strided_slice %536 {offsets = [0, 16], sizes = [8, 8], strides = [1, 1]} : vector<8x32xf32> to vector<8x8xf32>
    %596 = arith.truncf %595 : vector<8x8xf32> to vector<8x8xbf16>
    %597 = vector.extract_strided_slice %542 {offsets = [0, 16], sizes = [8, 8], strides = [1, 1]} : vector<8x32xf32> to vector<8x8xf32>
    %598 = arith.truncf %597 : vector<8x8xf32> to vector<8x8xbf16>
    %599 = vector.extract_strided_slice %548 {offsets = [0, 16], sizes = [8, 8], strides = [1, 1]} : vector<8x32xf32> to vector<8x8xf32>
    %600 = arith.truncf %599 : vector<8x8xf32> to vector<8x8xbf16>
    %cst_219 = arith.constant dense<0.000000e+00> : vector<8x8xf32>
    %601 = tpu.matmul %596, %598, %cst_219 {dimension_numbers = #tpu.dot_dimension_numbers<[1], [1], [0], [0], [0, 0, 1, 0], [], []>} : vector<8x8xbf16>, vector<8x8xbf16>, vector<8x8xf32> -> vector<8x8xf32>
    %cst_220 = arith.constant 0.353553385 : f32
    %602 = vector.broadcast %cst_220 : f32 to vector<8x8xf32>
    %603 = arith.mulf %601, %602 : vector<8x8xf32>
    %604 = vector.broadcast %39 : vector<1x8xf32> to vector<8x8xf32>
    %605 = arith.addf %603, %604 : vector<8x8xf32>
    %cst_221 = arith.constant dense<0xFF800000> : vector<8xf32>
    %606 = vector.multi_reduction <maximumf>, %605, %cst_221 [1] : vector<8x8xf32> to vector<8xf32>
    %607 = vector.shape_cast %606 : vector<8xf32> to vector<8x1xf32>
    %608 = vector.broadcast %607 : vector<8x1xf32> to vector<8x8xf32>
    %609 = arith.subf %605, %608 : vector<8x8xf32>
    %610 = math.exp %609 : vector<8x8xf32>
    %cst_222 = arith.constant dense<0.000000e+00> : vector<8xf32>
    %611 = vector.multi_reduction <add>, %610, %cst_222 [1] : vector<8x8xf32> to vector<8xf32>
    %612 = vector.shape_cast %611 : vector<8xf32> to vector<8x1xf32>
    %613 = tpu.reciprocal %612 {approx = true} : vector<8x1xf32> -> vector<8x1xf32>
    %614 = vector.broadcast %613 : vector<8x1xf32> to vector<8x8xf32>
    %615 = arith.mulf %610, %614 : vector<8x8xf32>
    %616 = arith.truncf %615 : vector<8x8xf32> to vector<8x8xbf16>
    %cst_223 = arith.constant dense<0.000000e+00> : vector<8x8xf32>
    %617 = tpu.matmul %616, %600, %cst_223 {dimension_numbers = #tpu.dot_dimension_numbers<[1], [0], [0], [1], [0, 0, 1, 1], [], []>} : vector<8x8xbf16>, vector<8x8xbf16>, vector<8x8xf32> -> vector<8x8xf32>
    %618 = vector.extract_strided_slice %536 {offsets = [0, 24], sizes = [8, 8], strides = [1, 1]} : vector<8x32xf32> to vector<8x8xf32>
    %619 = arith.truncf %618 : vector<8x8xf32> to vector<8x8xbf16>
    %620 = vector.extract_strided_slice %542 {offsets = [0, 24], sizes = [8, 8], strides = [1, 1]} : vector<8x32xf32> to vector<8x8xf32>
    %621 = arith.truncf %620 : vector<8x8xf32> to vector<8x8xbf16>
    %622 = vector.extract_strided_slice %548 {offsets = [0, 24], sizes = [8, 8], strides = [1, 1]} : vector<8x32xf32> to vector<8x8xf32>
    %623 = arith.truncf %622 : vector<8x8xf32> to vector<8x8xbf16>
    %cst_224 = arith.constant dense<0.000000e+00> : vector<8x8xf32>
    %624 = tpu.matmul %619, %621, %cst_224 {dimension_numbers = #tpu.dot_dimension_numbers<[1], [1], [0], [0], [0, 0, 1, 0], [], []>} : vector<8x8xbf16>, vector<8x8xbf16>, vector<8x8xf32> -> vector<8x8xf32>
    %cst_225 = arith.constant 0.353553385 : f32
    %625 = vector.broadcast %cst_225 : f32 to vector<8x8xf32>
    %626 = arith.mulf %624, %625 : vector<8x8xf32>
    %627 = vector.broadcast %39 : vector<1x8xf32> to vector<8x8xf32>
    %628 = arith.addf %626, %627 : vector<8x8xf32>
    %cst_226 = arith.constant dense<0xFF800000> : vector<8xf32>
    %629 = vector.multi_reduction <maximumf>, %628, %cst_226 [1] : vector<8x8xf32> to vector<8xf32>
    %630 = vector.shape_cast %629 : vector<8xf32> to vector<8x1xf32>
    %631 = vector.broadcast %630 : vector<8x1xf32> to vector<8x8xf32>
    %632 = arith.subf %628, %631 : vector<8x8xf32>
    %633 = math.exp %632 : vector<8x8xf32>
    %cst_227 = arith.constant dense<0.000000e+00> : vector<8xf32>
    %634 = vector.multi_reduction <add>, %633, %cst_227 [1] : vector<8x8xf32> to vector<8xf32>
    %635 = vector.shape_cast %634 : vector<8xf32> to vector<8x1xf32>
    %636 = tpu.reciprocal %635 {approx = true} : vector<8x1xf32> -> vector<8x1xf32>
    %637 = vector.broadcast %636 : vector<8x1xf32> to vector<8x8xf32>
    %638 = arith.mulf %633, %637 : vector<8x8xf32>
    %639 = arith.truncf %638 : vector<8x8xf32> to vector<8x8xbf16>
    %cst_228 = arith.constant dense<0.000000e+00> : vector<8x8xf32>
    %640 = tpu.matmul %639, %623, %cst_228 {dimension_numbers = #tpu.dot_dimension_numbers<[1], [0], [0], [1], [0, 0, 1, 1], [], []>} : vector<8x8xbf16>, vector<8x8xbf16>, vector<8x8xf32> -> vector<8x8xf32>
    %641 = tpu.concatenate %571, %594, %617, %640 in 1 : vector<8x8xf32>, vector<8x8xf32>, vector<8x8xf32>, vector<8x8xf32> -> vector<8x32xf32>
    %642 = arith.truncf %641 : vector<8x32xf32> to vector<8x32xbf16>
    %c15_229 = arith.constant 15 : index
    %c0_230 = arith.constant 0 : index
    %c0_231 = arith.constant 0 : index
    %643 = vector.load %arg8[%c15_229, %c0_230, %c0_231] : memref<16x32x32xbf16, #tpu.memory_space<vmem>>, vector<1x32x32xbf16>
    %644 = vector.shape_cast %643 : vector<1x32x32xbf16> to vector<32x32xbf16>
    %cst_232 = arith.constant dense<0.000000e+00> : vector<8x32xf32>
    %645 = tpu.matmul %642, %644, %cst_232 {dimension_numbers = #tpu.dot_dimension_numbers<[1], [0], [0], [1], [0, 0, 1, 1], [], []>} : vector<8x32xbf16>, vector<32x32xbf16>, vector<8x32xf32> -> vector<8x32xf32>
    %646 = arith.addf %507, %645 : vector<8x32xf32>
    %c26 = arith.constant 26 : index
    %c0_233 = arith.constant 0 : index
    %647 = vector.load %arg9[%c26, %c0_233] : memref<30x32xf32, #tpu.memory_space<vmem>>, vector<1x32xf32>
    %648 = vector.broadcast %647 : vector<1x32xf32> to vector<8x32xf32>
    %649 = arith.addf %646, %648 : vector<8x32xf32>
    %c27 = arith.constant 27 : index
    %c0_234 = arith.constant 0 : index
    %650 = vector.load %arg9[%c27, %c0_234] : memref<30x32xf32, #tpu.memory_space<vmem>>, vector<1x32xf32>
    %c28 = arith.constant 28 : index
    %c0_235 = arith.constant 0 : index
    %651 = vector.load %arg9[%c28, %c0_235] : memref<30x32xf32, #tpu.memory_space<vmem>>, vector<1x32xf32>
    %cst_236 = arith.constant dense<0.000000e+00> : vector<8xf32>
    %652 = vector.multi_reduction <add>, %649, %cst_236 [1] : vector<8x32xf32> to vector<8xf32>
    %653 = vector.shape_cast %652 : vector<8xf32> to vector<8x1xf32>
    %cst_237 = arith.constant 3.200000e+01 : f32
    %654 = vector.broadcast %cst_237 : f32 to vector<8x1xf32>
    %655 = arith.divf %653, %654 : vector<8x1xf32>
    %656 = vector.broadcast %655 : vector<8x1xf32> to vector<8x32xf32>
    %657 = arith.subf %649, %656 : vector<8x32xf32>
    %658 = arith.mulf %657, %657 : vector<8x32xf32>
    %cst_238 = arith.constant dense<0.000000e+00> : vector<8xf32>
    %659 = vector.multi_reduction <add>, %658, %cst_238 [1] : vector<8x32xf32> to vector<8xf32>
    %660 = vector.shape_cast %659 : vector<8xf32> to vector<8x1xf32>
    %cst_239 = arith.constant 3.200000e+01 : f32
    %661 = vector.broadcast %cst_239 : f32 to vector<8x1xf32>
    %662 = arith.divf %660, %661 : vector<8x1xf32>
    %cst_240 = arith.constant 9.99999974E-6 : f32
    %663 = vector.broadcast %cst_240 : f32 to vector<8x1xf32>
    %664 = arith.addf %662, %663 : vector<8x1xf32>
    %665 = math.rsqrt %664 : vector<8x1xf32>
    %666 = vector.broadcast %665 : vector<8x1xf32> to vector<8x32xf32>
    %667 = arith.mulf %657, %666 : vector<8x32xf32>
    %668 = vector.broadcast %650 : vector<1x32xf32> to vector<8x32xf32>
    %669 = arith.mulf %667, %668 : vector<8x32xf32>
    %670 = vector.broadcast %651 : vector<1x32xf32> to vector<8x32xf32>
    %671 = arith.addf %669, %670 : vector<8x32xf32>
    %672 = arith.truncf %671 : vector<8x32xf32> to vector<8x32xbf16>
    %c1_241 = arith.constant 1 : index
    %c0_242 = arith.constant 0 : index
    %c0_243 = arith.constant 0 : index
    %673 = vector.load %arg10[%c1_241, %c0_242, %c0_243] : memref<2x32x128xbf16, #tpu.memory_space<vmem>>, vector<1x32x128xbf16>
    %674 = vector.shape_cast %673 : vector<1x32x128xbf16> to vector<32x128xbf16>
    %cst_244 = arith.constant dense<0.000000e+00> : vector<8x128xf32>
    %675 = tpu.matmul %672, %674, %cst_244 {dimension_numbers = #tpu.dot_dimension_numbers<[1], [0], [0], [1], [0, 0, 1, 1], [], []>} : vector<8x32xbf16>, vector<32x128xbf16>, vector<8x128xf32> -> vector<8x128xf32>
    %c1_245 = arith.constant 1 : index
    %c0_246 = arith.constant 0 : index
    %676 = vector.load %arg11[%c1_245, %c0_246] : memref<2x128xf32, #tpu.memory_space<vmem>>, vector<1x128xf32>
    %677 = vector.broadcast %676 : vector<1x128xf32> to vector<8x128xf32>
    %678 = arith.addf %675, %677 : vector<8x128xf32>
    %cst_247 = arith.constant 5.000000e-01 : f32
    %679 = vector.broadcast %cst_247 : f32 to vector<8x128xf32>
    %680 = arith.mulf %679, %678 : vector<8x128xf32>
    %cst_248 = arith.constant 4.471500e-02 : f32
    %681 = vector.broadcast %cst_248 : f32 to vector<8x128xf32>
    %682 = arith.mulf %681, %678 : vector<8x128xf32>
    %683 = arith.mulf %682, %678 : vector<8x128xf32>
    %684 = arith.mulf %683, %678 : vector<8x128xf32>
    %685 = arith.addf %678, %684 : vector<8x128xf32>
    %cst_249 = arith.constant 0.797884583 : f32
    %686 = vector.broadcast %cst_249 : f32 to vector<8x128xf32>
    %687 = arith.mulf %686, %685 : vector<8x128xf32>
    %688 = math.tanh %687 : vector<8x128xf32>
    %cst_250 = arith.constant 1.000000e+00 : f32
    %689 = vector.broadcast %cst_250 : f32 to vector<8x128xf32>
    %690 = arith.addf %689, %688 : vector<8x128xf32>
    %691 = arith.mulf %680, %690 : vector<8x128xf32>
    %692 = arith.truncf %691 : vector<8x128xf32> to vector<8x128xbf16>
    %c1_251 = arith.constant 1 : index
    %c0_252 = arith.constant 0 : index
    %c0_253 = arith.constant 0 : index
    %693 = vector.load %arg12[%c1_251, %c0_252, %c0_253] : memref<2x128x32xbf16, #tpu.memory_space<vmem>>, vector<1x128x32xbf16>
    %694 = vector.shape_cast %693 : vector<1x128x32xbf16> to vector<128x32xbf16>
    %cst_254 = arith.constant dense<0.000000e+00> : vector<8x32xf32>
    %695 = tpu.matmul %692, %694, %cst_254 {dimension_numbers = #tpu.dot_dimension_numbers<[1], [0], [0], [1], [0, 0, 1, 1], [], []>} : vector<8x128xbf16>, vector<128x32xbf16>, vector<8x32xf32> -> vector<8x32xf32>
    %696 = arith.addf %649, %695 : vector<8x32xf32>
    %c29 = arith.constant 29 : index
    %c0_255 = arith.constant 0 : index
    %697 = vector.load %arg9[%c29, %c0_255] : memref<30x32xf32, #tpu.memory_space<vmem>>, vector<1x32xf32>
    %698 = vector.broadcast %697 : vector<1x32xf32> to vector<8x32xf32>
    %699 = arith.addf %696, %698 : vector<8x32xf32>
    %c0_256 = arith.constant 0 : index
    %c0_257 = arith.constant 0 : index
    %700 = vector.load %arg7[%c0_256, %c0_257] : memref<2x32xf32, #tpu.memory_space<vmem>>, vector<1x32xf32>
    %c1_258 = arith.constant 1 : index
    %c0_259 = arith.constant 0 : index
    %701 = vector.load %arg7[%c1_258, %c0_259] : memref<2x32xf32, #tpu.memory_space<vmem>>, vector<1x32xf32>
    %cst_260 = arith.constant dense<0.000000e+00> : vector<8xf32>
    %702 = vector.multi_reduction <add>, %699, %cst_260 [1] : vector<8x32xf32> to vector<8xf32>
    %703 = vector.shape_cast %702 : vector<8xf32> to vector<8x1xf32>
    %cst_261 = arith.constant 3.200000e+01 : f32
    %704 = vector.broadcast %cst_261 : f32 to vector<8x1xf32>
    %705 = arith.divf %703, %704 : vector<8x1xf32>
    %706 = vector.broadcast %705 : vector<8x1xf32> to vector<8x32xf32>
    %707 = arith.subf %699, %706 : vector<8x32xf32>
    %708 = arith.mulf %707, %707 : vector<8x32xf32>
    %cst_262 = arith.constant dense<0.000000e+00> : vector<8xf32>
    %709 = vector.multi_reduction <add>, %708, %cst_262 [1] : vector<8x32xf32> to vector<8xf32>
    %710 = vector.shape_cast %709 : vector<8xf32> to vector<8x1xf32>
    %cst_263 = arith.constant 3.200000e+01 : f32
    %711 = vector.broadcast %cst_263 : f32 to vector<8x1xf32>
    %712 = arith.divf %710, %711 : vector<8x1xf32>
    %cst_264 = arith.constant 9.99999974E-6 : f32
    %713 = vector.broadcast %cst_264 : f32 to vector<8x1xf32>
    %714 = arith.addf %712, %713 : vector<8x1xf32>
    %715 = math.rsqrt %714 : vector<8x1xf32>
    %716 = vector.broadcast %715 : vector<8x1xf32> to vector<8x32xf32>
    %717 = arith.mulf %707, %716 : vector<8x32xf32>
    %718 = vector.broadcast %700 : vector<1x32xf32> to vector<8x32xf32>
    %719 = arith.mulf %717, %718 : vector<8x32xf32>
    %720 = vector.broadcast %701 : vector<1x32xf32> to vector<8x32xf32>
    %721 = arith.addf %719, %720 : vector<8x32xf32>
    %722 = arith.truncf %721 : vector<8x32xf32> to vector<8x32xbf16>
    %c0_265 = arith.constant 0 : index
    %c0_266 = arith.constant 0 : index
    %723 = vector.load %arg5[%c0_265, %c0_266] : memref<128x32xbf16, #tpu.memory_space<vmem>>, vector<128x32xbf16>
    %cst_267 = arith.constant dense<0.000000e+00> : vector<8x128xf32>
    %724 = tpu.matmul %722, %723, %cst_267 {dimension_numbers = #tpu.dot_dimension_numbers<[1], [1], [0], [0], [0, 0, 1, 0], [], []>} : vector<8x32xbf16>, vector<128x32xbf16>, vector<8x128xf32> -> vector<8x128xf32>
    %c0_268 = arith.constant 0 : index
    %c0_269 = arith.constant 0 : index
    %c0_270 = arith.constant 0 : index
    %725 = vector.load %arg13[%c0_268, %c0_269, %c0_270] : memref<1x9x128xf32, #tpu.memory_space<vmem>>, vector<1x8x128xf32>
    %726 = vector.shape_cast %725 : vector<1x8x128xf32> to vector<8x128xf32>
    %727 = vector.shape_cast %724 : vector<8x128xf32> to vector<1x8x128xf32>
    tpu.vector_store %arg13[%c0_268, %c0_269, %c0_270], %727 {strides = array<i32>} : memref<1x9x128xf32, #tpu.memory_space<vmem>>, vector<1x8x128xf32>,
    %cst_271 = arith.constant dense<0xFF800000> : vector<8xf32>
    %728 = vector.multi_reduction <maximumf>, %724, %cst_271 [1] : vector<8x128xf32> to vector<8xf32>
    %729 = vector.shape_cast %728 : vector<8xf32> to vector<8x1xf32>
    %730 = vector.broadcast %729 : vector<8x1xf32> to vector<8x128xf32>
    %731 = arith.subf %724, %730 : vector<8x128xf32>
    %732 = math.exp %731 : vector<8x128xf32>
    %cst_272 = arith.constant dense<0.000000e+00> : vector<8xf32>
    %733 = vector.multi_reduction <add>, %732, %cst_272 [1] : vector<8x128xf32> to vector<8xf32>
    %734 = vector.shape_cast %733 : vector<8xf32> to vector<8x1xf32>
    %735 = math.log %734 : vector<8x1xf32>
    %736 = arith.addf %735, %729 : vector<8x1xf32>
    %737 = vector.broadcast %3 : vector<8x1xi32> to vector<8x128xi32>
    %738 = arith.cmpi eq, %14, %737 : vector<8x128xi32>
    %cst_273 = arith.constant 0.000000e+00 : f32
    %739 = vector.broadcast %cst_273 : f32 to vector<8x128xf32>
    %740 = arith.select %738, %724, %739 : vector<8x128xi1>, vector<8x128xf32>
    %cst_274 = arith.constant dense<0.000000e+00> : vector<8xf32>
    %741 = vector.multi_reduction <add>, %740, %cst_274 [1] : vector<8x128xf32> to vector<8xf32>
    %742 = vector.shape_cast %741 : vector<8xf32> to vector<8x1xf32>
    %c0_i32_275 = arith.constant 0 : i32
    %743 = vector.broadcast %c0_i32_275 : i32 to vector<8x1xi32>
    %744 = arith.cmpi ne, %3, %743 : vector<8x1xi32>
    %745 = arith.extui %744 : vector<8x1xi1> to vector<8x1xi32>
    %746 = arith.sitofp %745 : vector<8x1xi32> to vector<8x1xf32>
    %747 = arith.subf %736, %742 : vector<8x1xf32>
    %748 = arith.mulf %747, %746 : vector<8x1xf32>
    %749 = vector.shape_cast %748 : vector<8x1xf32> to vector<1x8x1xf32>
    %cst_276 = arith.constant dense<0.000000e+00> : vector<1xf32>
    %750 = vector.multi_reduction <add>, %749, %cst_276 [1, 2] : vector<1x8x1xf32> to vector<1xf32>
    %751 = vector.shape_cast %750 : vector<1xf32> to vector<1x1x1xf32>
    %752 = vector.extract %751[0, 0, 0] : f32 from vector<1x1x1xf32>
    %753 = vector.shape_cast %746 : vector<8x1xf32> to vector<1x8x1xf32>
    %cst_277 = arith.constant dense<0.000000e+00> : vector<1xf32>
    %754 = vector.multi_reduction <add>, %753, %cst_277 [1, 2] : vector<1x8x1xf32> to vector<1xf32>
    %755 = vector.shape_cast %754 : vector<1xf32> to vector<1x1x1xf32>
    %756 = vector.extract %755[0, 0, 0] : f32 from vector<1x1x1xf32>
    %757 = tpu.iota {dimensions = array<i32: 1>} : vector<1x128xi32>
    %c0_i32_278 = arith.constant 0 : i32
    %758 = vector.broadcast %c0_i32_278 : i32 to vector<1x128xi32>
    %759 = arith.cmpi eq, %757, %758 : vector<1x128xi32>
    %c1_i32 = arith.constant 1 : i32
    %760 = vector.broadcast %c1_i32 : i32 to vector<1x128xi32>
    %761 = arith.cmpi eq, %757, %760 : vector<1x128xi32>
    %cst_279 = arith.constant 0.000000e+00 : f32
    %762 = vector.broadcast %756 : f32 to vector<1x128xf32>
    %763 = vector.broadcast %cst_279 : f32 to vector<1x128xf32>
    %764 = arith.select %761, %762, %763 : vector<1x128xi1>, vector<1x128xf32>
    %765 = vector.broadcast %752 : f32 to vector<1x128xf32>
    %766 = arith.select %759, %765, %764 : vector<1x128xi1>, vector<1x128xf32>
    %c0_280 = arith.constant 0 : index
    %c8_281 = arith.constant 8 : index
    %c0_282 = arith.constant 0 : index
    %767 = vector.load %arg13[%c0_280, %c8_281, %c0_282] : memref<1x9x128xf32, #tpu.memory_space<vmem>>, vector<1x1x128xf32>
    %768 = vector.shape_cast %767 : vector<1x1x128xf32> to vector<1x128xf32>
    %769 = vector.shape_cast %766 : vector<1x128xf32> to vector<1x1x128xf32>
    tpu.vector_store %arg13[%c0_280, %c8_281, %c0_282], %769 {strides = array<i32>} : memref<1x9x128xf32, #tpu.memory_space<vmem>>, vector<1x1x128xf32>,
    return
  }
  func.func @transform_0(%arg0: i32) -> (i32, i32, i32) {
    %c0_i32 = arith.constant 0 : i32
    %c0_i32_0 = arith.constant 0 : i32
    %c0_i32_1 = arith.constant 0 : i32
    return %arg0, %c0_i32, %c0_i32_0 : i32, i32, i32
  }
  func.func @transform_1(%arg0: i32) -> (i32, i32, i32) {
    %c0_i32 = arith.constant 0 : i32
    %c0_i32_0 = arith.constant 0 : i32
    %c0_i32_1 = arith.constant 0 : i32
    return %arg0, %c0_i32, %c0_i32_0 : i32, i32, i32
  }
  func.func @transform_2(%arg0: i32) -> (i32, i32, i32) {
    %c0_i32 = arith.constant 0 : i32
    %c0_i32_0 = arith.constant 0 : i32
    %c0_i32_1 = arith.constant 0 : i32
    return %arg0, %c0_i32, %c0_i32_0 : i32, i32, i32
  }
  func.func @transform_3(%arg0: i32) -> (i32, i32, i32) {
    %c0_i32 = arith.constant 0 : i32
    %c0_i32_0 = arith.constant 0 : i32
    %c0_i32_1 = arith.constant 0 : i32
    return %arg0, %c0_i32, %c0_i32_0 : i32, i32, i32
  }
  func.func @transform_4(%arg0: i32) -> (i32, i32) {
    %c0_i32 = arith.constant 0 : i32
    %c0_i32_0 = arith.constant 0 : i32
    %c0_i32_1 = arith.constant 0 : i32
    return %c0_i32, %c0_i32_0 : i32, i32
  }
  func.func @transform_5(%arg0: i32) -> (i32, i32) {
    %c0_i32 = arith.constant 0 : i32
    %c0_i32_0 = arith.constant 0 : i32
    %c0_i32_1 = arith.constant 0 : i32
    return %c0_i32, %c0_i32_0 : i32, i32
  }
  func.func @transform_6(%arg0: i32) -> (i32, i32) {
    %c0_i32 = arith.constant 0 : i32
    %c0_i32_0 = arith.constant 0 : i32
    %c0_i32_1 = arith.constant 0 : i32
    return %c0_i32, %c0_i32_0 : i32, i32
  }
  func.func @transform_7(%arg0: i32) -> (i32, i32, i32) {
    %c0_i32 = arith.constant 0 : i32
    %c0_i32_0 = arith.constant 0 : i32
    %c0_i32_1 = arith.constant 0 : i32
    %c0_i32_2 = arith.constant 0 : i32
    return %c0_i32, %c0_i32_0, %c0_i32_1 : i32, i32, i32
  }
  func.func @transform_8(%arg0: i32) -> (i32, i32) {
    %c0_i32 = arith.constant 0 : i32
    %c0_i32_0 = arith.constant 0 : i32
    %c0_i32_1 = arith.constant 0 : i32
    return %c0_i32, %c0_i32_0 : i32, i32
  }
  func.func @transform_9(%arg0: i32) -> (i32, i32, i32) {
    %c0_i32 = arith.constant 0 : i32
    %c0_i32_0 = arith.constant 0 : i32
    %c0_i32_1 = arith.constant 0 : i32
    %c0_i32_2 = arith.constant 0 : i32
    return %c0_i32, %c0_i32_0, %c0_i32_1 : i32, i32, i32
  }
  func.func @transform_10(%arg0: i32) -> (i32, i32) {
    %c0_i32 = arith.constant 0 : i32
    %c0_i32_0 = arith.constant 0 : i32
    %c0_i32_1 = arith.constant 0 : i32
    return %c0_i32, %c0_i32_0 : i32, i32
  }
  func.func @transform_11(%arg0: i32) -> (i32, i32, i32) {
    %c0_i32 = arith.constant 0 : i32
    %c0_i32_0 = arith.constant 0 : i32
    %c0_i32_1 = arith.constant 0 : i32
    %c0_i32_2 = arith.constant 0 : i32
    return %c0_i32, %c0_i32_0, %c0_i32_1 : i32, i32, i32
  }
  func.func @transform_12(%arg0: i32) -> (i32, i32, i32) {
    %c0_i32 = arith.constant 0 : i32
    %c0_i32_0 = arith.constant 0 : i32
    %c0_i32_1 = arith.constant 0 : i32
    return %arg0, %c0_i32, %c0_i32_0 : i32, i32, i32
  }
}

</mosaic_0001>

<llo_original>
// kernel: gpt_visual_dialog_decoder_forward.1
$region0: #{gpt_visual_dialog_decoder_forward.1}
  #allocation0 [shape = 'u32[]', space=smem, size = 0x4, offset = 0x4, fixed_abs, tag = 'smem constant byte address 0x4 - core index']
  #allocation1 [shape = 'u32[144,128]{1,0:T(1,128)}', space=vmem, size = 0x12000, scoped, tag = 'internal scratch']
  %s0 = inlined_call_operand.vmem [shape: s32[2,8,2], index: 0, kind: input, shape index: {}]
  %s1 = inlined_call_operand.hbm [shape: s32[2,1,8], index: 1, kind: input, shape index: {}]
  %s2 = inlined_call_operand.vmem [shape: s32[2,1,8], index: 2, kind: input, shape index: {}]
  %s3 = inlined_call_operand.vmem [shape: bf16[2,8,32], index: 3, kind: input, shape index: {}]
  %s4 = inlined_call_operand.vmem [shape: bf16[128,32], index: 4, kind: input, shape index: {}]
  %s5 = inlined_call_operand.vmem [shape: f32[32,32], index: 5, kind: input, shape index: {}]
  %s6 = inlined_call_operand.hbm [shape: f32[2,32], index: 6, kind: input, shape index: {}]
  %s7 = inlined_call_operand.vmem [shape: bf16[16,32,32], index: 7, kind: input, shape index: {}]
  %s8 = inlined_call_operand.vmem [shape: f32[30,32], index: 8, kind: input, shape index: {}]
  %s9 = inlined_call_operand.vmem [shape: bf16[2,32,128], index: 9, kind: input, shape index: {}]
  %s10 = inlined_call_operand.hbm [shape: f32[2,128], index: 10, kind: input, shape index: {}]
  %s11 = inlined_call_operand.vmem [shape: bf16[2,128,32], index: 11, kind: input, shape index: {}]
  %s12 = inlined_call_operand.vmem [shape: f32[2,9,128], index: 12, kind: output, shape index: {}]
  %s13 = sld [smem:[#allocation0]]
  $region93: #{gpt_visual_dialog_decoder_forward.1} parent=0
    _
  %s15 = ssub.s32 1, %s13
  %s16 = scalar_select 0, %s15, %s13
  $region1: #{gpt_visual_dialog_decoder_forward.1} parent=0
    #allocation2 [shape = 'u8[1024]{0}', space=vmem, size = 0x400, scoped, tag = 'input window, operand 1']
    #allocation3 [shape = 's32[2]{0}', space=sflag, size = 0x8, scoped, tag = 'scoped memory for gpt_visual_dialog_decoder_forward.1']
    #allocation4 [shape = 'u8[1024]{0}', space=vmem, size = 0x400, scoped, tag = 'input window, operand 6, single buffered']
    #allocation5 [shape = 's32[1]{0}', space=sflag, size = 0x4, scoped, tag = 'scoped memory for gpt_visual_dialog_decoder_forward.1']
    #allocation6 [shape = 'u8[1024]{0}', space=vmem, size = 0x400, scoped, tag = 'input window, operand 10, single buffered']
    %17 = vsyncpa [#allocation3], 0
    %s18 = scalar_lea.sflag [#allocation3], 1
    %19 = vsyncpa %s18, 0
    %20 = vsyncpa [#allocation5], 0
    loop: start=0, step=1, limit=4
    $region2: #{gpt_visual_dialog_decoder_forward.1} parent=1 // loop_pre_header
      _
    $region3: #{gpt_visual_dialog_decoder_forward.1} parent=1 // loop_header
      %s22 = sphi 0, %s26
      %p23 = scmp.ge.s32.totalorder %s22, 4
      %s32 = sphi 0, %s34
      %s35 = sphi 0, %s32
      %s36 = sphi 0, %s35
      %s52 = sphi 0, %s36
      %s58 = sphi 0, %s60
      %s61 = sphi 0, %s58
      %s62 = sphi 0, %s61
      %s78 = sphi 0, %s62
      %s84 = sphi 0, %s86
      %s87 = sphi 0, %s84
      %s88 = sphi 0, %s87
      %s104 = sphi 0, %s88
      %s110 = sphi 0, %s112
      %s113 = sphi 0, %s110
      %s114 = sphi 0, %s113
      %s130 = sphi 0, %s114
      %s134 = sphi 0, %s134
      %s136 = sphi 0, %s134
      %s137 = sphi 0, %s136
      %s151 = sphi 0, %s137
      %s155 = sphi 0, %s155
      %s157 = sphi 0, %s155
      %s158 = sphi 0, %s157
      %s172 = sphi 0, %s158
      %s176 = sphi 0, %s176
      %s178 = sphi 0, %s176
      %s179 = sphi 0, %s178
      %s193 = sphi 0, %s179
      %s197 = sphi 0, %s197
      %s199 = sphi 0, %s197
      %s200 = sphi 0, %s199
      %s214 = sphi 0, %s200
      %s218 = sphi 0, %s218
      %s220 = sphi 0, %s218
      %s221 = sphi 0, %s220
      %s235 = sphi 0, %s221
      %s239 = sphi 0, %s239
      %s241 = sphi 0, %s239
      %s242 = sphi 0, %s241
      %s256 = sphi 0, %s242
      %s260 = sphi 0, %s260
      %s262 = sphi 0, %s260
      %s263 = sphi 0, %s262
      %s277 = sphi 0, %s263
      %s281 = sphi 0, %s281
      %s283 = sphi 0, %s281
      %s284 = sphi 0, %s283
      %s298 = sphi 0, %s284
      %s304 = sphi 0, %s306
      %s307 = sphi 0, %s304
      %s308 = sphi 0, %s307
      %s324 = sphi 0, %s308
    $region4: #{gpt_visual_dialog_decoder_forward.1} parent=1 // loop_header_branch
      %25 = sbr.rel (%p23) target = $region8
    $region5: #{gpt_visual_dialog_decoder_forward.1} parent=1 // loop_body
      %s27 = ssub.s32 %s22, 1
      %s28 = ssub.s32 %s22, 2
      %s29 = sadd.s32 %s22, 1
      %s30 = ssub.s32 %s22, %s29
      %p31 = scmp.eq.s32.totalorder %s30, 0
      %s33 = sadd.s32 %s32, 1
      %s34 = scalar_select %p31, %s32, %s33
      %p37 = pneg %p31
      %p38 = scmp.eq.s32.totalorder %s22, 1
      %p39 = por %p37, %p38
      %p40 = scmp.ne.s32.totalorder %s32, %s35
      %p41 = scmp.eq.s32.totalorder %s22, 0
      %p42 = por %p40, %p41
      %p43 = scmp.ne.s32.totalorder %s32, %s35
      %p44 = scmp.eq.s32.totalorder %s27, 1
      %p45 = por %p43, %p44
      %p46 = scmp.ne.s32.totalorder %s35, %s36
      %p47 = scmp.eq.s32.totalorder %s27, 0
      %p48 = por %p46, %p47
      %p49 = scmp.ne.s32.totalorder %s35, %s36
      %p50 = scmp.eq.s32.totalorder %s28, 1
      %p51 = por %p49, %p50
      %p53 = scmp.ne.s32.totalorder %s36, %s52
      %p54 = scmp.eq.s32.totalorder %s28, 0
      %p55 = por %p53, %p54
      %s56 = ssub.s32 %s22, %s29
      %p57 = scmp.eq.s32.totalorder %s56, 0
      %s59 = sadd.s32 %s58, 1
      %s60 = scalar_select %p57, %s58, %s59
      %p63 = pneg %p57
      %p64 = scmp.eq.s32.totalorder %s22, 1
      %p65 = por %p63, %p64
      %p66 = scmp.ne.s32.totalorder %s58, %s61
      %p67 = scmp.eq.s32.totalorder %s22, 0
      %p68 = por %p66, %p67
      %p69 = scmp.ne.s32.totalorder %s58, %s61
      %p70 = scmp.eq.s32.totalorder %s27, 1
      %p71 = por %p69, %p70
      %p72 = scmp.ne.s32.totalorder %s61, %s62
      %p73 = scmp.eq.s32.totalorder %s27, 0
      %p74 = por %p72, %p73
      %p75 = scmp.ne.s32.totalorder %s61, %s62
      %p76 = scmp.eq.s32.totalorder %s28, 1
      %p77 = por %p75, %p76
      %p79 = scmp.ne.s32.totalorder %s62, %s78
      %p80 = scmp.eq.s32.totalorder %s28, 0
      %p81 = por %p79, %p80
      %s82 = ssub.s32 %s22, %s29
      %p83 = scmp.eq.s32.totalorder %s82, 0
      %s85 = sadd.s32 %s84, 1
      %s86 = scalar_select %p83, %s84, %s85
      %p89 = pneg %p83
      %p90 = scmp.eq.s32.totalorder %s22, 1
      %p91 = por %p89, %p90
      %p92 = scmp.ne.s32.totalorder %s84, %s87
      %p93 = scmp.eq.s32.totalorder %s22, 0
      %p94 = por %p92, %p93
      %p95 = scmp.ne.s32.totalorder %s84, %s87
      %p96 = scmp.eq.s32.totalorder %s27, 1
      %p97 = por %p95, %p96
      %p98 = scmp.ne.s32.totalorder %s87, %s88
      %p99 = scmp.eq.s32.totalorder %s27, 0
      %p100 = por %p98, %p99
      %p101 = scmp.ne.s32.totalorder %s87, %s88
      %p102 = scmp.eq.s32.totalorder %s28, 1
      %p103 = por %p101, %p102
      %p105 = scmp.ne.s32.totalorder %s88, %s104
      %p106 = scmp.eq.s32.totalorder %s28, 0
      %p107 = por %p105, %p106
      %s108 = ssub.s32 %s22, %s29
      %p109 = scmp.eq.s32.totalorder %s108, 0
      %s111 = sadd.s32 %s110, 1
      %s112 = scalar_select %p109, %s110, %s111
      %p115 = pneg %p109
      %p116 = scmp.eq.s32.totalorder %s22, 1
      %p117 = por %p115, %p116
      %p118 = scmp.ne.s32.totalorder %s110, %s113
      %p119 = scmp.eq.s32.totalorder %s22, 0
      %p120 = por %p118, %p119
      %p121 = scmp.ne.s32.totalorder %s110, %s113
      %p122 = scmp.eq.s32.totalorder %s27, 1
      %p123 = por %p121, %p122
      %p124 = scmp.ne.s32.totalorder %s113, %s114
      %p125 = scmp.eq.s32.totalorder %s27, 0
      %p126 = por %p124, %p125
      %p127 = scmp.ne.s32.totalorder %s113, %s114
      %p128 = scmp.eq.s32.totalorder %s28, 1
      %p129 = por %p127, %p128
      %p131 = scmp.ne.s32.totalorder %s114, %s130
      %p132 = scmp.eq.s32.totalorder %s28, 0
      %p133 = por %p131, %p132
      %s135 = sadd.s32 %s134, 1
      %p138 = scmp.eq.s32.totalorder %s22, 1
      %p139 = scmp.ne.s32.totalorder %s134, %s136
      %p140 = scmp.eq.s32.totalorder %s22, 0
      %p141 = por %p139, %p140
      %p142 = scmp.ne.s32.totalorder %s134, %s136
      %p143 = scmp.eq.s32.totalorder %s27, 1
      %p144 = por %p142, %p143
      %p145 = scmp.ne.s32.totalorder %s136, %s137
      %p146 = scmp.eq.s32.totalorder %s27, 0
      %p147 = por %p145, %p146
      %p148 = scmp.ne.s32.totalorder %s136, %s137
      %p149 = scmp.eq.s32.totalorder %s28, 1
      %p150 = por %p148, %p149
      %p152 = scmp.ne.s32.totalorder %s137, %s151
      %p153 = scmp.eq.s32.totalorder %s28, 0
      %p154 = por %p152, %p153
      %s156 = sadd.s32 %s155, 1
      %p159 = scmp.eq.s32.totalorder %s22, 1
      %p160 = scmp.ne.s32.totalorder %s155, %s157
      %p161 = scmp.eq.s32.totalorder %s22, 0
      %p162 = por %p160, %p161
      %p163 = scmp.ne.s32.totalorder %s155, %s157
      %p164 = scmp.eq.s32.totalorder %s27, 1
      %p165 = por %p163, %p164
      %p166 = scmp.ne.s32.totalorder %s157, %s158
      %p167 = scmp.eq.s32.totalorder %s27, 0
      %p168 = por %p166, %p167
      %p169 = scmp.ne.s32.totalorder %s157, %s158
      %p170 = scmp.eq.s32.totalorder %s28, 1
      %p171 = por %p169, %p170
      %p173 = scmp.ne.s32.totalorder %s158, %s172
      %p174 = scmp.eq.s32.totalorder %s28, 0
      %p175 = por %p173, %p174
      %s177 = sadd.s32 %s176, 1
      %p180 = scmp.eq.s32.totalorder %s22, 1
      %p181 = scmp.ne.s32.totalorder %s176, %s178
      %p182 = scmp.eq.s32.totalorder %s22, 0
      %p183 = por %p181, %p182
      %p184 = scmp.ne.s32.totalorder %s176, %s178
      %p185 = scmp.eq.s32.totalorder %s27, 1
      %p186 = por %p184, %p185
      %p187 = scmp.ne.s32.totalorder %s178, %s179
      %p188 = scmp.eq.s32.totalorder %s27, 0
      %p189 = por %p187, %p188
      %p190 = scmp.ne.s32.totalorder %s178, %s179
      %p191 = scmp.eq.s32.totalorder %s28, 1
      %p192 = por %p190, %p191
      %p194 = scmp.ne.s32.totalorder %s179, %s193
      %p195 = scmp.eq.s32.totalorder %s28, 0
      %p196 = por %p194, %p195
      %s198 = sadd.s32 %s197, 1
      %p201 = scmp.eq.s32.totalorder %s22, 1
      %p202 = scmp.ne.s32.totalorder %s197, %s199
      %p203 = scmp.eq.s32.totalorder %s22, 0
      %p204 = por %p202, %p203
      %p205 = scmp.ne.s32.totalorder %s197, %s199
      %p206 = scmp.eq.s32.totalorder %s27, 1
      %p207 = por %p205, %p206
      %p208 = scmp.ne.s32.totalorder %s199, %s200
      %p209 = scmp.eq.s32.totalorder %s27, 0
      %p210 = por %p208, %p209
      %p211 = scmp.ne.s32.totalorder %s199, %s200
      %p212 = scmp.eq.s32.totalorder %s28, 1
      %p213 = por %p211, %p212
      %p215 = scmp.ne.s32.totalorder %s200, %s214
      %p216 = scmp.eq.s32.totalorder %s28, 0
      %p217 = por %p215, %p216
      %s219 = sadd.s32 %s218, 1
      %p222 = scmp.eq.s32.totalorder %s22, 1
      %p223 = scmp.ne.s32.totalorder %s218, %s220
      %p224 = scmp.eq.s32.totalorder %s22, 0
      %p225 = por %p223, %p224
      %p226 = scmp.ne.s32.totalorder %s218, %s220
      %p227 = scmp.eq.s32.totalorder %s27, 1
      %p228 = por %p226, %p227
      %p229 = scmp.ne.s32.totalorder %s220, %s221
      %p230 = scmp.eq.s32.totalorder %s27, 0
      %p231 = por %p229, %p230
      %p232 = scmp.ne.s32.totalorder %s220, %s221
      %p233 = scmp.eq.s32.totalorder %s28, 1
      %p234 = por %p232, %p233
      %p236 = scmp.ne.s32.totalorder %s221, %s235
      %p237 = scmp.eq.s32.totalorder %s28, 0
      %p238 = por %p236, %p237
      %s240 = sadd.s32 %s239, 1
      %p243 = scmp.eq.s32.totalorder %s22, 1
      %p244 = scmp.ne.s32.totalorder %s239, %s241
      %p245 = scmp.eq.s32.totalorder %s22, 0
      %p246 = por %p244, %p245
      %p247 = scmp.ne.s32.totalorder %s239, %s241
      %p248 = scmp.eq.s32.totalorder %s27, 1
      %p249 = por %p247, %p248
      %p250 = scmp.ne.s32.totalorder %s241, %s242
      %p251 = scmp.eq.s32.totalorder %s27, 0
      %p252 = por %p250, %p251
      %p253 = scmp.ne.s32.totalorder %s241, %s242
      %p254 = scmp.eq.s32.totalorder %s28, 1
      %p255 = por %p253, %p254
      %p257 = scmp.ne.s32.totalorder %s242, %s256
      %p258 = scmp.eq.s32.totalorder %s28, 0
      %p259 = por %p257, %p258
      %s261 = sadd.s32 %s260, 1
      %p264 = scmp.eq.s32.totalorder %s22, 1
      %p265 = scmp.ne.s32.totalorder %s260, %s262
      %p266 = scmp.eq.s32.totalorder %s22, 0
      %p267 = por %p265, %p266
      %p268 = scmp.ne.s32.totalorder %s260, %s262
      %p269 = scmp.eq.s32.totalorder %s27, 1
      %p270 = por %p268, %p269
      %p271 = scmp.ne.s32.totalorder %s262, %s263
      %p272 = scmp.eq.s32.totalorder %s27, 0
      %p273 = por %p271, %p272
      %p274 = scmp.ne.s32.totalorder %s262, %s263
      %p275 = scmp.eq.s32.totalorder %s28, 1
      %p276 = por %p274, %p275
      %p278 = scmp.ne.s32.totalorder %s263, %s277
      %p279 = scmp.eq.s32.totalorder %s28, 0
      %p280 = por %p278, %p279
      %s282 = sadd.s32 %s281, 1
      %p285 = scmp.eq.s32.totalorder %s22, 1
      %p286 = scmp.ne.s32.totalorder %s281, %s283
      %p287 = scmp.eq.s32.totalorder %s22, 0
      %p288 = por %p286, %p287
      %p289 = scmp.ne.s32.totalorder %s281, %s283
      %p290 = scmp.eq.s32.totalorder %s27, 1
      %p291 = por %p289, %p290
      %p292 = scmp.ne.s32.totalorder %s283, %s284
      %p293 = scmp.eq.s32.totalorder %s27, 0
      %p294 = por %p292, %p293
      %p295 = scmp.ne.s32.totalorder %s283, %s284
      %p296 = scmp.eq.s32.totalorder %s28, 1
      %p297 = por %p295, %p296
      %p299 = scmp.ne.s32.totalorder %s284, %s298
      %p300 = scmp.eq.s32.totalorder %s28, 0
      %p301 = por %p299, %p300
      %s302 = ssub.s32 %s22, %s29
      %p303 = scmp.eq.s32.totalorder %s302, 0
      %s305 = sadd.s32 %s304, 1
      %s306 = scalar_select %p303, %s304, %s305
      %p309 = pneg %p303
      %p310 = scmp.eq.s32.totalorder %s22, 1
      %p311 = por %p309, %p310
      %p312 = scmp.ne.s32.totalorder %s304, %s307
      %p313 = scmp.eq.s32.totalorder %s22, 0
      %p314 = por %p312, %p313
      %p315 = scmp.ne.s32.totalorder %s304, %s307
      %p316 = scmp.eq.s32.totalorder %s27, 1
      %p317 = por %p315, %p316
      %p318 = scmp.ne.s32.totalorder %s307, %s308
      %p319 = scmp.eq.s32.totalorder %s27, 0
      %p320 = por %p318, %p319
      %p321 = scmp.ne.s32.totalorder %s307, %s308
      %p322 = scmp.eq.s32.totalorder %s28, 1
      %p323 = por %p321, %p322
      %p325 = scmp.ne.s32.totalorder %s308, %s324
      %p326 = scmp.eq.s32.totalorder %s28, 0
      %p327 = por %p325, %p326
      %p328 = scmp.le.s32.totalorder 1, %s22
      %p329 = scmp.lt.s32.totalorder %s22, 3
      %p330 = pnand %p328, %p329
      %p331 = pneg %p330
      // Predicated region
      $region9: #{gpt_visual_dialog_decoder_forward.1} parent=5 // pred_check
        _
      $region10: #{gpt_visual_dialog_decoder_forward.1} parent=5 // pred_check_branch
        %333 = sbr.rel (%p330) target = $region12
      $region11: #{gpt_visual_dialog_decoder_forward.1} parent=5 // pred_region
        %s334 = ssub.s32 %s22, 1
        // Predicated region
        $region13: #{gpt_visual_dialog_decoder_forward.1} parent=11 // pred_check
          %p335 = pneg %p147
        $region14: #{gpt_visual_dialog_decoder_forward.1} parent=11 // pred_check_branch
          %337 = sbr.rel (%p335) target = $region16
        $region15: #{gpt_visual_dialog_decoder_forward.1} parent=11 // pred_region
          _
        $region16: #{gpt_visual_dialog_decoder_forward.1} parent=11 // pred_fallthru
          _
        // Predicated region
        $region17: #{gpt_visual_dialog_decoder_forward.1} parent=11 // pred_check
          %p338 = pneg %p168
        $region18: #{gpt_visual_dialog_decoder_forward.1} parent=11 // pred_check_branch
          %340 = sbr.rel (%p338) target = $region20
        $region19: #{gpt_visual_dialog_decoder_forward.1} parent=11 // pred_region
          _
        $region20: #{gpt_visual_dialog_decoder_forward.1} parent=11 // pred_fallthru
          _
        // Predicated region
        $region21: #{gpt_visual_dialog_decoder_forward.1} parent=11 // pred_check
          %p341 = pneg %p189
        $region22: #{gpt_visual_dialog_decoder_forward.1} parent=11 // pred_check_branch
          %343 = sbr.rel (%p341) target = $region24
        $region23: #{gpt_visual_dialog_decoder_forward.1} parent=11 // pred_region
          %s345 = ssub.s32 32, 32
          %346 = vsyncadd [#allocation5], %s345
          %s348 = sshll.u32 [#allocation4], 4
          %s349 = int_to_ptr.vmem [resolvable:$true] %s348
          %351 = dma.hbm_to_vmem [thread:$0]  %s6, 32, %s349, [#allocation5]
        $region24: #{gpt_visual_dialog_decoder_forward.1} parent=11 // pred_fallthru
          _
        // Predicated region
        $region25: #{gpt_visual_dialog_decoder_forward.1} parent=11 // pred_check
          %p352 = pneg %p210
        $region26: #{gpt_visual_dialog_decoder_forward.1} parent=11 // pred_check_branch
          %354 = sbr.rel (%p352) target = $region28
        $region27: #{gpt_visual_dialog_decoder_forward.1} parent=11 // pred_region
          _
        $region28: #{gpt_visual_dialog_decoder_forward.1} parent=11 // pred_fallthru
          _
        // Predicated region
        $region29: #{gpt_visual_dialog_decoder_forward.1} parent=11 // pred_check
          %p355 = pneg %p231
        $region30: #{gpt_visual_dialog_decoder_forward.1} parent=11 // pred_check_branch
          %357 = sbr.rel (%p355) target = $region32
        $region31: #{gpt_visual_dialog_decoder_forward.1} parent=11 // pred_region
          _
        $region32: #{gpt_visual_dialog_decoder_forward.1} parent=11 // pred_fallthru
          _
        // Predicated region
        $region33: #{gpt_visual_dialog_decoder_forward.1} parent=11 // pred_check
          %p358 = pneg %p252
        $region34: #{gpt_visual_dialog_decoder_forward.1} parent=11 // pred_check_branch
          %360 = sbr.rel (%p358) target = $region36
        $region35: #{gpt_visual_dialog_decoder_forward.1} parent=11 // pred_region
          _
        $region36: #{gpt_visual_dialog_decoder_forward.1} parent=11 // pred_fallthru
          _
        // Predicated region
        $region37: #{gpt_visual_dialog_decoder_forward.1} parent=11 // pred_check
          %p361 = pneg %p273
        $region38: #{gpt_visual_dialog_decoder_forward.1} parent=11 // pred_check_branch
          %363 = sbr.rel (%p361) target = $region40
        $region39: #{gpt_visual_dialog_decoder_forward.1} parent=11 // pred_region
          %s365 = ssub.s32 32, 32
          %366 = vsyncadd [#allocation5], %s365
          %s368 = sshll.u32 [#allocation6], 4
          %s369 = int_to_ptr.vmem [resolvable:$true] %s368
          %371 = dma.hbm_to_vmem [thread:$0]  %s10, 32, %s369, [#allocation5]
        $region40: #{gpt_visual_dialog_decoder_forward.1} parent=11 // pred_fallthru
          _
        // Predicated region
        $region41: #{gpt_visual_dialog_decoder_forward.1} parent=11 // pred_check
          %p372 = pneg %p294
        $region42: #{gpt_visual_dialog_decoder_forward.1} parent=11 // pred_check_branch
          %374 = sbr.rel (%p372) target = $region44
        $region43: #{gpt_visual_dialog_decoder_forward.1} parent=11 // pred_region
          _
        $region44: #{gpt_visual_dialog_decoder_forward.1} parent=11 // pred_fallthru
          _
      $region12: #{gpt_visual_dialog_decoder_forward.1} parent=5 // pred_fallthru
        _
      %p375 = scmp.lt.s32.totalorder %s22, 2
      // Predicated region
      $region45: #{gpt_visual_dialog_decoder_forward.1} parent=5 // pred_check
        %p376 = pneg %p375
      $region46: #{gpt_visual_dialog_decoder_forward.1} parent=5 // pred_check_branch
        %378 = sbr.rel (%p376) target = $region48
      $region47: #{gpt_visual_dialog_decoder_forward.1} parent=5 // pred_region
        // Predicated region
        $region49: #{gpt_visual_dialog_decoder_forward.1} parent=47 // pred_check
          %p379 = pneg %p42
        $region50: #{gpt_visual_dialog_decoder_forward.1} parent=47 // pred_check_branch
          %381 = sbr.rel (%p379) target = $region52
        $region51: #{gpt_visual_dialog_decoder_forward.1} parent=47 // pred_region
          %p382 = scmp.lt.s32.totalorder %s22, 1
          %s383 = scalar_select %p382, %s22, 1
          %s384 = smul.addr %s383, 8
          %s385 = scalar_lea.vmem %s0, %s384
        $region52: #{gpt_visual_dialog_decoder_forward.1} parent=47 // pred_fallthru
          _
        // Predicated region
        $region53: #{gpt_visual_dialog_decoder_forward.1} parent=47 // pred_check
          %p386 = pneg %p68
        $region54: #{gpt_visual_dialog_decoder_forward.1} parent=47 // pred_check_branch
          %388 = sbr.rel (%p386) target = $region56
        $region55: #{gpt_visual_dialog_decoder_forward.1} parent=47 // pred_region
          %s389 = sand.u32 %s58, 1
          %s390 = scalar_lea.sflag [#allocation3], %s389
          %s391 = sand.u32 %s58, 1
          %s392 = scalar_lea.vmem [#allocation2], %s391
          %s394 = ssub.s32 16, 16
          %395 = vsyncadd %s390, %s394
          %s396 = smul.addr %s22, 16
          %s397 = scalar_lea.hbm %s1, %s396
          %s399 = sshll.u32 %s392, 4
          %s400 = int_to_ptr.vmem [resolvable:$true] %s399
          %402 = dma.hbm_to_vmem [thread:$0]  %s397, 16, %s400, %s390
        $region56: #{gpt_visual_dialog_decoder_forward.1} parent=47 // pred_fallthru
          _
        // Predicated region
        $region57: #{gpt_visual_dialog_decoder_forward.1} parent=47 // pred_check
          %p403 = pneg %p94
        $region58: #{gpt_visual_dialog_decoder_forward.1} parent=47 // pred_check_branch
          %405 = sbr.rel (%p403) target = $region60
        $region59: #{gpt_visual_dialog_decoder_forward.1} parent=47 // pred_region
          %p406 = scmp.lt.s32.totalorder %s22, 1
          %s407 = scalar_select %p406, %s22, 1
          %s408 = scalar_lea.vmem %s2, %s407
        $region60: #{gpt_visual_dialog_decoder_forward.1} parent=47 // pred_fallthru
          _
        // Predicated region
        $region61: #{gpt_visual_dialog_decoder_forward.1} parent=47 // pred_check
          %p409 = pneg %p120
        $region62: #{gpt_visual_dialog_decoder_forward.1} parent=47 // pred_check_branch
          %411 = sbr.rel (%p409) target = $region64
        $region63: #{gpt_visual_dialog_decoder_forward.1} parent=47 // pred_region
          %p412 = scmp.lt.s32.totalorder %s22, 1
          %s413 = scalar_select %p412, %s22, 1
          %s414 = smul.addr %s413, 4
          %s415 = scalar_lea.vmem %s3, %s414
        $region64: #{gpt_visual_dialog_decoder_forward.1} parent=47 // pred_fallthru
          _
      $region48: #{gpt_visual_dialog_decoder_forward.1} parent=5 // pred_fallthru
        _
      %p416 = scmp.le.s32.totalorder 1, %s22
      %p417 = scmp.lt.s32.totalorder %s22, 3
      %p418 = pnand %p416, %p417
      %p419 = pneg %p418
      // Predicated region
      $region65: #{gpt_visual_dialog_decoder_forward.1} parent=5 // pred_check
        _
      $region66: #{gpt_visual_dialog_decoder_forward.1} parent=5 // pred_check_branch
        %421 = sbr.rel (%p418) target = $region68
      $region67: #{gpt_visual_dialog_decoder_forward.1} parent=5 // pred_region
        %s422 = ssub.s32 %s22, 1
        %s423 = sand.u32 %s61, 1
        %s424 = scalar_lea.sflag [#allocation3], %s423
        %s425 = sand.u32 %s61, 1
        %s426 = scalar_lea.vmem [#allocation2], %s425
        // Predicated region
        $region69: #{gpt_visual_dialog_decoder_forward.1} parent=67 // pred_check
          %p427 = pneg %p74
        $region70: #{gpt_visual_dialog_decoder_forward.1} parent=67 // pred_check_branch
          %429 = sbr.rel (%p427) target = $region72
        $region71: #{gpt_visual_dialog_decoder_forward.1} parent=67 // pred_region
          %430 = dma.done %s424, 16
        $region72: #{gpt_visual_dialog_decoder_forward.1} parent=67 // pred_fallthru
          _
        // Predicated region
        $region73: #{gpt_visual_dialog_decoder_forward.1} parent=67 // pred_check
          %p431 = pneg %p189
        $region74: #{gpt_visual_dialog_decoder_forward.1} parent=67 // pred_check_branch
          %433 = sbr.rel (%p431) target = $region76
        $region75: #{gpt_visual_dialog_decoder_forward.1} parent=67 // pred_region
          %434 = dma.done [#allocation5], 32
        $region76: #{gpt_visual_dialog_decoder_forward.1} parent=67 // pred_fallthru
          _
        // Predicated region
        $region77: #{gpt_visual_dialog_decoder_forward.1} parent=67 // pred_check
          %p435 = pneg %p273
        $region78: #{gpt_visual_dialog_decoder_forward.1} parent=67 // pred_check_branch
          %437 = sbr.rel (%p435) target = $region80
        $region79: #{gpt_visual_dialog_decoder_forward.1} parent=67 // pred_region
          %438 = dma.done [#allocation5], 32
        $region80: #{gpt_visual_dialog_decoder_forward.1} parent=67 // pred_fallthru
          _
        %p439 = scmp.lt.s32.totalorder %s27, 1
        %s440 = scalar_select %p439, %s27, 1
        %s441 = smul.addr %s440, 8
        %s442 = scalar_lea.vmem %s0, %s441
        %p443 = pneg %p48
        %p444 = pneg %p45
        %s445 = sand.u32 %s61, 1
        %s446 = scalar_lea.sflag [#allocation3], %s445
        %s447 = sand.u32 %s61, 1
        %s448 = scalar_lea.vmem [#allocation2], %s447
        %p449 = pneg %p74
        %p450 = pneg %p71
        %p451 = scmp.lt.s32.totalorder %s27, 1
        %s452 = scalar_select %p451, %s27, 1
        %s453 = scalar_lea.vmem %s2, %s452
        %p454 = pneg %p100
        %p455 = pneg %p97
        %p456 = scmp.lt.s32.totalorder %s27, 1
        %s457 = scalar_select %p456, %s27, 1
        %s458 = smul.addr %s457, 4
        %s459 = scalar_lea.vmem %s3, %s458
        %p460 = pneg %p126
        %p461 = pneg %p123
        %p462 = pneg %p147
        %p463 = pneg %p144
        %p464 = pneg %p168
        %p465 = pneg %p165
        %p466 = pneg %p189
        %p467 = pneg %p186
        %p468 = pneg %p210
        %p469 = pneg %p207
        %p470 = pneg %p231
        %p471 = pneg %p228
        %p472 = pneg %p252
        %p473 = pneg %p249
        %p474 = pneg %p273
        %p475 = pneg %p270
        %p476 = pneg %p294
        %p477 = pneg %p291
        %p478 = pneg %p320
        %p479 = pneg %p317
        %p480 = scmp.lt.s32.totalorder %s27, 1
        %s481 = scalar_select %p480, %s27, 1
        %s482 = smul.addr %s481, 2
        %s483 = smul.addr %s482, 8
        %s484 = scalar_lea.vmem %s12, %s483
        %p485 = scmp.lt.s32.totalorder %s27, 1
        %s486 = scalar_select %p485, %s27, 1
        %s487 = smul.addr %s486, 8
        %s488 = scalar_lea.vmem %s0, %s487
        %p489 = scmp.lt.s32.totalorder %s27, 1
        %s490 = scalar_select %p489, %s27, 1
        %s491 = scalar_lea.vmem %s2, %s490
        %p492 = scmp.lt.s32.totalorder %s27, 1
        %s493 = scalar_select %p492, %s27, 1
        %s494 = smul.addr %s493, 4
        %s495 = scalar_lea.vmem %s3, %s494
        %p496 = scmp.lt.s32.totalorder %s27, 1
        %s497 = scalar_select %p496, %s27, 1
        %s498 = smul.addr %s497, 2
        %s499 = smul.addr %s498, 8
        %s500 = scalar_lea.vmem %s12, %s499
        %v502 = vld [vmem:[%s488] sm:$0xff]
        %v503 = vld [vmem:[%s426] sm:$0x1]
        %v504 = vld [vmem:[%s491] sm:$0x1]
        %v505 = vld [vmem:[%s495] sm:$0xf]
        %vm506 = vcmp.eq.s32.totalorder %v502, 127
        %v507 = vsel %vm506, 0, %v502
        %v508 = vlaneseq
        %v509 = vand.u32 %v508, 127
        %510 = vset.pattern.permute.xlu0 0
        %511 = vperm.xlu0 %510, %v507
        %v512 = vpop.permute.xlu0 %511
        %vm513 = vcmp.eq.s32.totalorder %v509, %v512
        %v514 = vsel %vm513, 1.0, 0.0
        %v515 = vpack.c.bf16 %v514, %v514
        %v516 = vld [vmem:[%s4] sm:$0xf]
        %v517 = vld [vmem:[%s4 + $0x4] sm:$0xf]
        %v518 = vld [vmem:[%s4 + $0x8] sm:$0xf]
        %v519 = vld [vmem:[%s4 + $0xc] sm:$0xf]
        %v520 = vld [vmem:[%s4 + $0x10] sm:$0xf]
        %v521 = vld [vmem:[%s4 + $0x14] sm:$0xf]
        %v522 = vld [vmem:[%s4 + $0x18] sm:$0xf]
        %v523 = vld [vmem:[%s4 + $0x1c] sm:$0xf]
        %v524 = vld [vmem:[%s4 + $0x20] sm:$0xf]
        %v525 = vld [vmem:[%s4 + $0x24] sm:$0xf]
        %v526 = vld [vmem:[%s4 + $0x28] sm:$0xf]
        %v527 = vld [vmem:[%s4 + $0x2c] sm:$0xf]
        %v528 = vld [vmem:[%s4 + $0x30] sm:$0xf]
        %v529 = vld [vmem:[%s4 + $0x34] sm:$0xf]
        %v530 = vld [vmem:[%s4 + $0x38] sm:$0xf]
        %v531 = vld [vmem:[%s4 + $0x3c] sm:$0xf]
        %v532 = vld [vmem:[%s5] sm:$0xff]
        %v549 = vunpack.c.l.b16 %v516
        %v550 = vunpack.c.l.b16 %v517
        %v551 = vunpack.c.l.b16 %v518
        %v552 = vunpack.c.l.b16 %v519
        %v553 = vunpack.c.l.b16 %v520
        %v554 = vunpack.c.l.b16 %v521
        %v555 = vunpack.c.l.b16 %v522
        %v556 = vunpack.c.l.b16 %v523
        %v557 = vunpack.c.l.b16 %v524
        %v558 = vunpack.c.l.b16 %v525
        %v559 = vunpack.c.l.b16 %v526
        %v560 = vunpack.c.l.b16 %v527
        %v561 = vunpack.c.l.b16 %v528
        %v562 = vunpack.c.l.b16 %v529
        %v563 = vunpack.c.l.b16 %v530
        %v564 = vunpack.c.l.b16 %v531
        %v565 = vpack.c.b16 %v550, %v549
        %v566 = vpack.c.b16 %v552, %v551
        %v567 = vpack.c.b16 %v554, %v553
        %v568 = vpack.c.b16 %v556, %v555
        %v569 = vpack.c.b16 %v558, %v557
        %v570 = vpack.c.b16 %v560, %v559
        %v571 = vpack.c.b16 %v562, %v561
        %v572 = vpack.c.b16 %v564, %v563
        %581 = vmatprep.subr.bf16.mxu0 0
        %582 = vmatpush1.bf16.msra.mxu0 %v572
        %583 = vmatprep.subr.bf16.mxu0 0
        %584 = vmatpush1.bf16.msra.mxu0 %v571
        %585 = vmatprep.subr.bf16.mxu0 0
        %586 = vmatpush1.bf16.msra.mxu0 %v570
        %587 = vmatprep.subr.bf16.mxu0 0
        %588 = vmatpush1.bf16.msra.mxu0 %v569
        %589 = vmatprep.subr.bf16.mxu0 0
        %590 = vmatpush1.bf16.msra.mxu0 %v568
        %591 = vmatprep.subr.bf16.mxu0 0
        %592 = vmatpush1.bf16.msra.mxu0 %v567
        %593 = vmatprep.subr.bf16.mxu0 0
        %594 = vmatpush1.bf16.msra.mxu0 %v566
        %595 = vmatprep.subr.bf16.mxu0 0
        %596 = vmatpush1.bf16.msra.mxu0 %v565
        %597 = vmatprep.subr.bf16.mxu0 0
        %598 = vmatpush2.bf16.msra.mxu0 0
        %599 = vmatprep.subr.bf16.mxu0 0
        %600 = vmatpush2.bf16.msra.mxu0 0
        %601 = vmatprep.subr.bf16.mxu0 0
        %602 = vmatpush2.bf16.msra.mxu0 0
        %603 = vmatprep.subr.bf16.mxu0 0
        %604 = vmatpush2.bf16.msra.mxu0 0
        %605 = vmatprep.subr.bf16.mxu0 0
        %606 = vmatpush2.bf16.msra.mxu0 0
        %607 = vmatprep.subr.bf16.mxu0 0
        %608 = vmatpush2.bf16.msra.mxu0 0
        %609 = vmatprep.subr.bf16.mxu0 0
        %610 = vmatpush2.bf16.msra.mxu0 0
        %611 = vmatprep.subr.bf16.mxu0 0
        %612 = vmatpush2.bf16.msra.mxu0 0
        %613 = vmatprep.mubr.bf16.mxu0 0
        %614 = vmatmul.mubr.bf16.gmra.mxu0 %v515
        %v615 = vpop.f32.mrf.mxu0
        %v616 = vadd.f32 %v532, %v615
        %v617 = vpop.f32.mrf.mxu0
        %v618 = vpop.f32.mrf.mxu0
        %v619 = vpop.f32.mrf.mxu0
        %620 = vdwg.mxu0
        %v621 = vlaneseq
        %v622 = vshrl.u32 %v621, 7
        %vm623 = vcmp.ge.s32.totalorder %v622, %v509
        %vm624 = vcmp.gt.s32.totalorder %v503, 0
        %v625 = vsel %vm624, 1, 0
        %v626 = vlaneseq
        %v627 = vshrl.u32 %v626, 7
        %v628 = vsub.s32 0, %v627
        %v629 = vrot.slane %v625, %v628
        %vm630 = vcmp.eq.s32.totalorder %v629, 1
        %vm631 = vmand %vm623, %vm630
        %v632 = vsel %vm631, 0.0, -1e+09
        %vm633 = vcmp.gt.s32.totalorder %v504, 0
        %v634 = vsel %vm633, 0.0, -1e+09
        %v635 = vld [vmem:[%s8] sm:$0x1]
        %v636 = vld [vmem:[%s8 + $0x1] sm:$0x1]
        %vm637 = vcmask 261120
        %v638 = vsel %vm637, %v616, 0.0
        %639 = vadd.xlane.f32.xlu0 %v638
        %v640 = vpop.xlane.xlu0 %639
        %v641 = vrcp.pop 32.0
        %v642 = vmul.f32 %v640, %v641
        %v643 = vsub.f32 %v616, %v642
        %v644 = vmul.f32 %v643, %v643
        %v645 = vsel %vm637, %v644, 0.0
        %646 = vadd.xlane.f32.xlu0 %v645
        %v647 = vpop.xlane.xlu0 %646
        %v648 = vmul.f32 %v647, %v641
        %v649 = vadd.f32 %v648, 1e-05
        %v650 = vrsqrt.pop %v649
        %v651 = vmul.f32 %v643, %v650
        %v652 = vlaneseq
        %v653 = vshrl.u32 %v652, 7
        %v654 = vsub.s32 0, %v653
        %v655 = vrot.slane %v635, %v654
        %v656 = vmul.f32 %v651, %v655
        %v657 = vlaneseq
        %v658 = vshrl.u32 %v657, 7
        %v659 = vsub.s32 0, %v658
        %v660 = vrot.slane %v636, %v659
        %v661 = vadd.f32 %v656, %v660
        %v662 = vpack.c.bf16 %v661, %v661
        %v663 = vld [vmem:[%s7] sm:$0xf]
        %v664 = vld [vmem:[%s7 + $0x4] sm:$0xf]
        %v665 = vld [vmem:[%s7 + $0x8] sm:$0xf]
        %v666 = vld [vmem:[%s7 + $0xc] sm:$0xf]
        %v667 = vld [vmem:[%s8 + $0x2] sm:$0x1]
        %v668 = vlaneseq
        %v669 = vshrl.u32 %v668, 7
        %v670 = vsub.s32 0, %v669
        %v671 = vrot.slane %v667, %v670
        %v676 = vunpack.c.l.b16 %v663
        %v677 = vunpack.c.l.b16 %v664
        %v678 = vunpack.c.l.b16 %v665
        %v679 = vunpack.c.l.b16 %v666
        %v680 = vpack.c.b16 %v677, %v676
        %v681 = vpack.c.b16 %v679, %v678
        %v685 = vsel %vm637, %v662, 0
        %687 = vmatprep.subr.bf16.mxu0 0
        %688 = vmatpush1.bf16.msra.mxu0 0
        %689 = vmatprep.subr.bf16.mxu0 0
        %690 = vmatpush1.bf16.msra.mxu0 0
        %691 = vmatprep.subr.bf16.mxu0 0
        %692 = vmatpush1.bf16.msra.mxu0 0
        %693 = vmatprep.subr.bf16.mxu0 0
        %694 = vmatpush1.bf16.msra.mxu0 0
        %695 = vmatprep.subr.bf16.mxu0 0
        %696 = vmatpush1.bf16.msra.mxu0 0
        %697 = vmatprep.subr.bf16.mxu0 0
        %698 = vmatpush1.bf16.msra.mxu0 0
        %699 = vmatprep.subr.bf16.mxu0 0
        %700 = vmatpush1.bf16.msra.mxu0 %v681
        %701 = vmatprep.subr.bf16.mxu0 0
        %702 = vmatpush1.bf16.msra.mxu0 %v680
        %703 = vmatprep.subr.bf16.mxu0 0
        %704 = vmatpush2.bf16.msra.mxu0 0
        %705 = vmatprep.subr.bf16.mxu0 0
        %706 = vmatpush2.bf16.msra.mxu0 0
        %707 = vmatprep.subr.bf16.mxu0 0
        %708 = vmatpush2.bf16.msra.mxu0 0
        %709 = vmatprep.subr.bf16.mxu0 0
        %710 = vmatpush2.bf16.msra.mxu0 0
        %711 = vmatprep.subr.bf16.mxu0 0
        %712 = vmatpush2.bf16.msra.mxu0 0
        %713 = vmatprep.subr.bf16.mxu0 0
        %714 = vmatpush2.bf16.msra.mxu0 0
        %715 = vmatprep.subr.bf16.mxu0 0
        %716 = vmatpush2.bf16.msra.mxu0 0
        %717 = vmatprep.subr.bf16.mxu0 0
        %718 = vmatpush2.bf16.msra.mxu0 0
        %719 = vmatprep.mubr.bf16.mxu0 0
        %720 = vmatmul.mubr.bf16.gmra.mxu0 %v685
        %v721 = vpop.f32.mrf.mxu0
        %v722 = vadd.f32 %v671, %v721
        %v723 = vpop.f32.mrf.mxu0
        %v724 = vpop.f32.mrf.mxu0
        %v725 = vpop.f32.mrf.mxu0
        %726 = vdwg.mxu0
        %s727 = scalar_lea.vmem %s7, 16
        %v728 = vld [vmem:[%s727] sm:$0xf]
        %v729 = vld [vmem:[%s727 + $0x4] sm:$0xf]
        %v730 = vld [vmem:[%s727 + $0x8] sm:$0xf]
        %v731 = vld [vmem:[%s727 + $0xc] sm:$0xf]
        %v732 = vld [vmem:[%s8 + $0x3] sm:$0x1]
        %v733 = vlaneseq
        %v734 = vshrl.u32 %v733, 7
        %v735 = vsub.s32 0, %v734
        %v736 = vrot.slane %v732, %v735
        %v741 = vunpack.c.l.b16 %v728
        %v742 = vunpack.c.l.b16 %v729
        %v743 = vunpack.c.l.b16 %v730
        %v744 = vunpack.c.l.b16 %v731
        %v745 = vpack.c.b16 %v742, %v741
        %v746 = vpack.c.b16 %v744, %v743
        %749 = vmatprep.subr.bf16.mxu0 0
        %750 = vmatpush1.bf16.msra.mxu0 0
        %751 = vmatprep.subr.bf16.mxu0 0
        %752 = vmatpush1.bf16.msra.mxu0 0
        %753 = vmatprep.subr.bf16.mxu0 0
        %754 = vmatpush1.bf16.msra.mxu0 0
        %755 = vmatprep.subr.bf16.mxu0 0
        %756 = vmatpush1.bf16.msra.mxu0 0
        %757 = vmatprep.subr.bf16.mxu0 0
        %758 = vmatpush1.bf16.msra.mxu0 0
        %759 = vmatprep.subr.bf16.mxu0 0
        %760 = vmatpush1.bf16.msra.mxu0 0
        %761 = vmatprep.subr.bf16.mxu0 0
        %762 = vmatpush1.bf16.msra.mxu0 %v746
        %763 = vmatprep.subr.bf16.mxu0 0
        %764 = vmatpush1.bf16.msra.mxu0 %v745
        %765 = vmatprep.subr.bf16.mxu0 0
        %766 = vmatpush2.bf16.msra.mxu0 0
        %767 = vmatprep.subr.bf16.mxu0 0
        %768 = vmatpush2.bf16.msra.mxu0 0
        %769 = vmatprep.subr.bf16.mxu0 0
        %770 = vmatpush2.bf16.msra.mxu0 0
        %771 = vmatprep.subr.bf16.mxu0 0
        %772 = vmatpush2.bf16.msra.mxu0 0
        %773 = vmatprep.subr.bf16.mxu0 0
        %774 = vmatpush2.bf16.msra.mxu0 0
        %775 = vmatprep.subr.bf16.mxu0 0
        %776 = vmatpush2.bf16.msra.mxu0 0
        %777 = vmatprep.subr.bf16.mxu0 0
        %778 = vmatpush2.bf16.msra.mxu0 0
        %779 = vmatprep.subr.bf16.mxu0 0
        %780 = vmatpush2.bf16.msra.mxu0 0
        %781 = vmatprep.mubr.bf16.mxu0 0
        %782 = vmatmul.mubr.bf16.gmra.mxu0 %v685
        %v783 = vpop.f32.mrf.mxu0
        %v784 = vadd.f32 %v736, %v783
        %v785 = vpop.f32.mrf.mxu0
        %v786 = vpop.f32.mrf.mxu0
        %v787 = vpop.f32.mrf.mxu0
        %788 = vdwg.mxu0
        %s789 = scalar_lea.vmem %s7, 32
        %v790 = vld [vmem:[%s789] sm:$0xf]
        %v791 = vld [vmem:[%s789 + $0x4] sm:$0xf]
        %v792 = vld [vmem:[%s789 + $0x8] sm:$0xf]
        %v793 = vld [vmem:[%s789 + $0xc] sm:$0xf]
        %v794 = vld [vmem:[%s8 + $0x4] sm:$0x1]
        %v795 = vlaneseq
        %v796 = vshrl.u32 %v795, 7
        %v797 = vsub.s32 0, %v796
        %v798 = vrot.slane %v794, %v797
        %v803 = vunpack.c.l.b16 %v790
        %v804 = vunpack.c.l.b16 %v791
        %v805 = vunpack.c.l.b16 %v792
        %v806 = vunpack.c.l.b16 %v793
        %v807 = vpack.c.b16 %v804, %v803
        %v808 = vpack.c.b16 %v806, %v805
        %811 = vmatprep.subr.bf16.mxu0 0
        %812 = vmatpush1.bf16.msra.mxu0 0
        %813 = vmatprep.subr.bf16.mxu0 0
        %814 = vmatpush1.bf16.msra.mxu0 0
        %815 = vmatprep.subr.bf16.mxu0 0
        %816 = vmatpush1.bf16.msra.mxu0 0
        %817 = vmatprep.subr.bf16.mxu0 0
        %818 = vmatpush1.bf16.msra.mxu0 0
        %819 = vmatprep.subr.bf16.mxu0 0
        %820 = vmatpush1.bf16.msra.mxu0 0
        %821 = vmatprep.subr.bf16.mxu0 0
        %822 = vmatpush1.bf16.msra.mxu0 0
        %823 = vmatprep.subr.bf16.mxu0 0
        %824 = vmatpush1.bf16.msra.mxu0 %v808
        %825 = vmatprep.subr.bf16.mxu0 0
        %826 = vmatpush1.bf16.msra.mxu0 %v807
        %827 = vmatprep.subr.bf16.mxu0 0
        %828 = vmatpush2.bf16.msra.mxu0 0
        %829 = vmatprep.subr.bf16.mxu0 0
        %830 = vmatpush2.bf16.msra.mxu0 0
        %831 = vmatprep.subr.bf16.mxu0 0
        %832 = vmatpush2.bf16.msra.mxu0 0
        %833 = vmatprep.subr.bf16.mxu0 0
        %834 = vmatpush2.bf16.msra.mxu0 0
        %835 = vmatprep.subr.bf16.mxu0 0
        %836 = vmatpush2.bf16.msra.mxu0 0
        %837 = vmatprep.subr.bf16.mxu0 0
        %838 = vmatpush2.bf16.msra.mxu0 0
        %839 = vmatprep.subr.bf16.mxu0 0
        %840 = vmatpush2.bf16.msra.mxu0 0
        %841 = vmatprep.subr.bf16.mxu0 0
        %842 = vmatpush2.bf16.msra.mxu0 0
        %843 = vmatprep.mubr.bf16.mxu0 0
        %844 = vmatmul.mubr.bf16.gmra.mxu0 %v685
        %v845 = vpop.f32.mrf.mxu0
        %v846 = vadd.f32 %v798, %v845
        %v847 = vpop.f32.mrf.mxu0
        %v848 = vpop.f32.mrf.mxu0
        %v849 = vpop.f32.mrf.mxu0
        %850 = vdwg.mxu0
        %v851 = vpack.c.bf16 %v722, %v722
        %v852 = vpack.c.bf16 %v784, %v784
        %v853 = vpack.c.bf16 %v846, %v846
        %vm854 = vcmask 64512
        %v856 = vsel %vm854, %v851, 0
        %v859 = vsel %vm854, %v852, 0
        %861 = vmatprep.subr.bf16.mxu0 0
        %862 = vmatpush1.bf16.xpose.msra.mxu0 0
        %863 = vmatprep.subr.bf16.mxu0 0
        %864 = vmatpush1.bf16.xpose.msra.mxu0 0
        %865 = vmatprep.subr.bf16.mxu0 0
        %866 = vmatpush1.bf16.xpose.msra.mxu0 0
        %867 = vmatprep.subr.bf16.mxu0 0
        %868 = vmatpush1.bf16.xpose.msra.mxu0 0
        %869 = vmatprep.subr.bf16.mxu0 0
        %870 = vmatpush1.bf16.xpose.msra.mxu0 0
        %871 = vmatprep.subr.bf16.mxu0 0
        %872 = vmatpush1.bf16.xpose.msra.mxu0 0
        %873 = vmatprep.subr.bf16.mxu0 0
        %874 = vmatpush1.bf16.xpose.msra.mxu0 0
        %875 = vmatprep.subr.bf16.mxu0 0
        %876 = vmatpush1.bf16.xpose.msra.mxu0 %v859
        %877 = vmatprep.subr.bf16.mxu0 0
        %878 = vmatpush2.bf16.xpose.msra.mxu0 0
        %879 = vmatprep.subr.bf16.mxu0 0
        %880 = vmatpush2.bf16.xpose.msra.mxu0 0
        %881 = vmatprep.subr.bf16.mxu0 0
        %882 = vmatpush2.bf16.xpose.msra.mxu0 0
        %883 = vmatprep.subr.bf16.mxu0 0
        %884 = vmatpush2.bf16.xpose.msra.mxu0 0
        %885 = vmatprep.subr.bf16.mxu0 0
        %886 = vmatpush2.bf16.xpose.msra.mxu0 0
        %887 = vmatprep.subr.bf16.mxu0 0
        %888 = vmatpush2.bf16.xpose.msra.mxu0 0
        %889 = vmatprep.subr.bf16.mxu0 0
        %890 = vmatpush2.bf16.xpose.msra.mxu0 0
        %891 = vmatprep.subr.bf16.mxu0 0
        %892 = vmatpush2.bf16.xpose.msra.mxu0 0
        %893 = vmatprep.mubr.bf16.mxu0 0
        %894 = vmatmul.mubr.bf16.gmra.mxu0 %v856
        %v895 = vpop.f32.mrf.mxu0
        %v896 = vadd.f32 0.0, %v895
        %v897 = vpop.f32.mrf.mxu0
        %v898 = vpop.f32.mrf.mxu0
        %v899 = vpop.f32.mrf.mxu0
        %900 = vdwg.mxu0
        %v901 = vmul.f32 %v896, 0.35355338
        %v902 = vadd.f32 %v901, %v632
        %v903 = vsel %vm854, %v902, -inf
        %904 = vmax.xlane.f32.xlu0 %v903
        %v905 = vpop.xlane.xlu0 %904
        %v906 = vsub.f32 %v902, %v905
        %v907 = vmul.f32 %v906, 1.442695
        %v908 = vpow.pop %v907
        %v909 = vsel %vm854, %v908, 0.0
        %910 = vadd.xlane.f32.xlu0 %v909
        %v911 = vpop.xlane.xlu0 %910
        %v912 = vrcp.pop %v911
        %v913 = vmul.f32 %v908, %v912
        %v914 = vpack.c.bf16 %v913, %v913
        %v916 = vsel %vm854, %v914, 0
        %vm918 = vcmask 1043456
        %v920 = vsel %vm918, %v853, 0
        %922 = vmatprep.subr.bf16.mxu0 0
        %923 = vmatpush1.bf16.msra.mxu0 0
        %924 = vmatprep.subr.bf16.mxu0 0
        %925 = vmatpush1.bf16.msra.mxu0 0
        %926 = vmatprep.subr.bf16.mxu0 0
        %927 = vmatpush1.bf16.msra.mxu0 0
        %928 = vmatprep.subr.bf16.mxu0 0
        %929 = vmatpush1.bf16.msra.mxu0 0
        %930 = vmatprep.subr.bf16.mxu0 0
        %931 = vmatpush1.bf16.msra.mxu0 0
        %932 = vmatprep.subr.bf16.mxu0 0
        %933 = vmatpush1.bf16.msra.mxu0 0
        %934 = vmatprep.subr.bf16.mxu0 0
        %935 = vmatpush1.bf16.msra.mxu0 0
        %936 = vmatprep.subr.bf16.mxu0 0
        %937 = vmatpush1.bf16.msra.mxu0 %v920
        %938 = vmatprep.subr.bf16.mxu0 0
        %939 = vmatpush2.bf16.msra.mxu0 0
        %940 = vmatprep.subr.bf16.mxu0 0
        %941 = vmatpush2.bf16.msra.mxu0 0
        %942 = vmatprep.subr.bf16.mxu0 0
        %943 = vmatpush2.bf16.msra.mxu0 0
        %944 = vmatprep.subr.bf16.mxu0 0
        %945 = vmatpush2.bf16.msra.mxu0 0
        %946 = vmatprep.subr.bf16.mxu0 0
        %947 = vmatpush2.bf16.msra.mxu0 0
        %948 = vmatprep.subr.bf16.mxu0 0
        %949 = vmatpush2.bf16.msra.mxu0 0
        %950 = vmatprep.subr.bf16.mxu0 0
        %951 = vmatpush2.bf16.msra.mxu0 0
        %952 = vmatprep.subr.bf16.mxu0 0
        %953 = vmatpush2.bf16.msra.mxu0 0
        %954 = vmatprep.mubr.bf16.mxu0 0
        %955 = vmatmul.mubr.bf16.gmra.mxu0 %v916
        %v956 = vpop.f32.mrf.mxu0
        %v957 = vadd.f32 0.0, %v956
        %v958 = vpop.f32.mrf.mxu0
        %v959 = vpop.f32.mrf.mxu0
        %v960 = vpop.f32.mrf.mxu0
        %961 = vdwg.mxu0
        %963 = vrot.lane.b32.xlu0 %v851, 120
        %v964 = vpop.permute.xlu0 %963
        %966 = vrot.lane.b32.xlu0 %v852, 120
        %v967 = vpop.permute.xlu0 %966
        %v969 = vsel %vm854, %v964, 0
        %v972 = vsel %vm854, %v967, 0
        %974 = vmatprep.subr.bf16.mxu0 0
        %975 = vmatpush1.bf16.xpose.msra.mxu0 0
        %976 = vmatprep.subr.bf16.mxu0 0
        %977 = vmatpush1.bf16.xpose.msra.mxu0 0
        %978 = vmatprep.subr.bf16.mxu0 0
        %979 = vmatpush1.bf16.xpose.msra.mxu0 0
        %980 = vmatprep.subr.bf16.mxu0 0
        %981 = vmatpush1.bf16.xpose.msra.mxu0 0
        %982 = vmatprep.subr.bf16.mxu0 0
        %983 = vmatpush1.bf16.xpose.msra.mxu0 0
        %984 = vmatprep.subr.bf16.mxu0 0
        %985 = vmatpush1.bf16.xpose.msra.mxu0 0
        %986 = vmatprep.subr.bf16.mxu0 0
        %987 = vmatpush1.bf16.xpose.msra.mxu0 0
        %988 = vmatprep.subr.bf16.mxu0 0
        %989 = vmatpush1.bf16.xpose.msra.mxu0 %v972
        %990 = vmatprep.subr.bf16.mxu0 0
        %991 = vmatpush2.bf16.xpose.msra.mxu0 0
        %992 = vmatprep.subr.bf16.mxu0 0
        %993 = vmatpush2.bf16.xpose.msra.mxu0 0
        %994 = vmatprep.subr.bf16.mxu0 0
        %995 = vmatpush2.bf16.xpose.msra.mxu0 0
        %996 = vmatprep.subr.bf16.mxu0 0
        %997 = vmatpush2.bf16.xpose.msra.mxu0 0
        %998 = vmatprep.subr.bf16.mxu0 0
        %999 = vmatpush2.bf16.xpose.msra.mxu0 0
        %1000 = vmatprep.subr.bf16.mxu0 0
        %1001 = vmatpush2.bf16.xpose.msra.mxu0 0
        %1002 = vmatprep.subr.bf16.mxu0 0
        %1003 = vmatpush2.bf16.xpose.msra.mxu0 0
        %1004 = vmatprep.subr.bf16.mxu0 0
        %1005 = vmatpush2.bf16.xpose.msra.mxu0 0
        %1006 = vmatprep.mubr.bf16.mxu0 0
        %1007 = vmatmul.mubr.bf16.gmra.mxu0 %v969
        %v1008 = vpop.f32.mrf.mxu0
        %v1009 = vadd.f32 0.0, %v1008
        %v1010 = vpop.f32.mrf.mxu0
        %v1011 = vpop.f32.mrf.mxu0
        %v1012 = vpop.f32.mrf.mxu0
        %1013 = vdwg.mxu0
        %v1014 = vmul.f32 %v1009, 0.35355338
        %v1015 = vadd.f32 %v1014, %v632
        %v1016 = vsel %vm854, %v1015, -inf
        %1017 = vmax.xlane.f32.xlu0 %v1016
        %v1018 = vpop.xlane.xlu0 %1017
        %v1019 = vsub.f32 %v1015, %v1018
        %v1020 = vmul.f32 %v1019, 1.442695
        %v1021 = vpow.pop %v1020
        %v1022 = vsel %vm854, %v1021, 0.0
        %1023 = vadd.xlane.f32.xlu0 %v1022
        %v1024 = vpop.xlane.xlu0 %1023
        %v1025 = vrcp.pop %v1024
        %v1026 = vmul.f32 %v1021, %v1025
        %v1027 = vpack.c.bf16 %v1026, %v1026
        %1029 = vrot.lane.b32.xlu0 %v853, 120
        %v1030 = vpop.permute.xlu0 %1029
        %v1032 = vsel %vm854, %v1027, 0
        %v1035 = vsel %vm918, %v1030, 0
        %1037 = vmatprep.subr.bf16.mxu0 0
        %1038 = vmatpush1.bf16.msra.mxu0 0
        %1039 = vmatprep.subr.bf16.mxu0 0
        %1040 = vmatpush1.bf16.msra.mxu0 0
        %1041 = vmatprep.subr.bf16.mxu0 0
        %1042 = vmatpush1.bf16.msra.mxu0 0
        %1043 = vmatprep.subr.bf16.mxu0 0
        %1044 = vmatpush1.bf16.msra.mxu0 0
        %1045 = vmatprep.subr.bf16.mxu0 0
        %1046 = vmatpush1.bf16.msra.mxu0 0
        %1047 = vmatprep.subr.bf16.mxu0 0
        %1048 = vmatpush1.bf16.msra.mxu0 0
        %1049 = vmatprep.subr.bf16.mxu0 0
        %1050 = vmatpush1.bf16.msra.mxu0 0
        %1051 = vmatprep.subr.bf16.mxu0 0
        %1052 = vmatpush1.bf16.msra.mxu0 %v1035
        %1053 = vmatprep.subr.bf16.mxu0 0
        %1054 = vmatpush2.bf16.msra.mxu0 0
        %1055 = vmatprep.subr.bf16.mxu0 0
        %1056 = vmatpush2.bf16.msra.mxu0 0
        %1057 = vmatprep.subr.bf16.mxu0 0
        %1058 = vmatpush2.bf16.msra.mxu0 0
        %1059 = vmatprep.subr.bf16.mxu0 0
        %1060 = vmatpush2.bf16.msra.mxu0 0
        %1061 = vmatprep.subr.bf16.mxu0 0
        %1062 = vmatpush2.bf16.msra.mxu0 0
        %1063 = vmatprep.subr.bf16.mxu0 0
        %1064 = vmatpush2.bf16.msra.mxu0 0
        %1065 = vmatprep.subr.bf16.mxu0 0
        %1066 = vmatpush2.bf16.msra.mxu0 0
        %1067 = vmatprep.subr.bf16.mxu0 0
        %1068 = vmatpush2.bf16.msra.mxu0 0
        %1069 = vmatprep.mubr.bf16.mxu0 0
        %1070 = vmatmul.mubr.bf16.gmra.mxu0 %v1032
        %v1071 = vpop.f32.mrf.mxu0
        %v1072 = vadd.f32 0.0, %v1071
        %v1073 = vpop.f32.mrf.mxu0
        %v1074 = vpop.f32.mrf.mxu0
        %v1075 = vpop.f32.mrf.mxu0
        %1076 = vdwg.mxu0
        %1077 = vrot.lane.b32.xlu0 %v851, 112
        %v1078 = vpop.permute.xlu0 %1077
        %1079 = vrot.lane.b32.xlu0 %v852, 112
        %v1080 = vpop.permute.xlu0 %1079
        %v1082 = vsel %vm854, %v1078, 0
        %v1085 = vsel %vm854, %v1080, 0
        %1087 = vmatprep.subr.bf16.mxu0 0
        %1088 = vmatpush1.bf16.xpose.msra.mxu0 0
        %1089 = vmatprep.subr.bf16.mxu0 0
        %1090 = vmatpush1.bf16.xpose.msra.mxu0 0
        %1091 = vmatprep.subr.bf16.mxu0 0
        %1092 = vmatpush1.bf16.xpose.msra.mxu0 0
        %1093 = vmatprep.subr.bf16.mxu0 0
        %1094 = vmatpush1.bf16.xpose.msra.mxu0 0
        %1095 = vmatprep.subr.bf16.mxu0 0
        %1096 = vmatpush1.bf16.xpose.msra.mxu0 0
        %1097 = vmatprep.subr.bf16.mxu0 0
        %1098 = vmatpush1.bf16.xpose.msra.mxu0 0
        %1099 = vmatprep.subr.bf16.mxu0 0
        %1100 = vmatpush1.bf16.xpose.msra.mxu0 0
        %1101 = vmatprep.subr.bf16.mxu0 0
        %1102 = vmatpush1.bf16.xpose.msra.mxu0 %v1085
        %1103 = vmatprep.subr.bf16.mxu0 0
        %1104 = vmatpush2.bf16.xpose.msra.mxu0 0
        %1105 = vmatprep.subr.bf16.mxu0 0
        %1106 = vmatpush2.bf16.xpose.msra.mxu0 0
        %1107 = vmatprep.subr.bf16.mxu0 0
        %1108 = vmatpush2.bf16.xpose.msra.mxu0 0
        %1109 = vmatprep.subr.bf16.mxu0 0
        %1110 = vmatpush2.bf16.xpose.msra.mxu0 0
        %1111 = vmatprep.subr.bf16.mxu0 0
        %1112 = vmatpush2.bf16.xpose.msra.mxu0 0
        %1113 = vmatprep.subr.bf16.mxu0 0
        %1114 = vmatpush2.bf16.xpose.msra.mxu0 0
        %1115 = vmatprep.subr.bf16.mxu0 0
        %1116 = vmatpush2.bf16.xpose.msra.mxu0 0
        %1117 = vmatprep.subr.bf16.mxu0 0
        %1118 = vmatpush2.bf16.xpose.msra.mxu0 0
        %1119 = vmatprep.mubr.bf16.mxu0 0
        %1120 = vmatmul.mubr.bf16.gmra.mxu0 %v1082
        %v1121 = vpop.f32.mrf.mxu0
        %v1122 = vadd.f32 0.0, %v1121
        %v1123 = vpop.f32.mrf.mxu0
        %v1124 = vpop.f32.mrf.mxu0
        %v1125 = vpop.f32.mrf.mxu0
        %1126 = vdwg.mxu0
        %v1127 = vmul.f32 %v1122, 0.35355338
        %v1128 = vadd.f32 %v1127, %v632
        %v1129 = vsel %vm854, %v1128, -inf
        %1130 = vmax.xlane.f32.xlu0 %v1129
        %v1131 = vpop.xlane.xlu0 %1130
        %v1132 = vsub.f32 %v1128, %v1131
        %v1133 = vmul.f32 %v1132, 1.442695
        %v1134 = vpow.pop %v1133
        %v1135 = vsel %vm854, %v1134, 0.0
        %1136 = vadd.xlane.f32.xlu0 %v1135
        %v1137 = vpop.xlane.xlu0 %1136
        %v1138 = vrcp.pop %v1137
        %v1139 = vmul.f32 %v1134, %v1138
        %v1140 = vpack.c.bf16 %v1139, %v1139
        %1141 = vrot.lane.b32.xlu0 %v853, 112
        %v1142 = vpop.permute.xlu0 %1141
        %v1144 = vsel %vm854, %v1140, 0
        %v1147 = vsel %vm918, %v1142, 0
        %1149 = vmatprep.subr.bf16.mxu0 0
        %1150 = vmatpush1.bf16.msra.mxu0 0
        %1151 = vmatprep.subr.bf16.mxu0 0
        %1152 = vmatpush1.bf16.msra.mxu0 0
        %1153 = vmatprep.subr.bf16.mxu0 0
        %1154 = vmatpush1.bf16.msra.mxu0 0
        %1155 = vmatprep.subr.bf16.mxu0 0
        %1156 = vmatpush1.bf16.msra.mxu0 0
        %1157 = vmatprep.subr.bf16.mxu0 0
        %1158 = vmatpush1.bf16.msra.mxu0 0
        %1159 = vmatprep.subr.bf16.mxu0 0
        %1160 = vmatpush1.bf16.msra.mxu0 0
        %1161 = vmatprep.subr.bf16.mxu0 0
        %1162 = vmatpush1.bf16.msra.mxu0 0
        %1163 = vmatprep.subr.bf16.mxu0 0
        %1164 = vmatpush1.bf16.msra.mxu0 %v1147
        %1165 = vmatprep.subr.bf16.mxu0 0
        %1166 = vmatpush2.bf16.msra.mxu0 0
        %1167 = vmatprep.subr.bf16.mxu0 0
        %1168 = vmatpush2.bf16.msra.mxu0 0
        %1169 = vmatprep.subr.bf16.mxu0 0
        %1170 = vmatpush2.bf16.msra.mxu0 0
        %1171 = vmatprep.subr.bf16.mxu0 0
        %1172 = vmatpush2.bf16.msra.mxu0 0
        %1173 = vmatprep.subr.bf16.mxu0 0
        %1174 = vmatpush2.bf16.msra.mxu0 0
        %1175 = vmatprep.subr.bf16.mxu0 0
        %1176 = vmatpush2.bf16.msra.mxu0 0
        %1177 = vmatprep.subr.bf16.mxu0 0
        %1178 = vmatpush2.bf16.msra.mxu0 0
        %1179 = vmatprep.subr.bf16.mxu0 0
        %1180 = vmatpush2.bf16.msra.mxu0 0
        %1181 = vmatprep.mubr.bf16.mxu0 0
        %1182 = vmatmul.mubr.bf16.gmra.mxu0 %v1144
        %v1183 = vpop.f32.mrf.mxu0
        %v1184 = vadd.f32 0.0, %v1183
        %v1185 = vpop.f32.mrf.mxu0
        %v1186 = vpop.f32.mrf.mxu0
        %v1187 = vpop.f32.mrf.mxu0
        %1188 = vdwg.mxu0
        %1189 = vrot.lane.b32.xlu0 %v851, 104
        %v1190 = vpop.permute.xlu0 %1189
        %1191 = vrot.lane.b32.xlu0 %v852, 104
        %v1192 = vpop.permute.xlu0 %1191
        %v1194 = vsel %vm854, %v1190, 0
        %v1197 = vsel %vm854, %v1192, 0
        %1199 = vmatprep.subr.bf16.mxu0 0
        %1200 = vmatpush1.bf16.xpose.msra.mxu0 0
        %1201 = vmatprep.subr.bf16.mxu0 0
        %1202 = vmatpush1.bf16.xpose.msra.mxu0 0
        %1203 = vmatprep.subr.bf16.mxu0 0
        %1204 = vmatpush1.bf16.xpose.msra.mxu0 0
        %1205 = vmatprep.subr.bf16.mxu0 0
        %1206 = vmatpush1.bf16.xpose.msra.mxu0 0
        %1207 = vmatprep.subr.bf16.mxu0 0
        %1208 = vmatpush1.bf16.xpose.msra.mxu0 0
        %1209 = vmatprep.subr.bf16.mxu0 0
        %1210 = vmatpush1.bf16.xpose.msra.mxu0 0
        %1211 = vmatprep.subr.bf16.mxu0 0
        %1212 = vmatpush1.bf16.xpose.msra.mxu0 0
        %1213 = vmatprep.subr.bf16.mxu0 0
        %1214 = vmatpush1.bf16.xpose.msra.mxu0 %v1197
        %1215 = vmatprep.subr.bf16.mxu0 0
        %1216 = vmatpush2.bf16.xpose.msra.mxu0 0
        %1217 = vmatprep.subr.bf16.mxu0 0
        %1218 = vmatpush2.bf16.xpose.msra.mxu0 0
        %1219 = vmatprep.subr.bf16.mxu0 0
        %1220 = vmatpush2.bf16.xpose.msra.mxu0 0
        %1221 = vmatprep.subr.bf16.mxu0 0
        %1222 = vmatpush2.bf16.xpose.msra.mxu0 0
        %1223 = vmatprep.subr.bf16.mxu0 0
        %1224 = vmatpush2.bf16.xpose.msra.mxu0 0
        %1225 = vmatprep.subr.bf16.mxu0 0
        %1226 = vmatpush2.bf16.xpose.msra.mxu0 0
        %1227 = vmatprep.subr.bf16.mxu0 0
        %1228 = vmatpush2.bf16.xpose.msra.mxu0 0
        %1229 = vmatprep.subr.bf16.mxu0 0
        %1230 = vmatpush2.bf16.xpose.msra.mxu0 0
        %1231 = vmatprep.mubr.bf16.mxu0 0
        %1232 = vmatmul.mubr.bf16.gmra.mxu0 %v1194
        %v1233 = vpop.f32.mrf.mxu0
        %v1234 = vadd.f32 0.0, %v1233
        %v1235 = vpop.f32.mrf.mxu0
        %v1236 = vpop.f32.mrf.mxu0
        %v1237 = vpop.f32.mrf.mxu0
        %1238 = vdwg.mxu0
        %v1239 = vmul.f32 %v1234, 0.35355338
        %v1240 = vadd.f32 %v1239, %v632
        %v1241 = vsel %vm854, %v1240, -inf
        %1242 = vmax.xlane.f32.xlu0 %v1241
        %v1243 = vpop.xlane.xlu0 %1242
        %v1244 = vsub.f32 %v1240, %v1243
        %v1245 = vmul.f32 %v1244, 1.442695
        %v1246 = vpow.pop %v1245
        %v1247 = vsel %vm854, %v1246, 0.0
        %1248 = vadd.xlane.f32.xlu0 %v1247
        %v1249 = vpop.xlane.xlu0 %1248
        %v1250 = vrcp.pop %v1249
        %v1251 = vmul.f32 %v1246, %v1250
        %v1252 = vpack.c.bf16 %v1251, %v1251
        %1253 = vrot.lane.b32.xlu0 %v853, 104
        %v1254 = vpop.permute.xlu0 %1253
        %v1256 = vsel %vm854, %v1252, 0
        %v1259 = vsel %vm918, %v1254, 0
        %1261 = vmatprep.subr.bf16.mxu0 0
        %1262 = vmatpush1.bf16.msra.mxu0 0
        %1263 = vmatprep.subr.bf16.mxu0 0
        %1264 = vmatpush1.bf16.msra.mxu0 0
        %1265 = vmatprep.subr.bf16.mxu0 0
        %1266 = vmatpush1.bf16.msra.mxu0 0
        %1267 = vmatprep.subr.bf16.mxu0 0
        %1268 = vmatpush1.bf16.msra.mxu0 0
        %1269 = vmatprep.subr.bf16.mxu0 0
        %1270 = vmatpush1.bf16.msra.mxu0 0
        %1271 = vmatprep.subr.bf16.mxu0 0
        %1272 = vmatpush1.bf16.msra.mxu0 0
        %1273 = vmatprep.subr.bf16.mxu0 0
        %1274 = vmatpush1.bf16.msra.mxu0 0
        %1275 = vmatprep.subr.bf16.mxu0 0
        %1276 = vmatpush1.bf16.msra.mxu0 %v1259
        %1277 = vmatprep.subr.bf16.mxu0 0
        %1278 = vmatpush2.bf16.msra.mxu0 0
        %1279 = vmatprep.subr.bf16.mxu0 0
        %1280 = vmatpush2.bf16.msra.mxu0 0
        %1281 = vmatprep.subr.bf16.mxu0 0
        %1282 = vmatpush2.bf16.msra.mxu0 0
        %1283 = vmatprep.subr.bf16.mxu0 0
        %1284 = vmatpush2.bf16.msra.mxu0 0
        %1285 = vmatprep.subr.bf16.mxu0 0
        %1286 = vmatpush2.bf16.msra.mxu0 0
        %1287 = vmatprep.subr.bf16.mxu0 0
        %1288 = vmatpush2.bf16.msra.mxu0 0
        %1289 = vmatprep.subr.bf16.mxu0 0
        %1290 = vmatpush2.bf16.msra.mxu0 0
        %1291 = vmatprep.subr.bf16.mxu0 0
        %1292 = vmatpush2.bf16.msra.mxu0 0
        %1293 = vmatprep.mubr.bf16.mxu0 0
        %1294 = vmatmul.mubr.bf16.gmra.mxu0 %v1256
        %v1295 = vpop.f32.mrf.mxu0
        %v1296 = vadd.f32 0.0, %v1295
        %v1297 = vpop.f32.mrf.mxu0
        %v1298 = vpop.f32.mrf.mxu0
        %v1299 = vpop.f32.mrf.mxu0
        %1300 = vdwg.mxu0
        %1302 = vrot.lane.b32.xlu0 %v1072, 8
        %v1303 = vpop.permute.xlu0 %1302
        %1306 = vrot.lane.b32.xlu0 %v1184, 16
        %v1307 = vpop.permute.xlu0 %1306
        %1310 = vrot.lane.b32.xlu0 %v1296, 24
        %v1311 = vpop.permute.xlu0 %1310
        %v1313 = vsel %vm854, %v957, %v1303
        %vm1314 = vcmask 130048
        %v1315 = vsel %vm1314, %v1313, %v1307
        %vm1316 = vcmask 195584
        %v1317 = vsel %vm1316, %v1315, %v1311
        %v1318 = vpack.c.bf16 %v1317, %v1317
        %s1319 = scalar_lea.vmem %s7, 48
        %v1320 = vld [vmem:[%s1319] sm:$0xf]
        %v1321 = vld [vmem:[%s1319 + $0x4] sm:$0xf]
        %v1322 = vld [vmem:[%s1319 + $0x8] sm:$0xf]
        %v1323 = vld [vmem:[%s1319 + $0xc] sm:$0xf]
        %v1328 = vunpack.c.l.b16 %v1320
        %v1329 = vunpack.c.l.b16 %v1321
        %v1330 = vunpack.c.l.b16 %v1322
        %v1331 = vunpack.c.l.b16 %v1323
        %v1332 = vpack.c.b16 %v1329, %v1328
        %v1333 = vpack.c.b16 %v1331, %v1330
        %v1337 = vsel %vm637, %v1318, 0
        %1339 = vmatprep.subr.bf16.mxu0 0
        %1340 = vmatpush1.bf16.msra.mxu0 0
        %1341 = vmatprep.subr.bf16.mxu0 0
        %1342 = vmatpush1.bf16.msra.mxu0 0
        %1343 = vmatprep.subr.bf16.mxu0 0
        %1344 = vmatpush1.bf16.msra.mxu0 0
        %1345 = vmatprep.subr.bf16.mxu0 0
        %1346 = vmatpush1.bf16.msra.mxu0 0
        %1347 = vmatprep.subr.bf16.mxu0 0
        %1348 = vmatpush1.bf16.msra.mxu0 0
        %1349 = vmatprep.subr.bf16.mxu0 0
        %1350 = vmatpush1.bf16.msra.mxu0 0
        %1351 = vmatprep.subr.bf16.mxu0 0
        %1352 = vmatpush1.bf16.msra.mxu0 %v1333
        %1353 = vmatprep.subr.bf16.mxu0 0
        %1354 = vmatpush1.bf16.msra.mxu0 %v1332
        %1355 = vmatprep.subr.bf16.mxu0 0
        %1356 = vmatpush2.bf16.msra.mxu0 0
        %1357 = vmatprep.subr.bf16.mxu0 0
        %1358 = vmatpush2.bf16.msra.mxu0 0
        %1359 = vmatprep.subr.bf16.mxu0 0
        %1360 = vmatpush2.bf16.msra.mxu0 0
        %1361 = vmatprep.subr.bf16.mxu0 0
        %1362 = vmatpush2.bf16.msra.mxu0 0
        %1363 = vmatprep.subr.bf16.mxu0 0
        %1364 = vmatpush2.bf16.msra.mxu0 0
        %1365 = vmatprep.subr.bf16.mxu0 0
        %1366 = vmatpush2.bf16.msra.mxu0 0
        %1367 = vmatprep.subr.bf16.mxu0 0
        %1368 = vmatpush2.bf16.msra.mxu0 0
        %1369 = vmatprep.subr.bf16.mxu0 0
        %1370 = vmatpush2.bf16.msra.mxu0 0
        %1371 = vmatprep.mubr.bf16.mxu0 0
        %1372 = vmatmul.mubr.bf16.gmra.mxu0 %v1337
        %v1373 = vpop.f32.mrf.mxu0
        %v1374 = vadd.f32 0.0, %v1373
        %v1375 = vpop.f32.mrf.mxu0
        %v1376 = vpop.f32.mrf.mxu0
        %v1377 = vpop.f32.mrf.mxu0
        %1378 = vdwg.mxu0
        %v1379 = vadd.f32 %v616, %v1374
        %v1380 = vld [vmem:[%s8 + $0x5] sm:$0x1]
        %v1381 = vlaneseq
        %v1382 = vshrl.u32 %v1381, 7
        %v1383 = vsub.s32 0, %v1382
        %v1384 = vrot.slane %v1380, %v1383
        %v1385 = vadd.f32 %v1379, %v1384
        %v1386 = vld [vmem:[%s8 + $0x6] sm:$0x1]
        %v1387 = vld [vmem:[%s8 + $0x7] sm:$0x1]
        %v1388 = vsel %vm637, %v1385, 0.0
        %1389 = vadd.xlane.f32.xlu0 %v1388
        %v1390 = vpop.xlane.xlu0 %1389
        %v1391 = vmul.f32 %v1390, %v641
        %v1392 = vsub.f32 %v1385, %v1391
        %v1393 = vmul.f32 %v1392, %v1392
        %v1394 = vsel %vm637, %v1393, 0.0
        %1395 = vadd.xlane.f32.xlu0 %v1394
        %v1396 = vpop.xlane.xlu0 %1395
        %v1397 = vmul.f32 %v1396, %v641
        %v1398 = vadd.f32 %v1397, 1e-05
        %v1399 = vrsqrt.pop %v1398
        %v1400 = vmul.f32 %v1392, %v1399
        %v1401 = vlaneseq
        %v1402 = vshrl.u32 %v1401, 7
        %v1403 = vsub.s32 0, %v1402
        %v1404 = vrot.slane %v1386, %v1403
        %v1405 = vmul.f32 %v1400, %v1404
        %v1406 = vlaneseq
        %v1407 = vshrl.u32 %v1406, 7
        %v1408 = vsub.s32 0, %v1407
        %v1409 = vrot.slane %v1387, %v1408
        %v1410 = vadd.f32 %v1405, %v1409
        %v1411 = vpack.c.bf16 %v1410, %v1410
        %s1412 = scalar_lea.vmem %s7, 64
        %v1413 = vld [vmem:[%s1412] sm:$0xf]
        %v1414 = vld [vmem:[%s1412 + $0x4] sm:$0xf]
        %v1415 = vld [vmem:[%s1412 + $0x8] sm:$0xf]
        %v1416 = vld [vmem:[%s1412 + $0xc] sm:$0xf]
        %v1417 = vld [vmem:[%s8 + $0x8] sm:$0x1]
        %v1418 = vlaneseq
        %v1419 = vshrl.u32 %v1418, 7
        %v1420 = vsub.s32 0, %v1419
        %v1421 = vrot.slane %v1417, %v1420
        %v1426 = vunpack.c.l.b16 %v1413
        %v1427 = vunpack.c.l.b16 %v1414
        %v1428 = vunpack.c.l.b16 %v1415
        %v1429 = vunpack.c.l.b16 %v1416
        %v1430 = vpack.c.b16 %v1427, %v1426
        %v1431 = vpack.c.b16 %v1429, %v1428
        %v1435 = vsel %vm637, %v1411, 0
        %1437 = vmatprep.subr.bf16.mxu0 0
        %1438 = vmatpush1.bf16.msra.mxu0 0
        %1439 = vmatprep.subr.bf16.mxu0 0
        %1440 = vmatpush1.bf16.msra.mxu0 0
        %1441 = vmatprep.subr.bf16.mxu0 0
        %1442 = vmatpush1.bf16.msra.mxu0 0
        %1443 = vmatprep.subr.bf16.mxu0 0
        %1444 = vmatpush1.bf16.msra.mxu0 0
        %1445 = vmatprep.subr.bf16.mxu0 0
        %1446 = vmatpush1.bf16.msra.mxu0 0
        %1447 = vmatprep.subr.bf16.mxu0 0
        %1448 = vmatpush1.bf16.msra.mxu0 0
        %1449 = vmatprep.subr.bf16.mxu0 0
        %1450 = vmatpush1.bf16.msra.mxu0 %v1431
        %1451 = vmatprep.subr.bf16.mxu0 0
        %1452 = vmatpush1.bf16.msra.mxu0 %v1430
        %1453 = vmatprep.subr.bf16.mxu0 0
        %1454 = vmatpush2.bf16.msra.mxu0 0
        %1455 = vmatprep.subr.bf16.mxu0 0
        %1456 = vmatpush2.bf16.msra.mxu0 0
        %1457 = vmatprep.subr.bf16.mxu0 0
        %1458 = vmatpush2.bf16.msra.mxu0 0
        %1459 = vmatprep.subr.bf16.mxu0 0
        %1460 = vmatpush2.bf16.msra.mxu0 0
        %1461 = vmatprep.subr.bf16.mxu0 0
        %1462 = vmatpush2.bf16.msra.mxu0 0
        %1463 = vmatprep.subr.bf16.mxu0 0
        %1464 = vmatpush2.bf16.msra.mxu0 0
        %1465 = vmatprep.subr.bf16.mxu0 0
        %1466 = vmatpush2.bf16.msra.mxu0 0
        %1467 = vmatprep.subr.bf16.mxu0 0
        %1468 = vmatpush2.bf16.msra.mxu0 0
        %1469 = vmatprep.mubr.bf16.mxu0 0
        %1470 = vmatmul.mubr.bf16.gmra.mxu0 %v1435
        %v1471 = vpop.f32.mrf.mxu0
        %v1472 = vadd.f32 %v1421, %v1471
        %v1473 = vpop.f32.mrf.mxu0
        %v1474 = vpop.f32.mrf.mxu0
        %v1475 = vpop.f32.mrf.mxu0
        %1476 = vdwg.mxu0
        %s1477 = scalar_lea.vmem %s7, 80
        %v1478 = vld [vmem:[%s1477] sm:$0xf]
        %v1479 = vld [vmem:[%s1477 + $0x4] sm:$0xf]
        %v1480 = vld [vmem:[%s1477 + $0x8] sm:$0xf]
        %v1481 = vld [vmem:[%s1477 + $0xc] sm:$0xf]
        %v1482 = vld [vmem:[%s8 + $0x9] sm:$0x1]
        %v1483 = vlaneseq
        %v1484 = vshrl.u32 %v1483, 7
        %v1485 = vsub.s32 0, %v1484
        %v1486 = vrot.slane %v1482, %v1485
        %v1491 = vunpack.c.l.b16 %v1478
        %v1492 = vunpack.c.l.b16 %v1479
        %v1493 = vunpack.c.l.b16 %v1480
        %v1494 = vunpack.c.l.b16 %v1481
        %v1495 = vpack.c.b16 %v1492, %v1491
        %v1496 = vpack.c.b16 %v1494, %v1493
        %v1500 = vsel %vm637, %v505, 0
        %1502 = vmatprep.subr.bf16.mxu0 0
        %1503 = vmatpush1.bf16.msra.mxu0 0
        %1504 = vmatprep.subr.bf16.mxu0 0
        %1505 = vmatpush1.bf16.msra.mxu0 0
        %1506 = vmatprep.subr.bf16.mxu0 0
        %1507 = vmatpush1.bf16.msra.mxu0 0
        %1508 = vmatprep.subr.bf16.mxu0 0
        %1509 = vmatpush1.bf16.msra.mxu0 0
        %1510 = vmatprep.subr.bf16.mxu0 0
        %1511 = vmatpush1.bf16.msra.mxu0 0
        %1512 = vmatprep.subr.bf16.mxu0 0
        %1513 = vmatpush1.bf16.msra.mxu0 0
        %1514 = vmatprep.subr.bf16.mxu0 0
        %1515 = vmatpush1.bf16.msra.mxu0 %v1496
        %1516 = vmatprep.subr.bf16.mxu0 0
        %1517 = vmatpush1.bf16.msra.mxu0 %v1495
        %1518 = vmatprep.subr.bf16.mxu0 0
        %1519 = vmatpush2.bf16.msra.mxu0 0
        %1520 = vmatprep.subr.bf16.mxu0 0
        %1521 = vmatpush2.bf16.msra.mxu0 0
        %1522 = vmatprep.subr.bf16.mxu0 0
        %1523 = vmatpush2.bf16.msra.mxu0 0
        %1524 = vmatprep.subr.bf16.mxu0 0
        %1525 = vmatpush2.bf16.msra.mxu0 0
        %1526 = vmatprep.subr.bf16.mxu0 0
        %1527 = vmatpush2.bf16.msra.mxu0 0
        %1528 = vmatprep.subr.bf16.mxu0 0
        %1529 = vmatpush2.bf16.msra.mxu0 0
        %1530 = vmatprep.subr.bf16.mxu0 0
        %1531 = vmatpush2.bf16.msra.mxu0 0
        %1532 = vmatprep.subr.bf16.mxu0 0
        %1533 = vmatpush2.bf16.msra.mxu0 0
        %1534 = vmatprep.mubr.bf16.mxu0 0
        %1535 = vmatmul.mubr.bf16.gmra.mxu0 %v1500
        %v1536 = vpop.f32.mrf.mxu0
        %v1537 = vadd.f32 %v1486, %v1536
        %v1538 = vpop.f32.mrf.mxu0
        %v1539 = vpop.f32.mrf.mxu0
        %v1540 = vpop.f32.mrf.mxu0
        %1541 = vdwg.mxu0
        %s1542 = scalar_lea.vmem %s7, 96
        %v1543 = vld [vmem:[%s1542] sm:$0xf]
        %v1544 = vld [vmem:[%s1542 + $0x4] sm:$0xf]
        %v1545 = vld [vmem:[%s1542 + $0x8] sm:$0xf]
        %v1546 = vld [vmem:[%s1542 + $0xc] sm:$0xf]
        %v1547 = vld [vmem:[%s8 + $0xa] sm:$0x1]
        %v1548 = vlaneseq
        %v1549 = vshrl.u32 %v1548, 7
        %v1550 = vsub.s32 0, %v1549
        %v1551 = vrot.slane %v1547, %v1550
        %v1556 = vunpack.c.l.b16 %v1543
        %v1557 = vunpack.c.l.b16 %v1544
        %v1558 = vunpack.c.l.b16 %v1545
        %v1559 = vunpack.c.l.b16 %v1546
        %v1560 = vpack.c.b16 %v1557, %v1556
        %v1561 = vpack.c.b16 %v1559, %v1558
        %1564 = vmatprep.subr.bf16.mxu0 0
        %1565 = vmatpush1.bf16.msra.mxu0 0
        %1566 = vmatprep.subr.bf16.mxu0 0
        %1567 = vmatpush1.bf16.msra.mxu0 0
        %1568 = vmatprep.subr.bf16.mxu0 0
        %1569 = vmatpush1.bf16.msra.mxu0 0
        %1570 = vmatprep.subr.bf16.mxu0 0
        %1571 = vmatpush1.bf16.msra.mxu0 0
        %1572 = vmatprep.subr.bf16.mxu0 0
        %1573 = vmatpush1.bf16.msra.mxu0 0
        %1574 = vmatprep.subr.bf16.mxu0 0
        %1575 = vmatpush1.bf16.msra.mxu0 0
        %1576 = vmatprep.subr.bf16.mxu0 0
        %1577 = vmatpush1.bf16.msra.mxu0 %v1561
        %1578 = vmatprep.subr.bf16.mxu0 0
        %1579 = vmatpush1.bf16.msra.mxu0 %v1560
        %1580 = vmatprep.subr.bf16.mxu0 0
        %1581 = vmatpush2.bf16.msra.mxu0 0
        %1582 = vmatprep.subr.bf16.mxu0 0
        %1583 = vmatpush2.bf16.msra.mxu0 0
        %1584 = vmatprep.subr.bf16.mxu0 0
        %1585 = vmatpush2.bf16.msra.mxu0 0
        %1586 = vmatprep.subr.bf16.mxu0 0
        %1587 = vmatpush2.bf16.msra.mxu0 0
        %1588 = vmatprep.subr.bf16.mxu0 0
        %1589 = vmatpush2.bf16.msra.mxu0 0
        %1590 = vmatprep.subr.bf16.mxu0 0
        %1591 = vmatpush2.bf16.msra.mxu0 0
        %1592 = vmatprep.subr.bf16.mxu0 0
        %1593 = vmatpush2.bf16.msra.mxu0 0
        %1594 = vmatprep.subr.bf16.mxu0 0
        %1595 = vmatpush2.bf16.msra.mxu0 0
        %1596 = vmatprep.mubr.bf16.mxu0 0
        %1597 = vmatmul.mubr.bf16.gmra.mxu0 %v1500
        %v1598 = vpop.f32.mrf.mxu0
        %v1599 = vadd.f32 %v1551, %v1598
        %v1600 = vpop.f32.mrf.mxu0
        %v1601 = vpop.f32.mrf.mxu0
        %v1602 = vpop.f32.mrf.mxu0
        %1603 = vdwg.mxu0
        %v1604 = vpack.c.bf16 %v1472, %v1472
        %v1605 = vpack.c.bf16 %v1537, %v1537
        %v1606 = vpack.c.bf16 %v1599, %v1599
        %v1608 = vsel %vm854, %v1604, 0
        %v1611 = vsel %vm854, %v1605, 0
        %1613 = vmatprep.subr.bf16.mxu0 0
        %1614 = vmatpush1.bf16.xpose.msra.mxu0 0
        %1615 = vmatprep.subr.bf16.mxu0 0
        %1616 = vmatpush1.bf16.xpose.msra.mxu0 0
        %1617 = vmatprep.subr.bf16.mxu0 0
        %1618 = vmatpush1.bf16.xpose.msra.mxu0 0
        %1619 = vmatprep.subr.bf16.mxu0 0
        %1620 = vmatpush1.bf16.xpose.msra.mxu0 0
        %1621 = vmatprep.subr.bf16.mxu0 0
        %1622 = vmatpush1.bf16.xpose.msra.mxu0 0
        %1623 = vmatprep.subr.bf16.mxu0 0
        %1624 = vmatpush1.bf16.xpose.msra.mxu0 0
        %1625 = vmatprep.subr.bf16.mxu0 0
        %1626 = vmatpush1.bf16.xpose.msra.mxu0 0
        %1627 = vmatprep.subr.bf16.mxu0 0
        %1628 = vmatpush1.bf16.xpose.msra.mxu0 %v1611
        %1629 = vmatprep.subr.bf16.mxu0 0
        %1630 = vmatpush2.bf16.xpose.msra.mxu0 0
        %1631 = vmatprep.subr.bf16.mxu0 0
        %1632 = vmatpush2.bf16.xpose.msra.mxu0 0
        %1633 = vmatprep.subr.bf16.mxu0 0
        %1634 = vmatpush2.bf16.xpose.msra.mxu0 0
        %1635 = vmatprep.subr.bf16.mxu0 0
        %1636 = vmatpush2.bf16.xpose.msra.mxu0 0
        %1637 = vmatprep.subr.bf16.mxu0 0
        %1638 = vmatpush2.bf16.xpose.msra.mxu0 0
        %1639 = vmatprep.subr.bf16.mxu0 0
        %1640 = vmatpush2.bf16.xpose.msra.mxu0 0
        %1641 = vmatprep.subr.bf16.mxu0 0
        %1642 = vmatpush2.bf16.xpose.msra.mxu0 0
        %1643 = vmatprep.subr.bf16.mxu0 0
        %1644 = vmatpush2.bf16.xpose.msra.mxu0 0
        %1645 = vmatprep.mubr.bf16.mxu0 0
        %1646 = vmatmul.mubr.bf16.gmra.mxu0 %v1608
        %v1647 = vpop.f32.mrf.mxu0
        %v1648 = vadd.f32 0.0, %v1647
        %v1649 = vpop.f32.mrf.mxu0
        %v1650 = vpop.f32.mrf.mxu0
        %v1651 = vpop.f32.mrf.mxu0
        %1652 = vdwg.mxu0
        %v1653 = vmul.f32 %v1648, 0.35355338
        %v1655 = vlaneseq
        %v1656 = vshrl.u32 %v1655, 7
        %v1657 = vsub.s32 0, %v1656
        %v1658 = vrot.slane %v634, %v1657
        %v1660 = vadd.f32 %v1653, %v1658
        %v1661 = vsel %vm854, %v1660, -inf
        %1662 = vmax.xlane.f32.xlu0 %v1661
        %v1663 = vpop.xlane.xlu0 %1662
        %v1664 = vsub.f32 %v1660, %v1663
        %v1665 = vmul.f32 %v1664, 1.442695
        %v1666 = vpow.pop %v1665
        %v1667 = vsel %vm854, %v1666, 0.0
        %1668 = vadd.xlane.f32.xlu0 %v1667
        %v1669 = vpop.xlane.xlu0 %1668
        %v1670 = vrcp.pop %v1669
        %v1671 = vmul.f32 %v1666, %v1670
        %v1672 = vpack.c.bf16 %v1671, %v1671
        %v1674 = vsel %vm854, %v1672, 0
        %v1677 = vsel %vm918, %v1606, 0
        %1679 = vmatprep.subr.bf16.mxu0 0
        %1680 = vmatpush1.bf16.msra.mxu0 0
        %1681 = vmatprep.subr.bf16.mxu0 0
        %1682 = vmatpush1.bf16.msra.mxu0 0
        %1683 = vmatprep.subr.bf16.mxu0 0
        %1684 = vmatpush1.bf16.msra.mxu0 0
        %1685 = vmatprep.subr.bf16.mxu0 0
        %1686 = vmatpush1.bf16.msra.mxu0 0
        %1687 = vmatprep.subr.bf16.mxu0 0
        %1688 = vmatpush1.bf16.msra.mxu0 0
        %1689 = vmatprep.subr.bf16.mxu0 0
        %1690 = vmatpush1.bf16.msra.mxu0 0
        %1691 = vmatprep.subr.bf16.mxu0 0
        %1692 = vmatpush1.bf16.msra.mxu0 0
        %1693 = vmatprep.subr.bf16.mxu0 0
        %1694 = vmatpush1.bf16.msra.mxu0 %v1677
        %1695 = vmatprep.subr.bf16.mxu0 0
        %1696 = vmatpush2.bf16.msra.mxu0 0
        %1697 = vmatprep.subr.bf16.mxu0 0
        %1698 = vmatpush2.bf16.msra.mxu0 0
        %1699 = vmatprep.subr.bf16.mxu0 0
        %1700 = vmatpush2.bf16.msra.mxu0 0
        %1701 = vmatprep.subr.bf16.mxu0 0
        %1702 = vmatpush2.bf16.msra.mxu0 0
        %1703 = vmatprep.subr.bf16.mxu0 0
        %1704 = vmatpush2.bf16.msra.mxu0 0
        %1705 = vmatprep.subr.bf16.mxu0 0
        %1706 = vmatpush2.bf16.msra.mxu0 0
        %1707 = vmatprep.subr.bf16.mxu0 0
        %1708 = vmatpush2.bf16.msra.mxu0 0
        %1709 = vmatprep.subr.bf16.mxu0 0
        %1710 = vmatpush2.bf16.msra.mxu0 0
        %1711 = vmatprep.mubr.bf16.mxu0 0
        %1712 = vmatmul.mubr.bf16.gmra.mxu0 %v1674
        %v1713 = vpop.f32.mrf.mxu0
        %v1714 = vadd.f32 0.0, %v1713
        %v1715 = vpop.f32.mrf.mxu0
        %v1716 = vpop.f32.mrf.mxu0
        %v1717 = vpop.f32.mrf.mxu0
        %1718 = vdwg.mxu0
        %1720 = vrot.lane.b32.xlu0 %v1604, 120
        %v1721 = vpop.permute.xlu0 %1720
        %1723 = vrot.lane.b32.xlu0 %v1605, 120
        %v1724 = vpop.permute.xlu0 %1723
        %v1726 = vsel %vm854, %v1721, 0
        %v1729 = vsel %vm854, %v1724, 0
        %1731 = vmatprep.subr.bf16.mxu0 0
        %1732 = vmatpush1.bf16.xpose.msra.mxu0 0
        %1733 = vmatprep.subr.bf16.mxu0 0
        %1734 = vmatpush1.bf16.xpose.msra.mxu0 0
        %1735 = vmatprep.subr.bf16.mxu0 0
        %1736 = vmatpush1.bf16.xpose.msra.mxu0 0
        %1737 = vmatprep.subr.bf16.mxu0 0
        %1738 = vmatpush1.bf16.xpose.msra.mxu0 0
        %1739 = vmatprep.subr.bf16.mxu0 0
        %1740 = vmatpush1.bf16.xpose.msra.mxu0 0
        %1741 = vmatprep.subr.bf16.mxu0 0
        %1742 = vmatpush1.bf16.xpose.msra.mxu0 0
        %1743 = vmatprep.subr.bf16.mxu0 0
        %1744 = vmatpush1.bf16.xpose.msra.mxu0 0
        %1745 = vmatprep.subr.bf16.mxu0 0
        %1746 = vmatpush1.bf16.xpose.msra.mxu0 %v1729
        %1747 = vmatprep.subr.bf16.mxu0 0
        %1748 = vmatpush2.bf16.xpose.msra.mxu0 0
        %1749 = vmatprep.subr.bf16.mxu0 0
        %1750 = vmatpush2.bf16.xpose.msra.mxu0 0
        %1751 = vmatprep.subr.bf16.mxu0 0
        %1752 = vmatpush2.bf16.xpose.msra.mxu0 0
        %1753 = vmatprep.subr.bf16.mxu0 0
        %1754 = vmatpush2.bf16.xpose.msra.mxu0 0
        %1755 = vmatprep.subr.bf16.mxu0 0
        %1756 = vmatpush2.bf16.xpose.msra.mxu0 0
        %1757 = vmatprep.subr.bf16.mxu0 0
        %1758 = vmatpush2.bf16.xpose.msra.mxu0 0
        %1759 = vmatprep.subr.bf16.mxu0 0
        %1760 = vmatpush2.bf16.xpose.msra.mxu0 0
        %1761 = vmatprep.subr.bf16.mxu0 0
        %1762 = vmatpush2.bf16.xpose.msra.mxu0 0
        %1763 = vmatprep.mubr.bf16.mxu0 0
        %1764 = vmatmul.mubr.bf16.gmra.mxu0 %v1726
        %v1765 = vpop.f32.mrf.mxu0
        %v1766 = vadd.f32 0.0, %v1765
        %v1767 = vpop.f32.mrf.mxu0
        %v1768 = vpop.f32.mrf.mxu0
        %v1769 = vpop.f32.mrf.mxu0
        %1770 = vdwg.mxu0
        %v1771 = vmul.f32 %v1766, 0.35355338
        %v1772 = vadd.f32 %v1771, %v1658
        %v1773 = vsel %vm854, %v1772, -inf
        %1774 = vmax.xlane.f32.xlu0 %v1773
        %v1775 = vpop.xlane.xlu0 %1774
        %v1776 = vsub.f32 %v1772, %v1775
        %v1777 = vmul.f32 %v1776, 1.442695
        %v1778 = vpow.pop %v1777
        %v1779 = vsel %vm854, %v1778, 0.0
        %1780 = vadd.xlane.f32.xlu0 %v1779
        %v1781 = vpop.xlane.xlu0 %1780
        %v1782 = vrcp.pop %v1781
        %v1783 = vmul.f32 %v1778, %v1782
        %v1784 = vpack.c.bf16 %v1783, %v1783
        %1786 = vrot.lane.b32.xlu0 %v1606, 120
        %v1787 = vpop.permute.xlu0 %1786
        %v1789 = vsel %vm854, %v1784, 0
        %v1792 = vsel %vm918, %v1787, 0
        %1794 = vmatprep.subr.bf16.mxu0 0
        %1795 = vmatpush1.bf16.msra.mxu0 0
        %1796 = vmatprep.subr.bf16.mxu0 0
        %1797 = vmatpush1.bf16.msra.mxu0 0
        %1798 = vmatprep.subr.bf16.mxu0 0
        %1799 = vmatpush1.bf16.msra.mxu0 0
        %1800 = vmatprep.subr.bf16.mxu0 0
        %1801 = vmatpush1.bf16.msra.mxu0 0
        %1802 = vmatprep.subr.bf16.mxu0 0
        %1803 = vmatpush1.bf16.msra.mxu0 0
        %1804 = vmatprep.subr.bf16.mxu0 0
        %1805 = vmatpush1.bf16.msra.mxu0 0
        %1806 = vmatprep.subr.bf16.mxu0 0
        %1807 = vmatpush1.bf16.msra.mxu0 0
        %1808 = vmatprep.subr.bf16.mxu0 0
        %1809 = vmatpush1.bf16.msra.mxu0 %v1792
        %1810 = vmatprep.subr.bf16.mxu0 0
        %1811 = vmatpush2.bf16.msra.mxu0 0
        %1812 = vmatprep.subr.bf16.mxu0 0
        %1813 = vmatpush2.bf16.msra.mxu0 0
        %1814 = vmatprep.subr.bf16.mxu0 0
        %1815 = vmatpush2.bf16.msra.mxu0 0
        %1816 = vmatprep.subr.bf16.mxu0 0
        %1817 = vmatpush2.bf16.msra.mxu0 0
        %1818 = vmatprep.subr.bf16.mxu0 0
        %1819 = vmatpush2.bf16.msra.mxu0 0
        %1820 = vmatprep.subr.bf16.mxu0 0
        %1821 = vmatpush2.bf16.msra.mxu0 0
        %1822 = vmatprep.subr.bf16.mxu0 0
        %1823 = vmatpush2.bf16.msra.mxu0 0
        %1824 = vmatprep.subr.bf16.mxu0 0
        %1825 = vmatpush2.bf16.msra.mxu0 0
        %1826 = vmatprep.mubr.bf16.mxu0 0
        %1827 = vmatmul.mubr.bf16.gmra.mxu0 %v1789
        %v1828 = vpop.f32.mrf.mxu0
        %v1829 = vadd.f32 0.0, %v1828
        %v1830 = vpop.f32.mrf.mxu0
        %v1831 = vpop.f32.mrf.mxu0
        %v1832 = vpop.f32.mrf.mxu0
        %1833 = vdwg.mxu0
        %1834 = vrot.lane.b32.xlu0 %v1604, 112
        %v1835 = vpop.permute.xlu0 %1834
        %1836 = vrot.lane.b32.xlu0 %v1605, 112
        %v1837 = vpop.permute.xlu0 %1836
        %v1839 = vsel %vm854, %v1835, 0
        %v1842 = vsel %vm854, %v1837, 0
        %1844 = vmatprep.subr.bf16.mxu0 0
        %1845 = vmatpush1.bf16.xpose.msra.mxu0 0
        %1846 = vmatprep.subr.bf16.mxu0 0
        %1847 = vmatpush1.bf16.xpose.msra.mxu0 0
        %1848 = vmatprep.subr.bf16.mxu0 0
        %1849 = vmatpush1.bf16.xpose.msra.mxu0 0
        %1850 = vmatprep.subr.bf16.mxu0 0
        %1851 = vmatpush1.bf16.xpose.msra.mxu0 0
        %1852 = vmatprep.subr.bf16.mxu0 0
        %1853 = vmatpush1.bf16.xpose.msra.mxu0 0
        %1854 = vmatprep.subr.bf16.mxu0 0
        %1855 = vmatpush1.bf16.xpose.msra.mxu0 0
        %1856 = vmatprep.subr.bf16.mxu0 0
        %1857 = vmatpush1.bf16.xpose.msra.mxu0 0
        %1858 = vmatprep.subr.bf16.mxu0 0
        %1859 = vmatpush1.bf16.xpose.msra.mxu0 %v1842
        %1860 = vmatprep.subr.bf16.mxu0 0
        %1861 = vmatpush2.bf16.xpose.msra.mxu0 0
        %1862 = vmatprep.subr.bf16.mxu0 0
        %1863 = vmatpush2.bf16.xpose.msra.mxu0 0
        %1864 = vmatprep.subr.bf16.mxu0 0
        %1865 = vmatpush2.bf16.xpose.msra.mxu0 0
        %1866 = vmatprep.subr.bf16.mxu0 0
        %1867 = vmatpush2.bf16.xpose.msra.mxu0 0
        %1868 = vmatprep.subr.bf16.mxu0 0
        %1869 = vmatpush2.bf16.xpose.msra.mxu0 0
        %1870 = vmatprep.subr.bf16.mxu0 0
        %1871 = vmatpush2.bf16.xpose.msra.mxu0 0
        %1872 = vmatprep.subr.bf16.mxu0 0
        %1873 = vmatpush2.bf16.xpose.msra.mxu0 0
        %1874 = vmatprep.subr.bf16.mxu0 0
        %1875 = vmatpush2.bf16.xpose.msra.mxu0 0
        %1876 = vmatprep.mubr.bf16.mxu0 0
        %1877 = vmatmul.mubr.bf16.gmra.mxu0 %v1839
        %v1878 = vpop.f32.mrf.mxu0
        %v1879 = vadd.f32 0.0, %v1878
        %v1880 = vpop.f32.mrf.mxu0
        %v1881 = vpop.f32.mrf.mxu0
        %v1882 = vpop.f32.mrf.mxu0
        %1883 = vdwg.mxu0
        %v1884 = vmul.f32 %v1879, 0.35355338
        %v1885 = vadd.f32 %v1884, %v1658
        %v1886 = vsel %vm854, %v1885, -inf
        %1887 = vmax.xlane.f32.xlu0 %v1886
        %v1888 = vpop.xlane.xlu0 %1887
        %v1889 = vsub.f32 %v1885, %v1888
        %v1890 = vmul.f32 %v1889, 1.442695
        %v1891 = vpow.pop %v1890
        %v1892 = vsel %vm854, %v1891, 0.0
        %1893 = vadd.xlane.f32.xlu0 %v1892
        %v1894 = vpop.xlane.xlu0 %1893
        %v1895 = vrcp.pop %v1894
        %v1896 = vmul.f32 %v1891, %v1895
        %v1897 = vpack.c.bf16 %v1896, %v1896
        %1898 = vrot.lane.b32.xlu0 %v1606, 112
        %v1899 = vpop.permute.xlu0 %1898
        %v1901 = vsel %vm854, %v1897, 0
        %v1904 = vsel %vm918, %v1899, 0
        %1906 = vmatprep.subr.bf16.mxu0 0
        %1907 = vmatpush1.bf16.msra.mxu0 0
        %1908 = vmatprep.subr.bf16.mxu0 0
        %1909 = vmatpush1.bf16.msra.mxu0 0
        %1910 = vmatprep.subr.bf16.mxu0 0
        %1911 = vmatpush1.bf16.msra.mxu0 0
        %1912 = vmatprep.subr.bf16.mxu0 0
        %1913 = vmatpush1.bf16.msra.mxu0 0
        %1914 = vmatprep.subr.bf16.mxu0 0
        %1915 = vmatpush1.bf16.msra.mxu0 0
        %1916 = vmatprep.subr.bf16.mxu0 0
        %1917 = vmatpush1.bf16.msra.mxu0 0
        %1918 = vmatprep.subr.bf16.mxu0 0
        %1919 = vmatpush1.bf16.msra.mxu0 0
        %1920 = vmatprep.subr.bf16.mxu0 0
        %1921 = vmatpush1.bf16.msra.mxu0 %v1904
        %1922 = vmatprep.subr.bf16.mxu0 0
        %1923 = vmatpush2.bf16.msra.mxu0 0
        %1924 = vmatprep.subr.bf16.mxu0 0
        %1925 = vmatpush2.bf16.msra.mxu0 0
        %1926 = vmatprep.subr.bf16.mxu0 0
        %1927 = vmatpush2.bf16.msra.mxu0 0
        %1928 = vmatprep.subr.bf16.mxu0 0
        %1929 = vmatpush2.bf16.msra.mxu0 0
        %1930 = vmatprep.subr.bf16.mxu0 0
        %1931 = vmatpush2.bf16.msra.mxu0 0
        %1932 = vmatprep.subr.bf16.mxu0 0
        %1933 = vmatpush2.bf16.msra.mxu0 0
        %1934 = vmatprep.subr.bf16.mxu0 0
        %1935 = vmatpush2.bf16.msra.mxu0 0
        %1936 = vmatprep.subr.bf16.mxu0 0
        %1937 = vmatpush2.bf16.msra.mxu0 0
        %1938 = vmatprep.mubr.bf16.mxu0 0
        %1939 = vmatmul.mubr.bf16.gmra.mxu0 %v1901
        %v1940 = vpop.f32.mrf.mxu0
        %v1941 = vadd.f32 0.0, %v1940
        %v1942 = vpop.f32.mrf.mxu0
        %v1943 = vpop.f32.mrf.mxu0
        %v1944 = vpop.f32.mrf.mxu0
        %1945 = vdwg.mxu0
        %1946 = vrot.lane.b32.xlu0 %v1604, 104
        %v1947 = vpop.permute.xlu0 %1946
        %1948 = vrot.lane.b32.xlu0 %v1605, 104
        %v1949 = vpop.permute.xlu0 %1948
        %v1951 = vsel %vm854, %v1947, 0
        %v1954 = vsel %vm854, %v1949, 0
        %1956 = vmatprep.subr.bf16.mxu0 0
        %1957 = vmatpush1.bf16.xpose.msra.mxu0 0
        %1958 = vmatprep.subr.bf16.mxu0 0
        %1959 = vmatpush1.bf16.xpose.msra.mxu0 0
        %1960 = vmatprep.subr.bf16.mxu0 0
        %1961 = vmatpush1.bf16.xpose.msra.mxu0 0
        %1962 = vmatprep.subr.bf16.mxu0 0
        %1963 = vmatpush1.bf16.xpose.msra.mxu0 0
        %1964 = vmatprep.subr.bf16.mxu0 0
        %1965 = vmatpush1.bf16.xpose.msra.mxu0 0
        %1966 = vmatprep.subr.bf16.mxu0 0
        %1967 = vmatpush1.bf16.xpose.msra.mxu0 0
        %1968 = vmatprep.subr.bf16.mxu0 0
        %1969 = vmatpush1.bf16.xpose.msra.mxu0 0
        %1970 = vmatprep.subr.bf16.mxu0 0
        %1971 = vmatpush1.bf16.xpose.msra.mxu0 %v1954
        %1972 = vmatprep.subr.bf16.mxu0 0
        %1973 = vmatpush2.bf16.xpose.msra.mxu0 0
        %1974 = vmatprep.subr.bf16.mxu0 0
        %1975 = vmatpush2.bf16.xpose.msra.mxu0 0
        %1976 = vmatprep.subr.bf16.mxu0 0
        %1977 = vmatpush2.bf16.xpose.msra.mxu0 0
        %1978 = vmatprep.subr.bf16.mxu0 0
        %1979 = vmatpush2.bf16.xpose.msra.mxu0 0
        %1980 = vmatprep.subr.bf16.mxu0 0
        %1981 = vmatpush2.bf16.xpose.msra.mxu0 0
        %1982 = vmatprep.subr.bf16.mxu0 0
        %1983 = vmatpush2.bf16.xpose.msra.mxu0 0
        %1984 = vmatprep.subr.bf16.mxu0 0
        %1985 = vmatpush2.bf16.xpose.msra.mxu0 0
        %1986 = vmatprep.subr.bf16.mxu0 0
        %1987 = vmatpush2.bf16.xpose.msra.mxu0 0
        %1988 = vmatprep.mubr.bf16.mxu0 0
        %1989 = vmatmul.mubr.bf16.gmra.mxu0 %v1951
        %v1990 = vpop.f32.mrf.mxu0
        %v1991 = vadd.f32 0.0, %v1990
        %v1992 = vpop.f32.mrf.mxu0
        %v1993 = vpop.f32.mrf.mxu0
        %v1994 = vpop.f32.mrf.mxu0
        %1995 = vdwg.mxu0
        %v1996 = vmul.f32 %v1991, 0.35355338
        %v1997 = vadd.f32 %v1996, %v1658
        %v1998 = vsel %vm854, %v1997, -inf
        %1999 = vmax.xlane.f32.xlu0 %v1998
        %v2000 = vpop.xlane.xlu0 %1999
        %v2001 = vsub.f32 %v1997, %v2000
        %v2002 = vmul.f32 %v2001, 1.442695
        %v2003 = vpow.pop %v2002
        %v2004 = vsel %vm854, %v2003, 0.0
        %2005 = vadd.xlane.f32.xlu0 %v2004
        %v2006 = vpop.xlane.xlu0 %2005
        %v2007 = vrcp.pop %v2006
        %v2008 = vmul.f32 %v2003, %v2007
        %v2009 = vpack.c.bf16 %v2008, %v2008
        %2010 = vrot.lane.b32.xlu0 %v1606, 104
        %v2011 = vpop.permute.xlu0 %2010
        %v2013 = vsel %vm854, %v2009, 0
        %v2016 = vsel %vm918, %v2011, 0
        %2018 = vmatprep.subr.bf16.mxu0 0
        %2019 = vmatpush1.bf16.msra.mxu0 0
        %2020 = vmatprep.subr.bf16.mxu0 0
        %2021 = vmatpush1.bf16.msra.mxu0 0
        %2022 = vmatprep.subr.bf16.mxu0 0
        %2023 = vmatpush1.bf16.msra.mxu0 0
        %2024 = vmatprep.subr.bf16.mxu0 0
        %2025 = vmatpush1.bf16.msra.mxu0 0
        %2026 = vmatprep.subr.bf16.mxu0 0
        %2027 = vmatpush1.bf16.msra.mxu0 0
        %2028 = vmatprep.subr.bf16.mxu0 0
        %2029 = vmatpush1.bf16.msra.mxu0 0
        %2030 = vmatprep.subr.bf16.mxu0 0
        %2031 = vmatpush1.bf16.msra.mxu0 0
        %2032 = vmatprep.subr.bf16.mxu0 0
        %2033 = vmatpush1.bf16.msra.mxu0 %v2016
        %2034 = vmatprep.subr.bf16.mxu0 0
        %2035 = vmatpush2.bf16.msra.mxu0 0
        %2036 = vmatprep.subr.bf16.mxu0 0
        %2037 = vmatpush2.bf16.msra.mxu0 0
        %2038 = vmatprep.subr.bf16.mxu0 0
        %2039 = vmatpush2.bf16.msra.mxu0 0
        %2040 = vmatprep.subr.bf16.mxu0 0
        %2041 = vmatpush2.bf16.msra.mxu0 0
        %2042 = vmatprep.subr.bf16.mxu0 0
        %2043 = vmatpush2.bf16.msra.mxu0 0
        %2044 = vmatprep.subr.bf16.mxu0 0
        %2045 = vmatpush2.bf16.msra.mxu0 0
        %2046 = vmatprep.subr.bf16.mxu0 0
        %2047 = vmatpush2.bf16.msra.mxu0 0
        %2048 = vmatprep.subr.bf16.mxu0 0
        %2049 = vmatpush2.bf16.msra.mxu0 0
        %2050 = vmatprep.mubr.bf16.mxu0 0
        %2051 = vmatmul.mubr.bf16.gmra.mxu0 %v2013
        %v2052 = vpop.f32.mrf.mxu0
        %v2053 = vadd.f32 0.0, %v2052
        %v2054 = vpop.f32.mrf.mxu0
        %v2055 = vpop.f32.mrf.mxu0
        %v2056 = vpop.f32.mrf.mxu0
        %2057 = vdwg.mxu0
        %2059 = vrot.lane.b32.xlu0 %v1829, 8
        %v2060 = vpop.permute.xlu0 %2059
        %2063 = vrot.lane.b32.xlu0 %v1941, 16
        %v2064 = vpop.permute.xlu0 %2063
        %2067 = vrot.lane.b32.xlu0 %v2053, 24
        %v2068 = vpop.permute.xlu0 %2067
        %v2070 = vsel %vm854, %v1714, %v2060
        %v2071 = vsel %vm1314, %v2070, %v2064
        %v2072 = vsel %vm1316, %v2071, %v2068
        %v2073 = vpack.c.bf16 %v2072, %v2072
        %s2074 = scalar_lea.vmem %s7, 112
        %v2075 = vld [vmem:[%s2074] sm:$0xf]
        %v2076 = vld [vmem:[%s2074 + $0x4] sm:$0xf]
        %v2077 = vld [vmem:[%s2074 + $0x8] sm:$0xf]
        %v2078 = vld [vmem:[%s2074 + $0xc] sm:$0xf]
        %v2083 = vunpack.c.l.b16 %v2075
        %v2084 = vunpack.c.l.b16 %v2076
        %v2085 = vunpack.c.l.b16 %v2077
        %v2086 = vunpack.c.l.b16 %v2078
        %v2087 = vpack.c.b16 %v2084, %v2083
        %v2088 = vpack.c.b16 %v2086, %v2085
        %v2092 = vsel %vm637, %v2073, 0
        %2094 = vmatprep.subr.bf16.mxu0 0
        %2095 = vmatpush1.bf16.msra.mxu0 0
        %2096 = vmatprep.subr.bf16.mxu0 0
        %2097 = vmatpush1.bf16.msra.mxu0 0
        %2098 = vmatprep.subr.bf16.mxu0 0
        %2099 = vmatpush1.bf16.msra.mxu0 0
        %2100 = vmatprep.subr.bf16.mxu0 0
        %2101 = vmatpush1.bf16.msra.mxu0 0
        %2102 = vmatprep.subr.bf16.mxu0 0
        %2103 = vmatpush1.bf16.msra.mxu0 0
        %2104 = vmatprep.subr.bf16.mxu0 0
        %2105 = vmatpush1.bf16.msra.mxu0 0
        %2106 = vmatprep.subr.bf16.mxu0 0
        %2107 = vmatpush1.bf16.msra.mxu0 %v2088
        %2108 = vmatprep.subr.bf16.mxu0 0
        %2109 = vmatpush1.bf16.msra.mxu0 %v2087
        %2110 = vmatprep.subr.bf16.mxu0 0
        %2111 = vmatpush2.bf16.msra.mxu0 0
        %2112 = vmatprep.subr.bf16.mxu0 0
        %2113 = vmatpush2.bf16.msra.mxu0 0
        %2114 = vmatprep.subr.bf16.mxu0 0
        %2115 = vmatpush2.bf16.msra.mxu0 0
        %2116 = vmatprep.subr.bf16.mxu0 0
        %2117 = vmatpush2.bf16.msra.mxu0 0
        %2118 = vmatprep.subr.bf16.mxu0 0
        %2119 = vmatpush2.bf16.msra.mxu0 0
        %2120 = vmatprep.subr.bf16.mxu0 0
        %2121 = vmatpush2.bf16.msra.mxu0 0
        %2122 = vmatprep.subr.bf16.mxu0 0
        %2123 = vmatpush2.bf16.msra.mxu0 0
        %2124 = vmatprep.subr.bf16.mxu0 0
        %2125 = vmatpush2.bf16.msra.mxu0 0
        %2126 = vmatprep.mubr.bf16.mxu0 0
        %2127 = vmatmul.mubr.bf16.gmra.mxu0 %v2092
        %v2128 = vpop.f32.mrf.mxu0
        %v2129 = vadd.f32 0.0, %v2128
        %v2130 = vpop.f32.mrf.mxu0
        %v2131 = vpop.f32.mrf.mxu0
        %v2132 = vpop.f32.mrf.mxu0
        %2133 = vdwg.mxu0
        %v2134 = vadd.f32 %v1385, %v2129
        %v2135 = vld [vmem:[%s8 + $0xb] sm:$0x1]
        %v2136 = vlaneseq
        %v2137 = vshrl.u32 %v2136, 7
        %v2138 = vsub.s32 0, %v2137
        %v2139 = vrot.slane %v2135, %v2138
        %v2140 = vadd.f32 %v2134, %v2139
        %v2141 = vld [vmem:[%s8 + $0xc] sm:$0x1]
        %v2142 = vld [vmem:[%s8 + $0xd] sm:$0x1]
        %v2143 = vsel %vm637, %v2140, 0.0
        %2144 = vadd.xlane.f32.xlu0 %v2143
        %v2145 = vpop.xlane.xlu0 %2144
        %v2146 = vmul.f32 %v2145, %v641
        %v2147 = vsub.f32 %v2140, %v2146
        %v2148 = vmul.f32 %v2147, %v2147
        %v2149 = vsel %vm637, %v2148, 0.0
        %2150 = vadd.xlane.f32.xlu0 %v2149
        %v2151 = vpop.xlane.xlu0 %2150
        %v2152 = vmul.f32 %v2151, %v641
        %v2153 = vadd.f32 %v2152, 1e-05
        %v2154 = vrsqrt.pop %v2153
        %v2155 = vmul.f32 %v2147, %v2154
        %v2156 = vlaneseq
        %v2157 = vshrl.u32 %v2156, 7
        %v2158 = vsub.s32 0, %v2157
        %v2159 = vrot.slane %v2141, %v2158
        %v2160 = vmul.f32 %v2155, %v2159
        %v2161 = vlaneseq
        %v2162 = vshrl.u32 %v2161, 7
        %v2163 = vsub.s32 0, %v2162
        %v2164 = vrot.slane %v2142, %v2163
        %v2165 = vadd.f32 %v2160, %v2164
        %v2166 = vpack.c.bf16 %v2165, %v2165
        %v2167 = vld [vmem:[%s9] sm:$0xf]
        %v2168 = vld [vmem:[%s9 + $0x4] sm:$0xf]
        %v2169 = vld [vmem:[%s9 + $0x8] sm:$0xf]
        %v2170 = vld [vmem:[%s9 + $0xc] sm:$0xf]
        %v2171 = vld [vmem:[#allocation6] sm:$0x1]
        %v2172 = vlaneseq
        %v2173 = vshrl.u32 %v2172, 7
        %v2174 = vsub.s32 0, %v2173
        %v2175 = vrot.slane %v2171, %v2174
        %v2180 = vunpack.c.l.b16 %v2167
        %v2181 = vunpack.c.l.b16 %v2168
        %v2182 = vunpack.c.l.b16 %v2169
        %v2183 = vunpack.c.l.b16 %v2170
        %v2184 = vpack.c.b16 %v2181, %v2180
        %v2185 = vpack.c.b16 %v2183, %v2182
        %v2189 = vsel %vm637, %v2166, 0
        %2191 = vmatprep.subr.bf16.mxu0 0
        %2192 = vmatpush1.bf16.msra.mxu0 0
        %2193 = vmatprep.subr.bf16.mxu0 0
        %2194 = vmatpush1.bf16.msra.mxu0 0
        %2195 = vmatprep.subr.bf16.mxu0 0
        %2196 = vmatpush1.bf16.msra.mxu0 0
        %2197 = vmatprep.subr.bf16.mxu0 0
        %2198 = vmatpush1.bf16.msra.mxu0 0
        %2199 = vmatprep.subr.bf16.mxu0 0
        %2200 = vmatpush1.bf16.msra.mxu0 0
        %2201 = vmatprep.subr.bf16.mxu0 0
        %2202 = vmatpush1.bf16.msra.mxu0 0
        %2203 = vmatprep.subr.bf16.mxu0 0
        %2204 = vmatpush1.bf16.msra.mxu0 %v2185
        %2205 = vmatprep.subr.bf16.mxu0 0
        %2206 = vmatpush1.bf16.msra.mxu0 %v2184
        %2207 = vmatprep.subr.bf16.mxu0 0
        %2208 = vmatpush2.bf16.msra.mxu0 0
        %2209 = vmatprep.subr.bf16.mxu0 0
        %2210 = vmatpush2.bf16.msra.mxu0 0
        %2211 = vmatprep.subr.bf16.mxu0 0
        %2212 = vmatpush2.bf16.msra.mxu0 0
        %2213 = vmatprep.subr.bf16.mxu0 0
        %2214 = vmatpush2.bf16.msra.mxu0 0
        %2215 = vmatprep.subr.bf16.mxu0 0
        %2216 = vmatpush2.bf16.msra.mxu0 0
        %2217 = vmatprep.subr.bf16.mxu0 0
        %2218 = vmatpush2.bf16.msra.mxu0 0
        %2219 = vmatprep.subr.bf16.mxu0 0
        %2220 = vmatpush2.bf16.msra.mxu0 0
        %2221 = vmatprep.subr.bf16.mxu0 0
        %2222 = vmatpush2.bf16.msra.mxu0 0
        %2223 = vmatprep.mubr.bf16.mxu0 0
        %2224 = vmatmul.mubr.bf16.gmra.mxu0 %v2189
        %v2225 = vpop.f32.mrf.mxu0
        %v2226 = vadd.f32 %v2175, %v2225
        %v2227 = vpop.f32.mrf.mxu0
        %v2228 = vpop.f32.mrf.mxu0
        %v2229 = vpop.f32.mrf.mxu0
        %2230 = vdwg.mxu0
        %v2231 = vmul.f32 %v2226, 0.5
        %v2232 = vmul.f32 %v2226, 0.044715
        %v2233 = vmul.f32 %v2232, %v2226
        %v2234 = vmul.f32 %v2233, %v2226
        %v2235 = vadd.f32 %v2226, %v2234
        %v2236 = vmul.f32 %v2235, 0.7978846
        %v2237 = vtanh.pop %v2236
        %v2238 = vadd.f32 %v2237, 1.0
        %v2239 = vmul.f32 %v2231, %v2238
        %v2240 = vpack.c.bf16 %v2239, %v2239
        %v2241 = vld [vmem:[%s11] sm:$0xf]
        %v2242 = vld [vmem:[%s11 + $0x4] sm:$0xf]
        %v2243 = vld [vmem:[%s11 + $0x8] sm:$0xf]
        %v2244 = vld [vmem:[%s11 + $0xc] sm:$0xf]
        %v2245 = vld [vmem:[%s11 + $0x10] sm:$0xf]
        %v2246 = vld [vmem:[%s11 + $0x14] sm:$0xf]
        %v2247 = vld [vmem:[%s11 + $0x18] sm:$0xf]
        %v2248 = vld [vmem:[%s11 + $0x1c] sm:$0xf]
        %v2249 = vld [vmem:[%s11 + $0x20] sm:$0xf]
        %v2250 = vld [vmem:[%s11 + $0x24] sm:$0xf]
        %v2251 = vld [vmem:[%s11 + $0x28] sm:$0xf]
        %v2252 = vld [vmem:[%s11 + $0x2c] sm:$0xf]
        %v2253 = vld [vmem:[%s11 + $0x30] sm:$0xf]
        %v2254 = vld [vmem:[%s11 + $0x34] sm:$0xf]
        %v2255 = vld [vmem:[%s11 + $0x38] sm:$0xf]
        %v2256 = vld [vmem:[%s11 + $0x3c] sm:$0xf]
        %v2273 = vunpack.c.l.b16 %v2241
        %v2274 = vunpack.c.l.b16 %v2242
        %v2275 = vunpack.c.l.b16 %v2243
        %v2276 = vunpack.c.l.b16 %v2244
        %v2277 = vunpack.c.l.b16 %v2245
        %v2278 = vunpack.c.l.b16 %v2246
        %v2279 = vunpack.c.l.b16 %v2247
        %v2280 = vunpack.c.l.b16 %v2248
        %v2281 = vunpack.c.l.b16 %v2249
        %v2282 = vunpack.c.l.b16 %v2250
        %v2283 = vunpack.c.l.b16 %v2251
        %v2284 = vunpack.c.l.b16 %v2252
        %v2285 = vunpack.c.l.b16 %v2253
        %v2286 = vunpack.c.l.b16 %v2254
        %v2287 = vunpack.c.l.b16 %v2255
        %v2288 = vunpack.c.l.b16 %v2256
        %v2289 = vpack.c.b16 %v2274, %v2273
        %v2290 = vpack.c.b16 %v2276, %v2275
        %v2291 = vpack.c.b16 %v2278, %v2277
        %v2292 = vpack.c.b16 %v2280, %v2279
        %v2293 = vpack.c.b16 %v2282, %v2281
        %v2294 = vpack.c.b16 %v2284, %v2283
        %v2295 = vpack.c.b16 %v2286, %v2285
        %v2296 = vpack.c.b16 %v2288, %v2287
        %2305 = vmatprep.subr.bf16.mxu0 0
        %2306 = vmatpush1.bf16.msra.mxu0 %v2296
        %2307 = vmatprep.subr.bf16.mxu0 0
        %2308 = vmatpush1.bf16.msra.mxu0 %v2295
        %2309 = vmatprep.subr.bf16.mxu0 0
        %2310 = vmatpush1.bf16.msra.mxu0 %v2294
        %2311 = vmatprep.subr.bf16.mxu0 0
        %2312 = vmatpush1.bf16.msra.mxu0 %v2293
        %2313 = vmatprep.subr.bf16.mxu0 0
        %2314 = vmatpush1.bf16.msra.mxu0 %v2292
        %2315 = vmatprep.subr.bf16.mxu0 0
        %2316 = vmatpush1.bf16.msra.mxu0 %v2291
        %2317 = vmatprep.subr.bf16.mxu0 0
        %2318 = vmatpush1.bf16.msra.mxu0 %v2290
        %2319 = vmatprep.subr.bf16.mxu0 0
        %2320 = vmatpush1.bf16.msra.mxu0 %v2289
        %2321 = vmatprep.subr.bf16.mxu0 0
        %2322 = vmatpush2.bf16.msra.mxu0 0
        %2323 = vmatprep.subr.bf16.mxu0 0
        %2324 = vmatpush2.bf16.msra.mxu0 0
        %2325 = vmatprep.subr.bf16.mxu0 0
        %2326 = vmatpush2.bf16.msra.mxu0 0
        %2327 = vmatprep.subr.bf16.mxu0 0
        %2328 = vmatpush2.bf16.msra.mxu0 0
        %2329 = vmatprep.subr.bf16.mxu0 0
        %2330 = vmatpush2.bf16.msra.mxu0 0
        %2331 = vmatprep.subr.bf16.mxu0 0
        %2332 = vmatpush2.bf16.msra.mxu0 0
        %2333 = vmatprep.subr.bf16.mxu0 0
        %2334 = vmatpush2.bf16.msra.mxu0 0
        %2335 = vmatprep.subr.bf16.mxu0 0
        %2336 = vmatpush2.bf16.msra.mxu0 0
        %2337 = vmatprep.mubr.bf16.mxu0 0
        %2338 = vmatmul.mubr.bf16.gmra.mxu0 %v2240
        %v2339 = vpop.f32.mrf.mxu0
        %v2340 = vadd.f32 0.0, %v2339
        %v2341 = vpop.f32.mrf.mxu0
        %v2342 = vpop.f32.mrf.mxu0
        %v2343 = vpop.f32.mrf.mxu0
        %2344 = vdwg.mxu0
        %v2345 = vadd.f32 %v2140, %v2340
        %v2346 = vld [vmem:[%s8 + $0xe] sm:$0x1]
        %v2347 = vlaneseq
        %v2348 = vshrl.u32 %v2347, 7
        %v2349 = vsub.s32 0, %v2348
        %v2350 = vrot.slane %v2346, %v2349
        %v2351 = vadd.f32 %v2345, %v2350
        %v2352 = vld [vmem:[%s8 + $0xf] sm:$0x1]
        %v2353 = vld [vmem:[%s8 + $0x10] sm:$0x1]
        %v2354 = vsel %vm637, %v2351, 0.0
        %2355 = vadd.xlane.f32.xlu0 %v2354
        %v2356 = vpop.xlane.xlu0 %2355
        %v2357 = vmul.f32 %v2356, %v641
        %v2358 = vsub.f32 %v2351, %v2357
        %v2359 = vmul.f32 %v2358, %v2358
        %v2360 = vsel %vm637, %v2359, 0.0
        %2361 = vadd.xlane.f32.xlu0 %v2360
        %v2362 = vpop.xlane.xlu0 %2361
        %v2363 = vmul.f32 %v2362, %v641
        %v2364 = vadd.f32 %v2363, 1e-05
        %v2365 = vrsqrt.pop %v2364
        %v2366 = vmul.f32 %v2358, %v2365
        %v2367 = vlaneseq
        %v2368 = vshrl.u32 %v2367, 7
        %v2369 = vsub.s32 0, %v2368
        %v2370 = vrot.slane %v2352, %v2369
        %v2371 = vmul.f32 %v2366, %v2370
        %v2372 = vlaneseq
        %v2373 = vshrl.u32 %v2372, 7
        %v2374 = vsub.s32 0, %v2373
        %v2375 = vrot.slane %v2353, %v2374
        %v2376 = vadd.f32 %v2371, %v2375
        %v2377 = vpack.c.bf16 %v2376, %v2376
        %s2378 = scalar_lea.vmem %s7, 128
        %v2379 = vld [vmem:[%s2378] sm:$0xf]
        %v2380 = vld [vmem:[%s2378 + $0x4] sm:$0xf]
        %v2381 = vld [vmem:[%s2378 + $0x8] sm:$0xf]
        %v2382 = vld [vmem:[%s2378 + $0xc] sm:$0xf]
        %v2383 = vld [vmem:[%s8 + $0x11] sm:$0x1]
        %v2384 = vlaneseq
        %v2385 = vshrl.u32 %v2384, 7
        %v2386 = vsub.s32 0, %v2385
        %v2387 = vrot.slane %v2383, %v2386
        %v2392 = vunpack.c.l.b16 %v2379
        %v2393 = vunpack.c.l.b16 %v2380
        %v2394 = vunpack.c.l.b16 %v2381
        %v2395 = vunpack.c.l.b16 %v2382
        %v2396 = vpack.c.b16 %v2393, %v2392
        %v2397 = vpack.c.b16 %v2395, %v2394
        %v2401 = vsel %vm637, %v2377, 0
        %2403 = vmatprep.subr.bf16.mxu0 0
        %2404 = vmatpush1.bf16.msra.mxu0 0
        %2405 = vmatprep.subr.bf16.mxu0 0
        %2406 = vmatpush1.bf16.msra.mxu0 0
        %2407 = vmatprep.subr.bf16.mxu0 0
        %2408 = vmatpush1.bf16.msra.mxu0 0
        %2409 = vmatprep.subr.bf16.mxu0 0
        %2410 = vmatpush1.bf16.msra.mxu0 0
        %2411 = vmatprep.subr.bf16.mxu0 0
        %2412 = vmatpush1.bf16.msra.mxu0 0
        %2413 = vmatprep.subr.bf16.mxu0 0
        %2414 = vmatpush1.bf16.msra.mxu0 0
        %2415 = vmatprep.subr.bf16.mxu0 0
        %2416 = vmatpush1.bf16.msra.mxu0 %v2397
        %2417 = vmatprep.subr.bf16.mxu0 0
        %2418 = vmatpush1.bf16.msra.mxu0 %v2396
        %2419 = vmatprep.subr.bf16.mxu0 0
        %2420 = vmatpush2.bf16.msra.mxu0 0
        %2421 = vmatprep.subr.bf16.mxu0 0
        %2422 = vmatpush2.bf16.msra.mxu0 0
        %2423 = vmatprep.subr.bf16.mxu0 0
        %2424 = vmatpush2.bf16.msra.mxu0 0
        %2425 = vmatprep.subr.bf16.mxu0 0
        %2426 = vmatpush2.bf16.msra.mxu0 0
        %2427 = vmatprep.subr.bf16.mxu0 0
        %2428 = vmatpush2.bf16.msra.mxu0 0
        %2429 = vmatprep.subr.bf16.mxu0 0
        %2430 = vmatpush2.bf16.msra.mxu0 0
        %2431 = vmatprep.subr.bf16.mxu0 0
        %2432 = vmatpush2.bf16.msra.mxu0 0
        %2433 = vmatprep.subr.bf16.mxu0 0
        %2434 = vmatpush2.bf16.msra.mxu0 0
        %2435 = vmatprep.mubr.bf16.mxu0 0
        %2436 = vmatmul.mubr.bf16.gmra.mxu0 %v2401
        %v2437 = vpop.f32.mrf.mxu0
        %v2438 = vadd.f32 %v2387, %v2437
        %v2439 = vpop.f32.mrf.mxu0
        %v2440 = vpop.f32.mrf.mxu0
        %v2441 = vpop.f32.mrf.mxu0
        %2442 = vdwg.mxu0
        %s2443 = scalar_lea.vmem %s7, 144
        %v2444 = vld [vmem:[%s2443] sm:$0xf]
        %v2445 = vld [vmem:[%s2443 + $0x4] sm:$0xf]
        %v2446 = vld [vmem:[%s2443 + $0x8] sm:$0xf]
        %v2447 = vld [vmem:[%s2443 + $0xc] sm:$0xf]
        %v2448 = vld [vmem:[%s8 + $0x12] sm:$0x1]
        %v2449 = vlaneseq
        %v2450 = vshrl.u32 %v2449, 7
        %v2451 = vsub.s32 0, %v2450
        %v2452 = vrot.slane %v2448, %v2451
        %v2457 = vunpack.c.l.b16 %v2444
        %v2458 = vunpack.c.l.b16 %v2445
        %v2459 = vunpack.c.l.b16 %v2446
        %v2460 = vunpack.c.l.b16 %v2447
        %v2461 = vpack.c.b16 %v2458, %v2457
        %v2462 = vpack.c.b16 %v2460, %v2459
        %2465 = vmatprep.subr.bf16.mxu0 0
        %2466 = vmatpush1.bf16.msra.mxu0 0
        %2467 = vmatprep.subr.bf16.mxu0 0
        %2468 = vmatpush1.bf16.msra.mxu0 0
        %2469 = vmatprep.subr.bf16.mxu0 0
        %2470 = vmatpush1.bf16.msra.mxu0 0
        %2471 = vmatprep.subr.bf16.mxu0 0
        %2472 = vmatpush1.bf16.msra.mxu0 0
        %2473 = vmatprep.subr.bf16.mxu0 0
        %2474 = vmatpush1.bf16.msra.mxu0 0
        %2475 = vmatprep.subr.bf16.mxu0 0
        %2476 = vmatpush1.bf16.msra.mxu0 0
        %2477 = vmatprep.subr.bf16.mxu0 0
        %2478 = vmatpush1.bf16.msra.mxu0 %v2462
        %2479 = vmatprep.subr.bf16.mxu0 0
        %2480 = vmatpush1.bf16.msra.mxu0 %v2461
        %2481 = vmatprep.subr.bf16.mxu0 0
        %2482 = vmatpush2.bf16.msra.mxu0 0
        %2483 = vmatprep.subr.bf16.mxu0 0
        %2484 = vmatpush2.bf16.msra.mxu0 0
        %2485 = vmatprep.subr.bf16.mxu0 0
        %2486 = vmatpush2.bf16.msra.mxu0 0
        %2487 = vmatprep.subr.bf16.mxu0 0
        %2488 = vmatpush2.bf16.msra.mxu0 0
        %2489 = vmatprep.subr.bf16.mxu0 0
        %2490 = vmatpush2.bf16.msra.mxu0 0
        %2491 = vmatprep.subr.bf16.mxu0 0
        %2492 = vmatpush2.bf16.msra.mxu0 0
        %2493 = vmatprep.subr.bf16.mxu0 0
        %2494 = vmatpush2.bf16.msra.mxu0 0
        %2495 = vmatprep.subr.bf16.mxu0 0
        %2496 = vmatpush2.bf16.msra.mxu0 0
        %2497 = vmatprep.mubr.bf16.mxu0 0
        %2498 = vmatmul.mubr.bf16.gmra.mxu0 %v2401
        %v2499 = vpop.f32.mrf.mxu0
        %v2500 = vadd.f32 %v2452, %v2499
        %v2501 = vpop.f32.mrf.mxu0
        %v2502 = vpop.f32.mrf.mxu0
        %v2503 = vpop.f32.mrf.mxu0
        %2504 = vdwg.mxu0
        %s2505 = scalar_lea.vmem %s7, 160
        %v2506 = vld [vmem:[%s2505] sm:$0xf]
        %v2507 = vld [vmem:[%s2505 + $0x4] sm:$0xf]
        %v2508 = vld [vmem:[%s2505 + $0x8] sm:$0xf]
        %v2509 = vld [vmem:[%s2505 + $0xc] sm:$0xf]
        %v2510 = vld [vmem:[%s8 + $0x13] sm:$0x1]
        %v2511 = vlaneseq
        %v2512 = vshrl.u32 %v2511, 7
        %v2513 = vsub.s32 0, %v2512
        %v2514 = vrot.slane %v2510, %v2513
        %v2519 = vunpack.c.l.b16 %v2506
        %v2520 = vunpack.c.l.b16 %v2507
        %v2521 = vunpack.c.l.b16 %v2508
        %v2522 = vunpack.c.l.b16 %v2509
        %v2523 = vpack.c.b16 %v2520, %v2519
        %v2524 = vpack.c.b16 %v2522, %v2521
        %2527 = vmatprep.subr.bf16.mxu0 0
        %2528 = vmatpush1.bf16.msra.mxu0 0
        %2529 = vmatprep.subr.bf16.mxu0 0
        %2530 = vmatpush1.bf16.msra.mxu0 0
        %2531 = vmatprep.subr.bf16.mxu0 0
        %2532 = vmatpush1.bf16.msra.mxu0 0
        %2533 = vmatprep.subr.bf16.mxu0 0
        %2534 = vmatpush1.bf16.msra.mxu0 0
        %2535 = vmatprep.subr.bf16.mxu0 0
        %2536 = vmatpush1.bf16.msra.mxu0 0
        %2537 = vmatprep.subr.bf16.mxu0 0
        %2538 = vmatpush1.bf16.msra.mxu0 0
        %2539 = vmatprep.subr.bf16.mxu0 0
        %2540 = vmatpush1.bf16.msra.mxu0 %v2524
        %2541 = vmatprep.subr.bf16.mxu0 0
        %2542 = vmatpush1.bf16.msra.mxu0 %v2523
        %2543 = vmatprep.subr.bf16.mxu0 0
        %2544 = vmatpush2.bf16.msra.mxu0 0
        %2545 = vmatprep.subr.bf16.mxu0 0
        %2546 = vmatpush2.bf16.msra.mxu0 0
        %2547 = vmatprep.subr.bf16.mxu0 0
        %2548 = vmatpush2.bf16.msra.mxu0 0
        %2549 = vmatprep.subr.bf16.mxu0 0
        %2550 = vmatpush2.bf16.msra.mxu0 0
        %2551 = vmatprep.subr.bf16.mxu0 0
        %2552 = vmatpush2.bf16.msra.mxu0 0
        %2553 = vmatprep.subr.bf16.mxu0 0
        %2554 = vmatpush2.bf16.msra.mxu0 0
        %2555 = vmatprep.subr.bf16.mxu0 0
        %2556 = vmatpush2.bf16.msra.mxu0 0
        %2557 = vmatprep.subr.bf16.mxu0 0
        %2558 = vmatpush2.bf16.msra.mxu0 0
        %2559 = vmatprep.mubr.bf16.mxu0 0
        %2560 = vmatmul.mubr.bf16.gmra.mxu0 %v2401
        %v2561 = vpop.f32.mrf.mxu0
        %v2562 = vadd.f32 %v2514, %v2561
        %v2563 = vpop.f32.mrf.mxu0
        %v2564 = vpop.f32.mrf.mxu0
        %v2565 = vpop.f32.mrf.mxu0
        %2566 = vdwg.mxu0
        %v2567 = vpack.c.bf16 %v2438, %v2438
        %v2568 = vpack.c.bf16 %v2500, %v2500
        %v2569 = vpack.c.bf16 %v2562, %v2562
        %v2571 = vsel %vm854, %v2567, 0
        %v2574 = vsel %vm854, %v2568, 0
        %2576 = vmatprep.subr.bf16.mxu0 0
        %2577 = vmatpush1.bf16.xpose.msra.mxu0 0
        %2578 = vmatprep.subr.bf16.mxu0 0
        %2579 = vmatpush1.bf16.xpose.msra.mxu0 0
        %2580 = vmatprep.subr.bf16.mxu0 0
        %2581 = vmatpush1.bf16.xpose.msra.mxu0 0
        %2582 = vmatprep.subr.bf16.mxu0 0
        %2583 = vmatpush1.bf16.xpose.msra.mxu0 0
        %2584 = vmatprep.subr.bf16.mxu0 0
        %2585 = vmatpush1.bf16.xpose.msra.mxu0 0
        %2586 = vmatprep.subr.bf16.mxu0 0
        %2587 = vmatpush1.bf16.xpose.msra.mxu0 0
        %2588 = vmatprep.subr.bf16.mxu0 0
        %2589 = vmatpush1.bf16.xpose.msra.mxu0 0
        %2590 = vmatprep.subr.bf16.mxu0 0
        %2591 = vmatpush1.bf16.xpose.msra.mxu0 %v2574
        %2592 = vmatprep.subr.bf16.mxu0 0
        %2593 = vmatpush2.bf16.xpose.msra.mxu0 0
        %2594 = vmatprep.subr.bf16.mxu0 0
        %2595 = vmatpush2.bf16.xpose.msra.mxu0 0
        %2596 = vmatprep.subr.bf16.mxu0 0
        %2597 = vmatpush2.bf16.xpose.msra.mxu0 0
        %2598 = vmatprep.subr.bf16.mxu0 0
        %2599 = vmatpush2.bf16.xpose.msra.mxu0 0
        %2600 = vmatprep.subr.bf16.mxu0 0
        %2601 = vmatpush2.bf16.xpose.msra.mxu0 0
        %2602 = vmatprep.subr.bf16.mxu0 0
        %2603 = vmatpush2.bf16.xpose.msra.mxu0 0
        %2604 = vmatprep.subr.bf16.mxu0 0
        %2605 = vmatpush2.bf16.xpose.msra.mxu0 0
        %2606 = vmatprep.subr.bf16.mxu0 0
        %2607 = vmatpush2.bf16.xpose.msra.mxu0 0
        %2608 = vmatprep.mubr.bf16.mxu0 0
        %2609 = vmatmul.mubr.bf16.gmra.mxu0 %v2571
        %v2610 = vpop.f32.mrf.mxu0
        %v2611 = vadd.f32 0.0, %v2610
        %v2612 = vpop.f32.mrf.mxu0
        %v2613 = vpop.f32.mrf.mxu0
        %v2614 = vpop.f32.mrf.mxu0
        %2615 = vdwg.mxu0
        %v2616 = vmul.f32 %v2611, 0.35355338
        %v2617 = vadd.f32 %v2616, %v632
        %v2618 = vsel %vm854, %v2617, -inf
        %2619 = vmax.xlane.f32.xlu0 %v2618
        %v2620 = vpop.xlane.xlu0 %2619
        %v2621 = vsub.f32 %v2617, %v2620
        %v2622 = vmul.f32 %v2621, 1.442695
        %v2623 = vpow.pop %v2622
        %v2624 = vsel %vm854, %v2623, 0.0
        %2625 = vadd.xlane.f32.xlu0 %v2624
        %v2626 = vpop.xlane.xlu0 %2625
        %v2627 = vrcp.pop %v2626
        %v2628 = vmul.f32 %v2623, %v2627
        %v2629 = vpack.c.bf16 %v2628, %v2628
        %v2631 = vsel %vm854, %v2629, 0
        %v2634 = vsel %vm918, %v2569, 0
        %2636 = vmatprep.subr.bf16.mxu0 0
        %2637 = vmatpush1.bf16.msra.mxu0 0
        %2638 = vmatprep.subr.bf16.mxu0 0
        %2639 = vmatpush1.bf16.msra.mxu0 0
        %2640 = vmatprep.subr.bf16.mxu0 0
        %2641 = vmatpush1.bf16.msra.mxu0 0
        %2642 = vmatprep.subr.bf16.mxu0 0
        %2643 = vmatpush1.bf16.msra.mxu0 0
        %2644 = vmatprep.subr.bf16.mxu0 0
        %2645 = vmatpush1.bf16.msra.mxu0 0
        %2646 = vmatprep.subr.bf16.mxu0 0
        %2647 = vmatpush1.bf16.msra.mxu0 0
        %2648 = vmatprep.subr.bf16.mxu0 0
        %2649 = vmatpush1.bf16.msra.mxu0 0
        %2650 = vmatprep.subr.bf16.mxu0 0
        %2651 = vmatpush1.bf16.msra.mxu0 %v2634
        %2652 = vmatprep.subr.bf16.mxu0 0
        %2653 = vmatpush2.bf16.msra.mxu0 0
        %2654 = vmatprep.subr.bf16.mxu0 0
        %2655 = vmatpush2.bf16.msra.mxu0 0
        %2656 = vmatprep.subr.bf16.mxu0 0
        %2657 = vmatpush2.bf16.msra.mxu0 0
        %2658 = vmatprep.subr.bf16.mxu0 0
        %2659 = vmatpush2.bf16.msra.mxu0 0
        %2660 = vmatprep.subr.bf16.mxu0 0
        %2661 = vmatpush2.bf16.msra.mxu0 0
        %2662 = vmatprep.subr.bf16.mxu0 0
        %2663 = vmatpush2.bf16.msra.mxu0 0
        %2664 = vmatprep.subr.bf16.mxu0 0
        %2665 = vmatpush2.bf16.msra.mxu0 0
        %2666 = vmatprep.subr.bf16.mxu0 0
        %2667 = vmatpush2.bf16.msra.mxu0 0
        %2668 = vmatprep.mubr.bf16.mxu0 0
        %2669 = vmatmul.mubr.bf16.gmra.mxu0 %v2631
        %v2670 = vpop.f32.mrf.mxu0
        %v2671 = vadd.f32 0.0, %v2670
        %v2672 = vpop.f32.mrf.mxu0
        %v2673 = vpop.f32.mrf.mxu0
        %v2674 = vpop.f32.mrf.mxu0
        %2675 = vdwg.mxu0
        %2677 = vrot.lane.b32.xlu0 %v2567, 120
        %v2678 = vpop.permute.xlu0 %2677
        %2680 = vrot.lane.b32.xlu0 %v2568, 120
        %v2681 = vpop.permute.xlu0 %2680
        %v2683 = vsel %vm854, %v2678, 0
        %v2686 = vsel %vm854, %v2681, 0
        %2688 = vmatprep.subr.bf16.mxu0 0
        %2689 = vmatpush1.bf16.xpose.msra.mxu0 0
        %2690 = vmatprep.subr.bf16.mxu0 0
        %2691 = vmatpush1.bf16.xpose.msra.mxu0 0
        %2692 = vmatprep.subr.bf16.mxu0 0
        %2693 = vmatpush1.bf16.xpose.msra.mxu0 0
        %2694 = vmatprep.subr.bf16.mxu0 0
        %2695 = vmatpush1.bf16.xpose.msra.mxu0 0
        %2696 = vmatprep.subr.bf16.mxu0 0
        %2697 = vmatpush1.bf16.xpose.msra.mxu0 0
        %2698 = vmatprep.subr.bf16.mxu0 0
        %2699 = vmatpush1.bf16.xpose.msra.mxu0 0
        %2700 = vmatprep.subr.bf16.mxu0 0
        %2701 = vmatpush1.bf16.xpose.msra.mxu0 0
        %2702 = vmatprep.subr.bf16.mxu0 0
        %2703 = vmatpush1.bf16.xpose.msra.mxu0 %v2686
        %2704 = vmatprep.subr.bf16.mxu0 0
        %2705 = vmatpush2.bf16.xpose.msra.mxu0 0
        %2706 = vmatprep.subr.bf16.mxu0 0
        %2707 = vmatpush2.bf16.xpose.msra.mxu0 0
        %2708 = vmatprep.subr.bf16.mxu0 0
        %2709 = vmatpush2.bf16.xpose.msra.mxu0 0
        %2710 = vmatprep.subr.bf16.mxu0 0
        %2711 = vmatpush2.bf16.xpose.msra.mxu0 0
        %2712 = vmatprep.subr.bf16.mxu0 0
        %2713 = vmatpush2.bf16.xpose.msra.mxu0 0
        %2714 = vmatprep.subr.bf16.mxu0 0
        %2715 = vmatpush2.bf16.xpose.msra.mxu0 0
        %2716 = vmatprep.subr.bf16.mxu0 0
        %2717 = vmatpush2.bf16.xpose.msra.mxu0 0
        %2718 = vmatprep.subr.bf16.mxu0 0
        %2719 = vmatpush2.bf16.xpose.msra.mxu0 0
        %2720 = vmatprep.mubr.bf16.mxu0 0
        %2721 = vmatmul.mubr.bf16.gmra.mxu0 %v2683
        %v2722 = vpop.f32.mrf.mxu0
        %v2723 = vadd.f32 0.0, %v2722
        %v2724 = vpop.f32.mrf.mxu0
        %v2725 = vpop.f32.mrf.mxu0
        %v2726 = vpop.f32.mrf.mxu0
        %2727 = vdwg.mxu0
        %v2728 = vmul.f32 %v2723, 0.35355338
        %v2729 = vadd.f32 %v2728, %v632
        %v2730 = vsel %vm854, %v2729, -inf
        %2731 = vmax.xlane.f32.xlu0 %v2730
        %v2732 = vpop.xlane.xlu0 %2731
        %v2733 = vsub.f32 %v2729, %v2732
        %v2734 = vmul.f32 %v2733, 1.442695
        %v2735 = vpow.pop %v2734
        %v2736 = vsel %vm854, %v2735, 0.0
        %2737 = vadd.xlane.f32.xlu0 %v2736
        %v2738 = vpop.xlane.xlu0 %2737
        %v2739 = vrcp.pop %v2738
        %v2740 = vmul.f32 %v2735, %v2739
        %v2741 = vpack.c.bf16 %v2740, %v2740
        %2743 = vrot.lane.b32.xlu0 %v2569, 120
        %v2744 = vpop.permute.xlu0 %2743
        %v2746 = vsel %vm854, %v2741, 0
        %v2749 = vsel %vm918, %v2744, 0
        %2751 = vmatprep.subr.bf16.mxu0 0
        %2752 = vmatpush1.bf16.msra.mxu0 0
        %2753 = vmatprep.subr.bf16.mxu0 0
        %2754 = vmatpush1.bf16.msra.mxu0 0
        %2755 = vmatprep.subr.bf16.mxu0 0
        %2756 = vmatpush1.bf16.msra.mxu0 0
        %2757 = vmatprep.subr.bf16.mxu0 0
        %2758 = vmatpush1.bf16.msra.mxu0 0
        %2759 = vmatprep.subr.bf16.mxu0 0
        %2760 = vmatpush1.bf16.msra.mxu0 0
        %2761 = vmatprep.subr.bf16.mxu0 0
        %2762 = vmatpush1.bf16.msra.mxu0 0
        %2763 = vmatprep.subr.bf16.mxu0 0
        %2764 = vmatpush1.bf16.msra.mxu0 0
        %2765 = vmatprep.subr.bf16.mxu0 0
        %2766 = vmatpush1.bf16.msra.mxu0 %v2749
        %2767 = vmatprep.subr.bf16.mxu0 0
        %2768 = vmatpush2.bf16.msra.mxu0 0
        %2769 = vmatprep.subr.bf16.mxu0 0
        %2770 = vmatpush2.bf16.msra.mxu0 0
        %2771 = vmatprep.subr.bf16.mxu0 0
        %2772 = vmatpush2.bf16.msra.mxu0 0
        %2773 = vmatprep.subr.bf16.mxu0 0
        %2774 = vmatpush2.bf16.msra.mxu0 0
        %2775 = vmatprep.subr.bf16.mxu0 0
        %2776 = vmatpush2.bf16.msra.mxu0 0
        %2777 = vmatprep.subr.bf16.mxu0 0
        %2778 = vmatpush2.bf16.msra.mxu0 0
        %2779 = vmatprep.subr.bf16.mxu0 0
        %2780 = vmatpush2.bf16.msra.mxu0 0
        %2781 = vmatprep.subr.bf16.mxu0 0
        %2782 = vmatpush2.bf16.msra.mxu0 0
        %2783 = vmatprep.mubr.bf16.mxu0 0
        %2784 = vmatmul.mubr.bf16.gmra.mxu0 %v2746
        %v2785 = vpop.f32.mrf.mxu0
        %v2786 = vadd.f32 0.0, %v2785
        %v2787 = vpop.f32.mrf.mxu0
        %v2788 = vpop.f32.mrf.mxu0
        %v2789 = vpop.f32.mrf.mxu0
        %2790 = vdwg.mxu0
        %2791 = vrot.lane.b32.xlu0 %v2567, 112
        %v2792 = vpop.permute.xlu0 %2791
        %2793 = vrot.lane.b32.xlu0 %v2568, 112
        %v2794 = vpop.permute.xlu0 %2793
        %v2796 = vsel %vm854, %v2792, 0
        %v2799 = vsel %vm854, %v2794, 0
        %2801 = vmatprep.subr.bf16.mxu0 0
        %2802 = vmatpush1.bf16.xpose.msra.mxu0 0
        %2803 = vmatprep.subr.bf16.mxu0 0
        %2804 = vmatpush1.bf16.xpose.msra.mxu0 0
        %2805 = vmatprep.subr.bf16.mxu0 0
        %2806 = vmatpush1.bf16.xpose.msra.mxu0 0
        %2807 = vmatprep.subr.bf16.mxu0 0
        %2808 = vmatpush1.bf16.xpose.msra.mxu0 0
        %2809 = vmatprep.subr.bf16.mxu0 0
        %2810 = vmatpush1.bf16.xpose.msra.mxu0 0
        %2811 = vmatprep.subr.bf16.mxu0 0
        %2812 = vmatpush1.bf16.xpose.msra.mxu0 0
        %2813 = vmatprep.subr.bf16.mxu0 0
        %2814 = vmatpush1.bf16.xpose.msra.mxu0 0
        %2815 = vmatprep.subr.bf16.mxu0 0
        %2816 = vmatpush1.bf16.xpose.msra.mxu0 %v2799
        %2817 = vmatprep.subr.bf16.mxu0 0
        %2818 = vmatpush2.bf16.xpose.msra.mxu0 0
        %2819 = vmatprep.subr.bf16.mxu0 0
        %2820 = vmatpush2.bf16.xpose.msra.mxu0 0
        %2821 = vmatprep.subr.bf16.mxu0 0
        %2822 = vmatpush2.bf16.xpose.msra.mxu0 0
        %2823 = vmatprep.subr.bf16.mxu0 0
        %2824 = vmatpush2.bf16.xpose.msra.mxu0 0
        %2825 = vmatprep.subr.bf16.mxu0 0
        %2826 = vmatpush2.bf16.xpose.msra.mxu0 0
        %2827 = vmatprep.subr.bf16.mxu0 0
        %2828 = vmatpush2.bf16.xpose.msra.mxu0 0
        %2829 = vmatprep.subr.bf16.mxu0 0
        %2830 = vmatpush2.bf16.xpose.msra.mxu0 0
        %2831 = vmatprep.subr.bf16.mxu0 0
        %2832 = vmatpush2.bf16.xpose.msra.mxu0 0
        %2833 = vmatprep.mubr.bf16.mxu0 0
        %2834 = vmatmul.mubr.bf16.gmra.mxu0 %v2796
        %v2835 = vpop.f32.mrf.mxu0
        %v2836 = vadd.f32 0.0, %v2835
        %v2837 = vpop.f32.mrf.mxu0
        %v2838 = vpop.f32.mrf.mxu0
        %v2839 = vpop.f32.mrf.mxu0
        %2840 = vdwg.mxu0
        %v2841 = vmul.f32 %v2836, 0.35355338
        %v2842 = vadd.f32 %v2841, %v632
        %v2843 = vsel %vm854, %v2842, -inf
        %2844 = vmax.xlane.f32.xlu0 %v2843
        %v2845 = vpop.xlane.xlu0 %2844
        %v2846 = vsub.f32 %v2842, %v2845
        %v2847 = vmul.f32 %v2846, 1.442695
        %v2848 = vpow.pop %v2847
        %v2849 = vsel %vm854, %v2848, 0.0
        %2850 = vadd.xlane.f32.xlu0 %v2849
        %v2851 = vpop.xlane.xlu0 %2850
        %v2852 = vrcp.pop %v2851
        %v2853 = vmul.f32 %v2848, %v2852
        %v2854 = vpack.c.bf16 %v2853, %v2853
        %2855 = vrot.lane.b32.xlu0 %v2569, 112
        %v2856 = vpop.permute.xlu0 %2855
        %v2858 = vsel %vm854, %v2854, 0
        %v2861 = vsel %vm918, %v2856, 0
        %2863 = vmatprep.subr.bf16.mxu0 0
        %2864 = vmatpush1.bf16.msra.mxu0 0
        %2865 = vmatprep.subr.bf16.mxu0 0
        %2866 = vmatpush1.bf16.msra.mxu0 0
        %2867 = vmatprep.subr.bf16.mxu0 0
        %2868 = vmatpush1.bf16.msra.mxu0 0
        %2869 = vmatprep.subr.bf16.mxu0 0
        %2870 = vmatpush1.bf16.msra.mxu0 0
        %2871 = vmatprep.subr.bf16.mxu0 0
        %2872 = vmatpush1.bf16.msra.mxu0 0
        %2873 = vmatprep.subr.bf16.mxu0 0
        %2874 = vmatpush1.bf16.msra.mxu0 0
        %2875 = vmatprep.subr.bf16.mxu0 0
        %2876 = vmatpush1.bf16.msra.mxu0 0
        %2877 = vmatprep.subr.bf16.mxu0 0
        %2878 = vmatpush1.bf16.msra.mxu0 %v2861
        %2879 = vmatprep.subr.bf16.mxu0 0
        %2880 = vmatpush2.bf16.msra.mxu0 0
        %2881 = vmatprep.subr.bf16.mxu0 0
        %2882 = vmatpush2.bf16.msra.mxu0 0
        %2883 = vmatprep.subr.bf16.mxu0 0
        %2884 = vmatpush2.bf16.msra.mxu0 0
        %2885 = vmatprep.subr.bf16.mxu0 0
        %2886 = vmatpush2.bf16.msra.mxu0 0
        %2887 = vmatprep.subr.bf16.mxu0 0
        %2888 = vmatpush2.bf16.msra.mxu0 0
        %2889 = vmatprep.subr.bf16.mxu0 0
        %2890 = vmatpush2.bf16.msra.mxu0 0
        %2891 = vmatprep.subr.bf16.mxu0 0
        %2892 = vmatpush2.bf16.msra.mxu0 0
        %2893 = vmatprep.subr.bf16.mxu0 0
        %2894 = vmatpush2.bf16.msra.mxu0 0
        %2895 = vmatprep.mubr.bf16.mxu0 0
        %2896 = vmatmul.mubr.bf16.gmra.mxu0 %v2858
        %v2897 = vpop.f32.mrf.mxu0
        %v2898 = vadd.f32 0.0, %v2897
        %v2899 = vpop.f32.mrf.mxu0
        %v2900 = vpop.f32.mrf.mxu0
        %v2901 = vpop.f32.mrf.mxu0
        %2902 = vdwg.mxu0
        %2903 = vrot.lane.b32.xlu0 %v2567, 104
        %v2904 = vpop.permute.xlu0 %2903
        %2905 = vrot.lane.b32.xlu0 %v2568, 104
        %v2906 = vpop.permute.xlu0 %2905
        %v2908 = vsel %vm854, %v2904, 0
        %v2911 = vsel %vm854, %v2906, 0
        %2913 = vmatprep.subr.bf16.mxu0 0
        %2914 = vmatpush1.bf16.xpose.msra.mxu0 0
        %2915 = vmatprep.subr.bf16.mxu0 0
        %2916 = vmatpush1.bf16.xpose.msra.mxu0 0
        %2917 = vmatprep.subr.bf16.mxu0 0
        %2918 = vmatpush1.bf16.xpose.msra.mxu0 0
        %2919 = vmatprep.subr.bf16.mxu0 0
        %2920 = vmatpush1.bf16.xpose.msra.mxu0 0
        %2921 = vmatprep.subr.bf16.mxu0 0
        %2922 = vmatpush1.bf16.xpose.msra.mxu0 0
        %2923 = vmatprep.subr.bf16.mxu0 0
        %2924 = vmatpush1.bf16.xpose.msra.mxu0 0
        %2925 = vmatprep.subr.bf16.mxu0 0
        %2926 = vmatpush1.bf16.xpose.msra.mxu0 0
        %2927 = vmatprep.subr.bf16.mxu0 0
        %2928 = vmatpush1.bf16.xpose.msra.mxu0 %v2911
        %2929 = vmatprep.subr.bf16.mxu0 0
        %2930 = vmatpush2.bf16.xpose.msra.mxu0 0
        %2931 = vmatprep.subr.bf16.mxu0 0
        %2932 = vmatpush2.bf16.xpose.msra.mxu0 0
        %2933 = vmatprep.subr.bf16.mxu0 0
        %2934 = vmatpush2.bf16.xpose.msra.mxu0 0
        %2935 = vmatprep.subr.bf16.mxu0 0
        %2936 = vmatpush2.bf16.xpose.msra.mxu0 0
        %2937 = vmatprep.subr.bf16.mxu0 0
        %2938 = vmatpush2.bf16.xpose.msra.mxu0 0
        %2939 = vmatprep.subr.bf16.mxu0 0
        %2940 = vmatpush2.bf16.xpose.msra.mxu0 0
        %2941 = vmatprep.subr.bf16.mxu0 0
        %2942 = vmatpush2.bf16.xpose.msra.mxu0 0
        %2943 = vmatprep.subr.bf16.mxu0 0
        %2944 = vmatpush2.bf16.xpose.msra.mxu0 0
        %2945 = vmatprep.mubr.bf16.mxu0 0
        %2946 = vmatmul.mubr.bf16.gmra.mxu0 %v2908
        %v2947 = vpop.f32.mrf.mxu0
        %v2948 = vadd.f32 0.0, %v2947
        %v2949 = vpop.f32.mrf.mxu0
        %v2950 = vpop.f32.mrf.mxu0
        %v2951 = vpop.f32.mrf.mxu0
        %2952 = vdwg.mxu0
        %v2953 = vmul.f32 %v2948, 0.35355338
        %v2954 = vadd.f32 %v2953, %v632
        %v2955 = vsel %vm854, %v2954, -inf
        %2956 = vmax.xlane.f32.xlu0 %v2955
        %v2957 = vpop.xlane.xlu0 %2956
        %v2958 = vsub.f32 %v2954, %v2957
        %v2959 = vmul.f32 %v2958, 1.442695
        %v2960 = vpow.pop %v2959
        %v2961 = vsel %vm854, %v2960, 0.0
        %2962 = vadd.xlane.f32.xlu0 %v2961
        %v2963 = vpop.xlane.xlu0 %2962
        %v2964 = vrcp.pop %v2963
        %v2965 = vmul.f32 %v2960, %v2964
        %v2966 = vpack.c.bf16 %v2965, %v2965
        %2967 = vrot.lane.b32.xlu0 %v2569, 104
        %v2968 = vpop.permute.xlu0 %2967
        %v2970 = vsel %vm854, %v2966, 0
        %v2973 = vsel %vm918, %v2968, 0
        %2975 = vmatprep.subr.bf16.mxu0 0
        %2976 = vmatpush1.bf16.msra.mxu0 0
        %2977 = vmatprep.subr.bf16.mxu0 0
        %2978 = vmatpush1.bf16.msra.mxu0 0
        %2979 = vmatprep.subr.bf16.mxu0 0
        %2980 = vmatpush1.bf16.msra.mxu0 0
        %2981 = vmatprep.subr.bf16.mxu0 0
        %2982 = vmatpush1.bf16.msra.mxu0 0
        %2983 = vmatprep.subr.bf16.mxu0 0
        %2984 = vmatpush1.bf16.msra.mxu0 0
        %2985 = vmatprep.subr.bf16.mxu0 0
        %2986 = vmatpush1.bf16.msra.mxu0 0
        %2987 = vmatprep.subr.bf16.mxu0 0
        %2988 = vmatpush1.bf16.msra.mxu0 0
        %2989 = vmatprep.subr.bf16.mxu0 0
        %2990 = vmatpush1.bf16.msra.mxu0 %v2973
        %2991 = vmatprep.subr.bf16.mxu0 0
        %2992 = vmatpush2.bf16.msra.mxu0 0
        %2993 = vmatprep.subr.bf16.mxu0 0
        %2994 = vmatpush2.bf16.msra.mxu0 0
        %2995 = vmatprep.subr.bf16.mxu0 0
        %2996 = vmatpush2.bf16.msra.mxu0 0
        %2997 = vmatprep.subr.bf16.mxu0 0
        %2998 = vmatpush2.bf16.msra.mxu0 0
        %2999 = vmatprep.subr.bf16.mxu0 0
        %3000 = vmatpush2.bf16.msra.mxu0 0
        %3001 = vmatprep.subr.bf16.mxu0 0
        %3002 = vmatpush2.bf16.msra.mxu0 0
        %3003 = vmatprep.subr.bf16.mxu0 0
        %3004 = vmatpush2.bf16.msra.mxu0 0
        %3005 = vmatprep.subr.bf16.mxu0 0
        %3006 = vmatpush2.bf16.msra.mxu0 0
        %3007 = vmatprep.mubr.bf16.mxu0 0
        %3008 = vmatmul.mubr.bf16.gmra.mxu0 %v2970
        %v3009 = vpop.f32.mrf.mxu0
        %v3010 = vadd.f32 0.0, %v3009
        %v3011 = vpop.f32.mrf.mxu0
        %v3012 = vpop.f32.mrf.mxu0
        %v3013 = vpop.f32.mrf.mxu0
        %3014 = vdwg.mxu0
        %3016 = vrot.lane.b32.xlu0 %v2786, 8
        %v3017 = vpop.permute.xlu0 %3016
        %3020 = vrot.lane.b32.xlu0 %v2898, 16
        %v3021 = vpop.permute.xlu0 %3020
        %3024 = vrot.lane.b32.xlu0 %v3010, 24
        %v3025 = vpop.permute.xlu0 %3024
        %v3027 = vsel %vm854, %v2671, %v3017
        %v3028 = vsel %vm1314, %v3027, %v3021
        %v3029 = vsel %vm1316, %v3028, %v3025
        %v3030 = vpack.c.bf16 %v3029, %v3029
        %s3031 = scalar_lea.vmem %s7, 176
        %v3032 = vld [vmem:[%s3031] sm:$0xf]
        %v3033 = vld [vmem:[%s3031 + $0x4] sm:$0xf]
        %v3034 = vld [vmem:[%s3031 + $0x8] sm:$0xf]
        %v3035 = vld [vmem:[%s3031 + $0xc] sm:$0xf]
        %v3040 = vunpack.c.l.b16 %v3032
        %v3041 = vunpack.c.l.b16 %v3033
        %v3042 = vunpack.c.l.b16 %v3034
        %v3043 = vunpack.c.l.b16 %v3035
        %v3044 = vpack.c.b16 %v3041, %v3040
        %v3045 = vpack.c.b16 %v3043, %v3042
        %v3049 = vsel %vm637, %v3030, 0
        %3051 = vmatprep.subr.bf16.mxu0 0
        %3052 = vmatpush1.bf16.msra.mxu0 0
        %3053 = vmatprep.subr.bf16.mxu0 0
        %3054 = vmatpush1.bf16.msra.mxu0 0
        %3055 = vmatprep.subr.bf16.mxu0 0
        %3056 = vmatpush1.bf16.msra.mxu0 0
        %3057 = vmatprep.subr.bf16.mxu0 0
        %3058 = vmatpush1.bf16.msra.mxu0 0
        %3059 = vmatprep.subr.bf16.mxu0 0
        %3060 = vmatpush1.bf16.msra.mxu0 0
        %3061 = vmatprep.subr.bf16.mxu0 0
        %3062 = vmatpush1.bf16.msra.mxu0 0
        %3063 = vmatprep.subr.bf16.mxu0 0
        %3064 = vmatpush1.bf16.msra.mxu0 %v3045
        %3065 = vmatprep.subr.bf16.mxu0 0
        %3066 = vmatpush1.bf16.msra.mxu0 %v3044
        %3067 = vmatprep.subr.bf16.mxu0 0
        %3068 = vmatpush2.bf16.msra.mxu0 0
        %3069 = vmatprep.subr.bf16.mxu0 0
        %3070 = vmatpush2.bf16.msra.mxu0 0
        %3071 = vmatprep.subr.bf16.mxu0 0
        %3072 = vmatpush2.bf16.msra.mxu0 0
        %3073 = vmatprep.subr.bf16.mxu0 0
        %3074 = vmatpush2.bf16.msra.mxu0 0
        %3075 = vmatprep.subr.bf16.mxu0 0
        %3076 = vmatpush2.bf16.msra.mxu0 0
        %3077 = vmatprep.subr.bf16.mxu0 0
        %3078 = vmatpush2.bf16.msra.mxu0 0
        %3079 = vmatprep.subr.bf16.mxu0 0
        %3080 = vmatpush2.bf16.msra.mxu0 0
        %3081 = vmatprep.subr.bf16.mxu0 0
        %3082 = vmatpush2.bf16.msra.mxu0 0
        %3083 = vmatprep.mubr.bf16.mxu0 0
        %3084 = vmatmul.mubr.bf16.gmra.mxu0 %v3049
        %v3085 = vpop.f32.mrf.mxu0
        %v3086 = vadd.f32 0.0, %v3085
        %v3087 = vpop.f32.mrf.mxu0
        %v3088 = vpop.f32.mrf.mxu0
        %v3089 = vpop.f32.mrf.mxu0
        %3090 = vdwg.mxu0
        %v3091 = vadd.f32 %v2351, %v3086
        %v3092 = vld [vmem:[%s8 + $0x14] sm:$0x1]
        %v3093 = vlaneseq
        %v3094 = vshrl.u32 %v3093, 7
        %v3095 = vsub.s32 0, %v3094
        %v3096 = vrot.slane %v3092, %v3095
        %v3097 = vadd.f32 %v3091, %v3096
        %v3098 = vld [vmem:[%s8 + $0x15] sm:$0x1]
        %v3099 = vld [vmem:[%s8 + $0x16] sm:$0x1]
        %v3100 = vsel %vm637, %v3097, 0.0
        %3101 = vadd.xlane.f32.xlu0 %v3100
        %v3102 = vpop.xlane.xlu0 %3101
        %v3103 = vmul.f32 %v3102, %v641
        %v3104 = vsub.f32 %v3097, %v3103
        %v3105 = vmul.f32 %v3104, %v3104
        %v3106 = vsel %vm637, %v3105, 0.0
        %3107 = vadd.xlane.f32.xlu0 %v3106
        %v3108 = vpop.xlane.xlu0 %3107
        %v3109 = vmul.f32 %v3108, %v641
        %v3110 = vadd.f32 %v3109, 1e-05
        %v3111 = vrsqrt.pop %v3110
        %v3112 = vmul.f32 %v3104, %v3111
        %v3113 = vlaneseq
        %v3114 = vshrl.u32 %v3113, 7
        %v3115 = vsub.s32 0, %v3114
        %v3116 = vrot.slane %v3098, %v3115
        %v3117 = vmul.f32 %v3112, %v3116
        %v3118 = vlaneseq
        %v3119 = vshrl.u32 %v3118, 7
        %v3120 = vsub.s32 0, %v3119
        %v3121 = vrot.slane %v3099, %v3120
        %v3122 = vadd.f32 %v3117, %v3121
        %v3123 = vpack.c.bf16 %v3122, %v3122
        %s3124 = scalar_lea.vmem %s7, 192
        %v3125 = vld [vmem:[%s3124] sm:$0xf]
        %v3126 = vld [vmem:[%s3124 + $0x4] sm:$0xf]
        %v3127 = vld [vmem:[%s3124 + $0x8] sm:$0xf]
        %v3128 = vld [vmem:[%s3124 + $0xc] sm:$0xf]
        %v3129 = vld [vmem:[%s8 + $0x17] sm:$0x1]
        %v3130 = vlaneseq
        %v3131 = vshrl.u32 %v3130, 7
        %v3132 = vsub.s32 0, %v3131
        %v3133 = vrot.slane %v3129, %v3132
        %v3138 = vunpack.c.l.b16 %v3125
        %v3139 = vunpack.c.l.b16 %v3126
        %v3140 = vunpack.c.l.b16 %v3127
        %v3141 = vunpack.c.l.b16 %v3128
        %v3142 = vpack.c.b16 %v3139, %v3138
        %v3143 = vpack.c.b16 %v3141, %v3140
        %v3147 = vsel %vm637, %v3123, 0
        %3149 = vmatprep.subr.bf16.mxu0 0
        %3150 = vmatpush1.bf16.msra.mxu0 0
        %3151 = vmatprep.subr.bf16.mxu0 0
        %3152 = vmatpush1.bf16.msra.mxu0 0
        %3153 = vmatprep.subr.bf16.mxu0 0
        %3154 = vmatpush1.bf16.msra.mxu0 0
        %3155 = vmatprep.subr.bf16.mxu0 0
        %3156 = vmatpush1.bf16.msra.mxu0 0
        %3157 = vmatprep.subr.bf16.mxu0 0
        %3158 = vmatpush1.bf16.msra.mxu0 0
        %3159 = vmatprep.subr.bf16.mxu0 0
        %3160 = vmatpush1.bf16.msra.mxu0 0
        %3161 = vmatprep.subr.bf16.mxu0 0
        %3162 = vmatpush1.bf16.msra.mxu0 %v3143
        %3163 = vmatprep.subr.bf16.mxu0 0
        %3164 = vmatpush1.bf16.msra.mxu0 %v3142
        %3165 = vmatprep.subr.bf16.mxu0 0
        %3166 = vmatpush2.bf16.msra.mxu0 0
        %3167 = vmatprep.subr.bf16.mxu0 0
        %3168 = vmatpush2.bf16.msra.mxu0 0
        %3169 = vmatprep.subr.bf16.mxu0 0
        %3170 = vmatpush2.bf16.msra.mxu0 0
        %3171 = vmatprep.subr.bf16.mxu0 0
        %3172 = vmatpush2.bf16.msra.mxu0 0
        %3173 = vmatprep.subr.bf16.mxu0 0
        %3174 = vmatpush2.bf16.msra.mxu0 0
        %3175 = vmatprep.subr.bf16.mxu0 0
        %3176 = vmatpush2.bf16.msra.mxu0 0
        %3177 = vmatprep.subr.bf16.mxu0 0
        %3178 = vmatpush2.bf16.msra.mxu0 0
        %3179 = vmatprep.subr.bf16.mxu0 0
        %3180 = vmatpush2.bf16.msra.mxu0 0
        %3181 = vmatprep.mubr.bf16.mxu0 0
        %3182 = vmatmul.mubr.bf16.gmra.mxu0 %v3147
        %v3183 = vpop.f32.mrf.mxu0
        %v3184 = vadd.f32 %v3133, %v3183
        %v3185 = vpop.f32.mrf.mxu0
        %v3186 = vpop.f32.mrf.mxu0
        %v3187 = vpop.f32.mrf.mxu0
        %3188 = vdwg.mxu0
        %s3189 = scalar_lea.vmem %s7, 208
        %v3190 = vld [vmem:[%s3189] sm:$0xf]
        %v3191 = vld [vmem:[%s3189 + $0x4] sm:$0xf]
        %v3192 = vld [vmem:[%s3189 + $0x8] sm:$0xf]
        %v3193 = vld [vmem:[%s3189 + $0xc] sm:$0xf]
        %v3194 = vld [vmem:[%s8 + $0x18] sm:$0x1]
        %v3195 = vlaneseq
        %v3196 = vshrl.u32 %v3195, 7
        %v3197 = vsub.s32 0, %v3196
        %v3198 = vrot.slane %v3194, %v3197
        %v3203 = vunpack.c.l.b16 %v3190
        %v3204 = vunpack.c.l.b16 %v3191
        %v3205 = vunpack.c.l.b16 %v3192
        %v3206 = vunpack.c.l.b16 %v3193
        %v3207 = vpack.c.b16 %v3204, %v3203
        %v3208 = vpack.c.b16 %v3206, %v3205
        %3211 = vmatprep.subr.bf16.mxu0 0
        %3212 = vmatpush1.bf16.msra.mxu0 0
        %3213 = vmatprep.subr.bf16.mxu0 0
        %3214 = vmatpush1.bf16.msra.mxu0 0
        %3215 = vmatprep.subr.bf16.mxu0 0
        %3216 = vmatpush1.bf16.msra.mxu0 0
        %3217 = vmatprep.subr.bf16.mxu0 0
        %3218 = vmatpush1.bf16.msra.mxu0 0
        %3219 = vmatprep.subr.bf16.mxu0 0
        %3220 = vmatpush1.bf16.msra.mxu0 0
        %3221 = vmatprep.subr.bf16.mxu0 0
        %3222 = vmatpush1.bf16.msra.mxu0 0
        %3223 = vmatprep.subr.bf16.mxu0 0
        %3224 = vmatpush1.bf16.msra.mxu0 %v3208
        %3225 = vmatprep.subr.bf16.mxu0 0
        %3226 = vmatpush1.bf16.msra.mxu0 %v3207
        %3227 = vmatprep.subr.bf16.mxu0 0
        %3228 = vmatpush2.bf16.msra.mxu0 0
        %3229 = vmatprep.subr.bf16.mxu0 0
        %3230 = vmatpush2.bf16.msra.mxu0 0
        %3231 = vmatprep.subr.bf16.mxu0 0
        %3232 = vmatpush2.bf16.msra.mxu0 0
        %3233 = vmatprep.subr.bf16.mxu0 0
        %3234 = vmatpush2.bf16.msra.mxu0 0
        %3235 = vmatprep.subr.bf16.mxu0 0
        %3236 = vmatpush2.bf16.msra.mxu0 0
        %3237 = vmatprep.subr.bf16.mxu0 0
        %3238 = vmatpush2.bf16.msra.mxu0 0
        %3239 = vmatprep.subr.bf16.mxu0 0
        %3240 = vmatpush2.bf16.msra.mxu0 0
        %3241 = vmatprep.subr.bf16.mxu0 0
        %3242 = vmatpush2.bf16.msra.mxu0 0
        %3243 = vmatprep.mubr.bf16.mxu0 0
        %3244 = vmatmul.mubr.bf16.gmra.mxu0 %v1500
        %v3245 = vpop.f32.mrf.mxu0
        %v3246 = vadd.f32 %v3198, %v3245
        %v3247 = vpop.f32.mrf.mxu0
        %v3248 = vpop.f32.mrf.mxu0
        %v3249 = vpop.f32.mrf.mxu0
        %3250 = vdwg.mxu0
        %s3251 = scalar_lea.vmem %s7, 224
        %v3252 = vld [vmem:[%s3251] sm:$0xf]
        %v3253 = vld [vmem:[%s3251 + $0x4] sm:$0xf]
        %v3254 = vld [vmem:[%s3251 + $0x8] sm:$0xf]
        %v3255 = vld [vmem:[%s3251 + $0xc] sm:$0xf]
        %v3256 = vld [vmem:[%s8 + $0x19] sm:$0x1]
        %v3257 = vlaneseq
        %v3258 = vshrl.u32 %v3257, 7
        %v3259 = vsub.s32 0, %v3258
        %v3260 = vrot.slane %v3256, %v3259
        %v3265 = vunpack.c.l.b16 %v3252
        %v3266 = vunpack.c.l.b16 %v3253
        %v3267 = vunpack.c.l.b16 %v3254
        %v3268 = vunpack.c.l.b16 %v3255
        %v3269 = vpack.c.b16 %v3266, %v3265
        %v3270 = vpack.c.b16 %v3268, %v3267
        %3273 = vmatprep.subr.bf16.mxu0 0
        %3274 = vmatpush1.bf16.msra.mxu0 0
        %3275 = vmatprep.subr.bf16.mxu0 0
        %3276 = vmatpush1.bf16.msra.mxu0 0
        %3277 = vmatprep.subr.bf16.mxu0 0
        %3278 = vmatpush1.bf16.msra.mxu0 0
        %3279 = vmatprep.subr.bf16.mxu0 0
        %3280 = vmatpush1.bf16.msra.mxu0 0
        %3281 = vmatprep.subr.bf16.mxu0 0
        %3282 = vmatpush1.bf16.msra.mxu0 0
        %3283 = vmatprep.subr.bf16.mxu0 0
        %3284 = vmatpush1.bf16.msra.mxu0 0
        %3285 = vmatprep.subr.bf16.mxu0 0
        %3286 = vmatpush1.bf16.msra.mxu0 %v3270
        %3287 = vmatprep.subr.bf16.mxu0 0
        %3288 = vmatpush1.bf16.msra.mxu0 %v3269
        %3289 = vmatprep.subr.bf16.mxu0 0
        %3290 = vmatpush2.bf16.msra.mxu0 0
        %3291 = vmatprep.subr.bf16.mxu0 0
        %3292 = vmatpush2.bf16.msra.mxu0 0
        %3293 = vmatprep.subr.bf16.mxu0 0
        %3294 = vmatpush2.bf16.msra.mxu0 0
        %3295 = vmatprep.subr.bf16.mxu0 0
        %3296 = vmatpush2.bf16.msra.mxu0 0
        %3297 = vmatprep.subr.bf16.mxu0 0
        %3298 = vmatpush2.bf16.msra.mxu0 0
        %3299 = vmatprep.subr.bf16.mxu0 0
        %3300 = vmatpush2.bf16.msra.mxu0 0
        %3301 = vmatprep.subr.bf16.mxu0 0
        %3302 = vmatpush2.bf16.msra.mxu0 0
        %3303 = vmatprep.subr.bf16.mxu0 0
        %3304 = vmatpush2.bf16.msra.mxu0 0
        %3305 = vmatprep.mubr.bf16.mxu0 0
        %3306 = vmatmul.mubr.bf16.gmra.mxu0 %v1500
        %v3307 = vpop.f32.mrf.mxu0
        %v3308 = vadd.f32 %v3260, %v3307
        %v3309 = vpop.f32.mrf.mxu0
        %v3310 = vpop.f32.mrf.mxu0
        %v3311 = vpop.f32.mrf.mxu0
        %3312 = vdwg.mxu0
        %v3313 = vpack.c.bf16 %v3184, %v3184
        %v3314 = vpack.c.bf16 %v3246, %v3246
        %v3315 = vpack.c.bf16 %v3308, %v3308
        %v3317 = vsel %vm854, %v3313, 0
        %v3320 = vsel %vm854, %v3314, 0
        %3322 = vmatprep.subr.bf16.mxu0 0
        %3323 = vmatpush1.bf16.xpose.msra.mxu0 0
        %3324 = vmatprep.subr.bf16.mxu0 0
        %3325 = vmatpush1.bf16.xpose.msra.mxu0 0
        %3326 = vmatprep.subr.bf16.mxu0 0
        %3327 = vmatpush1.bf16.xpose.msra.mxu0 0
        %3328 = vmatprep.subr.bf16.mxu0 0
        %3329 = vmatpush1.bf16.xpose.msra.mxu0 0
        %3330 = vmatprep.subr.bf16.mxu0 0
        %3331 = vmatpush1.bf16.xpose.msra.mxu0 0
        %3332 = vmatprep.subr.bf16.mxu0 0
        %3333 = vmatpush1.bf16.xpose.msra.mxu0 0
        %3334 = vmatprep.subr.bf16.mxu0 0
        %3335 = vmatpush1.bf16.xpose.msra.mxu0 0
        %3336 = vmatprep.subr.bf16.mxu0 0
        %3337 = vmatpush1.bf16.xpose.msra.mxu0 %v3320
        %3338 = vmatprep.subr.bf16.mxu0 0
        %3339 = vmatpush2.bf16.xpose.msra.mxu0 0
        %3340 = vmatprep.subr.bf16.mxu0 0
        %3341 = vmatpush2.bf16.xpose.msra.mxu0 0
        %3342 = vmatprep.subr.bf16.mxu0 0
        %3343 = vmatpush2.bf16.xpose.msra.mxu0 0
        %3344 = vmatprep.subr.bf16.mxu0 0
        %3345 = vmatpush2.bf16.xpose.msra.mxu0 0
        %3346 = vmatprep.subr.bf16.mxu0 0
        %3347 = vmatpush2.bf16.xpose.msra.mxu0 0
        %3348 = vmatprep.subr.bf16.mxu0 0
        %3349 = vmatpush2.bf16.xpose.msra.mxu0 0
        %3350 = vmatprep.subr.bf16.mxu0 0
        %3351 = vmatpush2.bf16.xpose.msra.mxu0 0
        %3352 = vmatprep.subr.bf16.mxu0 0
        %3353 = vmatpush2.bf16.xpose.msra.mxu0 0
        %3354 = vmatprep.mubr.bf16.mxu0 0
        %3355 = vmatmul.mubr.bf16.gmra.mxu0 %v3317
        %v3356 = vpop.f32.mrf.mxu0
        %v3357 = vadd.f32 0.0, %v3356
        %v3358 = vpop.f32.mrf.mxu0
        %v3359 = vpop.f32.mrf.mxu0
        %v3360 = vpop.f32.mrf.mxu0
        %3361 = vdwg.mxu0
        %v3362 = vmul.f32 %v3357, 0.35355338
        %v3363 = vadd.f32 %v3362, %v1658
        %v3364 = vsel %vm854, %v3363, -inf
        %3365 = vmax.xlane.f32.xlu0 %v3364
        %v3366 = vpop.xlane.xlu0 %3365
        %v3367 = vsub.f32 %v3363, %v3366
        %v3368 = vmul.f32 %v3367, 1.442695
        %v3369 = vpow.pop %v3368
        %v3370 = vsel %vm854, %v3369, 0.0
        %3371 = vadd.xlane.f32.xlu0 %v3370
        %v3372 = vpop.xlane.xlu0 %3371
        %v3373 = vrcp.pop %v3372
        %v3374 = vmul.f32 %v3369, %v3373
        %v3375 = vpack.c.bf16 %v3374, %v3374
        %v3377 = vsel %vm854, %v3375, 0
        %v3380 = vsel %vm918, %v3315, 0
        %3382 = vmatprep.subr.bf16.mxu0 0
        %3383 = vmatpush1.bf16.msra.mxu0 0
        %3384 = vmatprep.subr.bf16.mxu0 0
        %3385 = vmatpush1.bf16.msra.mxu0 0
        %3386 = vmatprep.subr.bf16.mxu0 0
        %3387 = vmatpush1.bf16.msra.mxu0 0
        %3388 = vmatprep.subr.bf16.mxu0 0
        %3389 = vmatpush1.bf16.msra.mxu0 0
        %3390 = vmatprep.subr.bf16.mxu0 0
        %3391 = vmatpush1.bf16.msra.mxu0 0
        %3392 = vmatprep.subr.bf16.mxu0 0
        %3393 = vmatpush1.bf16.msra.mxu0 0
        %3394 = vmatprep.subr.bf16.mxu0 0
        %3395 = vmatpush1.bf16.msra.mxu0 0
        %3396 = vmatprep.subr.bf16.mxu0 0
        %3397 = vmatpush1.bf16.msra.mxu0 %v3380
        %3398 = vmatprep.subr.bf16.mxu0 0
        %3399 = vmatpush2.bf16.msra.mxu0 0
        %3400 = vmatprep.subr.bf16.mxu0 0
        %3401 = vmatpush2.bf16.msra.mxu0 0
        %3402 = vmatprep.subr.bf16.mxu0 0
        %3403 = vmatpush2.bf16.msra.mxu0 0
        %3404 = vmatprep.subr.bf16.mxu0 0
        %3405 = vmatpush2.bf16.msra.mxu0 0
        %3406 = vmatprep.subr.bf16.mxu0 0
        %3407 = vmatpush2.bf16.msra.mxu0 0
        %3408 = vmatprep.subr.bf16.mxu0 0
        %3409 = vmatpush2.bf16.msra.mxu0 0
        %3410 = vmatprep.subr.bf16.mxu0 0
        %3411 = vmatpush2.bf16.msra.mxu0 0
        %3412 = vmatprep.subr.bf16.mxu0 0
        %3413 = vmatpush2.bf16.msra.mxu0 0
        %3414 = vmatprep.mubr.bf16.mxu0 0
        %3415 = vmatmul.mubr.bf16.gmra.mxu0 %v3377
        %v3416 = vpop.f32.mrf.mxu0
        %v3417 = vadd.f32 0.0, %v3416
        %v3418 = vpop.f32.mrf.mxu0
        %v3419 = vpop.f32.mrf.mxu0
        %v3420 = vpop.f32.mrf.mxu0
        %3421 = vdwg.mxu0
        %3423 = vrot.lane.b32.xlu0 %v3313, 120
        %v3424 = vpop.permute.xlu0 %3423
        %3426 = vrot.lane.b32.xlu0 %v3314, 120
        %v3427 = vpop.permute.xlu0 %3426
        %v3429 = vsel %vm854, %v3424, 0
        %v3432 = vsel %vm854, %v3427, 0
        %3434 = vmatprep.subr.bf16.mxu0 0
        %3435 = vmatpush1.bf16.xpose.msra.mxu0 0
        %3436 = vmatprep.subr.bf16.mxu0 0
        %3437 = vmatpush1.bf16.xpose.msra.mxu0 0
        %3438 = vmatprep.subr.bf16.mxu0 0
        %3439 = vmatpush1.bf16.xpose.msra.mxu0 0
        %3440 = vmatprep.subr.bf16.mxu0 0
        %3441 = vmatpush1.bf16.xpose.msra.mxu0 0
        %3442 = vmatprep.subr.bf16.mxu0 0
        %3443 = vmatpush1.bf16.xpose.msra.mxu0 0
        %3444 = vmatprep.subr.bf16.mxu0 0
        %3445 = vmatpush1.bf16.xpose.msra.mxu0 0
        %3446 = vmatprep.subr.bf16.mxu0 0
        %3447 = vmatpush1.bf16.xpose.msra.mxu0 0
        %3448 = vmatprep.subr.bf16.mxu0 0
        %3449 = vmatpush1.bf16.xpose.msra.mxu0 %v3432
        %3450 = vmatprep.subr.bf16.mxu0 0
        %3451 = vmatpush2.bf16.xpose.msra.mxu0 0
        %3452 = vmatprep.subr.bf16.mxu0 0
        %3453 = vmatpush2.bf16.xpose.msra.mxu0 0
        %3454 = vmatprep.subr.bf16.mxu0 0
        %3455 = vmatpush2.bf16.xpose.msra.mxu0 0
        %3456 = vmatprep.subr.bf16.mxu0 0
        %3457 = vmatpush2.bf16.xpose.msra.mxu0 0
        %3458 = vmatprep.subr.bf16.mxu0 0
        %3459 = vmatpush2.bf16.xpose.msra.mxu0 0
        %3460 = vmatprep.subr.bf16.mxu0 0
        %3461 = vmatpush2.bf16.xpose.msra.mxu0 0
        %3462 = vmatprep.subr.bf16.mxu0 0
        %3463 = vmatpush2.bf16.xpose.msra.mxu0 0
        %3464 = vmatprep.subr.bf16.mxu0 0
        %3465 = vmatpush2.bf16.xpose.msra.mxu0 0
        %3466 = vmatprep.mubr.bf16.mxu0 0
        %3467 = vmatmul.mubr.bf16.gmra.mxu0 %v3429
        %v3468 = vpop.f32.mrf.mxu0
        %v3469 = vadd.f32 0.0, %v3468
        %v3470 = vpop.f32.mrf.mxu0
        %v3471 = vpop.f32.mrf.mxu0
        %v3472 = vpop.f32.mrf.mxu0
        %3473 = vdwg.mxu0
        %v3474 = vmul.f32 %v3469, 0.35355338
        %v3475 = vadd.f32 %v3474, %v1658
        %v3476 = vsel %vm854, %v3475, -inf
        %3477 = vmax.xlane.f32.xlu0 %v3476
        %v3478 = vpop.xlane.xlu0 %3477
        %v3479 = vsub.f32 %v3475, %v3478
        %v3480 = vmul.f32 %v3479, 1.442695
        %v3481 = vpow.pop %v3480
        %v3482 = vsel %vm854, %v3481, 0.0
        %3483 = vadd.xlane.f32.xlu0 %v3482
        %v3484 = vpop.xlane.xlu0 %3483
        %v3485 = vrcp.pop %v3484
        %v3486 = vmul.f32 %v3481, %v3485
        %v3487 = vpack.c.bf16 %v3486, %v3486
        %3489 = vrot.lane.b32.xlu0 %v3315, 120
        %v3490 = vpop.permute.xlu0 %3489
        %v3492 = vsel %vm854, %v3487, 0
        %v3495 = vsel %vm918, %v3490, 0
        %3497 = vmatprep.subr.bf16.mxu0 0
        %3498 = vmatpush1.bf16.msra.mxu0 0
        %3499 = vmatprep.subr.bf16.mxu0 0
        %3500 = vmatpush1.bf16.msra.mxu0 0
        %3501 = vmatprep.subr.bf16.mxu0 0
        %3502 = vmatpush1.bf16.msra.mxu0 0
        %3503 = vmatprep.subr.bf16.mxu0 0
        %3504 = vmatpush1.bf16.msra.mxu0 0
        %3505 = vmatprep.subr.bf16.mxu0 0
        %3506 = vmatpush1.bf16.msra.mxu0 0
        %3507 = vmatprep.subr.bf16.mxu0 0
        %3508 = vmatpush1.bf16.msra.mxu0 0
        %3509 = vmatprep.subr.bf16.mxu0 0
        %3510 = vmatpush1.bf16.msra.mxu0 0
        %3511 = vmatprep.subr.bf16.mxu0 0
        %3512 = vmatpush1.bf16.msra.mxu0 %v3495
        %3513 = vmatprep.subr.bf16.mxu0 0
        %3514 = vmatpush2.bf16.msra.mxu0 0
        %3515 = vmatprep.subr.bf16.mxu0 0
        %3516 = vmatpush2.bf16.msra.mxu0 0
        %3517 = vmatprep.subr.bf16.mxu0 0
        %3518 = vmatpush2.bf16.msra.mxu0 0
        %3519 = vmatprep.subr.bf16.mxu0 0
        %3520 = vmatpush2.bf16.msra.mxu0 0
        %3521 = vmatprep.subr.bf16.mxu0 0
        %3522 = vmatpush2.bf16.msra.mxu0 0
        %3523 = vmatprep.subr.bf16.mxu0 0
        %3524 = vmatpush2.bf16.msra.mxu0 0
        %3525 = vmatprep.subr.bf16.mxu0 0
        %3526 = vmatpush2.bf16.msra.mxu0 0
        %3527 = vmatprep.subr.bf16.mxu0 0
        %3528 = vmatpush2.bf16.msra.mxu0 0
        %3529 = vmatprep.mubr.bf16.mxu0 0
        %3530 = vmatmul.mubr.bf16.gmra.mxu0 %v3492
        %v3531 = vpop.f32.mrf.mxu0
        %v3532 = vadd.f32 0.0, %v3531
        %v3533 = vpop.f32.mrf.mxu0
        %v3534 = vpop.f32.mrf.mxu0
        %v3535 = vpop.f32.mrf.mxu0
        %3536 = vdwg.mxu0
        %3537 = vrot.lane.b32.xlu0 %v3313, 112
        %v3538 = vpop.permute.xlu0 %3537
        %3539 = vrot.lane.b32.xlu0 %v3314, 112
        %v3540 = vpop.permute.xlu0 %3539
        %v3542 = vsel %vm854, %v3538, 0
        %v3545 = vsel %vm854, %v3540, 0
        %3547 = vmatprep.subr.bf16.mxu0 0
        %3548 = vmatpush1.bf16.xpose.msra.mxu0 0
        %3549 = vmatprep.subr.bf16.mxu0 0
        %3550 = vmatpush1.bf16.xpose.msra.mxu0 0
        %3551 = vmatprep.subr.bf16.mxu0 0
        %3552 = vmatpush1.bf16.xpose.msra.mxu0 0
        %3553 = vmatprep.subr.bf16.mxu0 0
        %3554 = vmatpush1.bf16.xpose.msra.mxu0 0
        %3555 = vmatprep.subr.bf16.mxu0 0
        %3556 = vmatpush1.bf16.xpose.msra.mxu0 0
        %3557 = vmatprep.subr.bf16.mxu0 0
        %3558 = vmatpush1.bf16.xpose.msra.mxu0 0
        %3559 = vmatprep.subr.bf16.mxu0 0
        %3560 = vmatpush1.bf16.xpose.msra.mxu0 0
        %3561 = vmatprep.subr.bf16.mxu0 0
        %3562 = vmatpush1.bf16.xpose.msra.mxu0 %v3545
        %3563 = vmatprep.subr.bf16.mxu0 0
        %3564 = vmatpush2.bf16.xpose.msra.mxu0 0
        %3565 = vmatprep.subr.bf16.mxu0 0
        %3566 = vmatpush2.bf16.xpose.msra.mxu0 0
        %3567 = vmatprep.subr.bf16.mxu0 0
        %3568 = vmatpush2.bf16.xpose.msra.mxu0 0
        %3569 = vmatprep.subr.bf16.mxu0 0
        %3570 = vmatpush2.bf16.xpose.msra.mxu0 0
        %3571 = vmatprep.subr.bf16.mxu0 0
        %3572 = vmatpush2.bf16.xpose.msra.mxu0 0
        %3573 = vmatprep.subr.bf16.mxu0 0
        %3574 = vmatpush2.bf16.xpose.msra.mxu0 0
        %3575 = vmatprep.subr.bf16.mxu0 0
        %3576 = vmatpush2.bf16.xpose.msra.mxu0 0
        %3577 = vmatprep.subr.bf16.mxu0 0
        %3578 = vmatpush2.bf16.xpose.msra.mxu0 0
        %3579 = vmatprep.mubr.bf16.mxu0 0
        %3580 = vmatmul.mubr.bf16.gmra.mxu0 %v3542
        %v3581 = vpop.f32.mrf.mxu0
        %v3582 = vadd.f32 0.0, %v3581
        %v3583 = vpop.f32.mrf.mxu0
        %v3584 = vpop.f32.mrf.mxu0
        %v3585 = vpop.f32.mrf.mxu0
        %3586 = vdwg.mxu0
        %v3587 = vmul.f32 %v3582, 0.35355338
        %v3588 = vadd.f32 %v3587, %v1658
        %v3589 = vsel %vm854, %v3588, -inf
        %3590 = vmax.xlane.f32.xlu0 %v3589
        %v3591 = vpop.xlane.xlu0 %3590
        %v3592 = vsub.f32 %v3588, %v3591
        %v3593 = vmul.f32 %v3592, 1.442695
        %v3594 = vpow.pop %v3593
        %v3595 = vsel %vm854, %v3594, 0.0
        %3596 = vadd.xlane.f32.xlu0 %v3595
        %v3597 = vpop.xlane.xlu0 %3596
        %v3598 = vrcp.pop %v3597
        %v3599 = vmul.f32 %v3594, %v3598
        %v3600 = vpack.c.bf16 %v3599, %v3599
        %3601 = vrot.lane.b32.xlu0 %v3315, 112
        %v3602 = vpop.permute.xlu0 %3601
        %v3604 = vsel %vm854, %v3600, 0
        %v3607 = vsel %vm918, %v3602, 0
        %3609 = vmatprep.subr.bf16.mxu0 0
        %3610 = vmatpush1.bf16.msra.mxu0 0
        %3611 = vmatprep.subr.bf16.mxu0 0
        %3612 = vmatpush1.bf16.msra.mxu0 0
        %3613 = vmatprep.subr.bf16.mxu0 0
        %3614 = vmatpush1.bf16.msra.mxu0 0
        %3615 = vmatprep.subr.bf16.mxu0 0
        %3616 = vmatpush1.bf16.msra.mxu0 0
        %3617 = vmatprep.subr.bf16.mxu0 0
        %3618 = vmatpush1.bf16.msra.mxu0 0
        %3619 = vmatprep.subr.bf16.mxu0 0
        %3620 = vmatpush1.bf16.msra.mxu0 0
        %3621 = vmatprep.subr.bf16.mxu0 0
        %3622 = vmatpush1.bf16.msra.mxu0 0
        %3623 = vmatprep.subr.bf16.mxu0 0
        %3624 = vmatpush1.bf16.msra.mxu0 %v3607
        %3625 = vmatprep.subr.bf16.mxu0 0
        %3626 = vmatpush2.bf16.msra.mxu0 0
        %3627 = vmatprep.subr.bf16.mxu0 0
        %3628 = vmatpush2.bf16.msra.mxu0 0
        %3629 = vmatprep.subr.bf16.mxu0 0
        %3630 = vmatpush2.bf16.msra.mxu0 0
        %3631 = vmatprep.subr.bf16.mxu0 0
        %3632 = vmatpush2.bf16.msra.mxu0 0
        %3633 = vmatprep.subr.bf16.mxu0 0
        %3634 = vmatpush2.bf16.msra.mxu0 0
        %3635 = vmatprep.subr.bf16.mxu0 0
        %3636 = vmatpush2.bf16.msra.mxu0 0
        %3637 = vmatprep.subr.bf16.mxu0 0
        %3638 = vmatpush2.bf16.msra.mxu0 0
        %3639 = vmatprep.subr.bf16.mxu0 0
        %3640 = vmatpush2.bf16.msra.mxu0 0
        %3641 = vmatprep.mubr.bf16.mxu0 0
        %3642 = vmatmul.mubr.bf16.gmra.mxu0 %v3604
        %v3643 = vpop.f32.mrf.mxu0
        %v3644 = vadd.f32 0.0, %v3643
        %v3645 = vpop.f32.mrf.mxu0
        %v3646 = vpop.f32.mrf.mxu0
        %v3647 = vpop.f32.mrf.mxu0
        %3648 = vdwg.mxu0
        %3649 = vrot.lane.b32.xlu0 %v3313, 104
        %v3650 = vpop.permute.xlu0 %3649
        %3651 = vrot.lane.b32.xlu0 %v3314, 104
        %v3652 = vpop.permute.xlu0 %3651
        %v3654 = vsel %vm854, %v3650, 0
        %v3657 = vsel %vm854, %v3652, 0
        %3659 = vmatprep.subr.bf16.mxu0 0
        %3660 = vmatpush1.bf16.xpose.msra.mxu0 0
        %3661 = vmatprep.subr.bf16.mxu0 0
        %3662 = vmatpush1.bf16.xpose.msra.mxu0 0
        %3663 = vmatprep.subr.bf16.mxu0 0
        %3664 = vmatpush1.bf16.xpose.msra.mxu0 0
        %3665 = vmatprep.subr.bf16.mxu0 0
        %3666 = vmatpush1.bf16.xpose.msra.mxu0 0
        %3667 = vmatprep.subr.bf16.mxu0 0
        %3668 = vmatpush1.bf16.xpose.msra.mxu0 0
        %3669 = vmatprep.subr.bf16.mxu0 0
        %3670 = vmatpush1.bf16.xpose.msra.mxu0 0
        %3671 = vmatprep.subr.bf16.mxu0 0
        %3672 = vmatpush1.bf16.xpose.msra.mxu0 0
        %3673 = vmatprep.subr.bf16.mxu0 0
        %3674 = vmatpush1.bf16.xpose.msra.mxu0 %v3657
        %3675 = vmatprep.subr.bf16.mxu0 0
        %3676 = vmatpush2.bf16.xpose.msra.mxu0 0
        %3677 = vmatprep.subr.bf16.mxu0 0
        %3678 = vmatpush2.bf16.xpose.msra.mxu0 0
        %3679 = vmatprep.subr.bf16.mxu0 0
        %3680 = vmatpush2.bf16.xpose.msra.mxu0 0
        %3681 = vmatprep.subr.bf16.mxu0 0
        %3682 = vmatpush2.bf16.xpose.msra.mxu0 0
        %3683 = vmatprep.subr.bf16.mxu0 0
        %3684 = vmatpush2.bf16.xpose.msra.mxu0 0
        %3685 = vmatprep.subr.bf16.mxu0 0
        %3686 = vmatpush2.bf16.xpose.msra.mxu0 0
        %3687 = vmatprep.subr.bf16.mxu0 0
        %3688 = vmatpush2.bf16.xpose.msra.mxu0 0
        %3689 = vmatprep.subr.bf16.mxu0 0
        %3690 = vmatpush2.bf16.xpose.msra.mxu0 0
        %3691 = vmatprep.mubr.bf16.mxu0 0
        %3692 = vmatmul.mubr.bf16.gmra.mxu0 %v3654
        %v3693 = vpop.f32.mrf.mxu0
        %v3694 = vadd.f32 0.0, %v3693
        %v3695 = vpop.f32.mrf.mxu0
        %v3696 = vpop.f32.mrf.mxu0
        %v3697 = vpop.f32.mrf.mxu0
        %3698 = vdwg.mxu0
        %v3699 = vmul.f32 %v3694, 0.35355338
        %v3700 = vadd.f32 %v3699, %v1658
        %v3701 = vsel %vm854, %v3700, -inf
        %3702 = vmax.xlane.f32.xlu0 %v3701
        %v3703 = vpop.xlane.xlu0 %3702
        %v3704 = vsub.f32 %v3700, %v3703
        %v3705 = vmul.f32 %v3704, 1.442695
        %v3706 = vpow.pop %v3705
        %v3707 = vsel %vm854, %v3706, 0.0
        %3708 = vadd.xlane.f32.xlu0 %v3707
        %v3709 = vpop.xlane.xlu0 %3708
        %v3710 = vrcp.pop %v3709
        %v3711 = vmul.f32 %v3706, %v3710
        %v3712 = vpack.c.bf16 %v3711, %v3711
        %3713 = vrot.lane.b32.xlu0 %v3315, 104
        %v3714 = vpop.permute.xlu0 %3713
        %v3716 = vsel %vm854, %v3712, 0
        %v3719 = vsel %vm918, %v3714, 0
        %3721 = vmatprep.subr.bf16.mxu0 0
        %3722 = vmatpush1.bf16.msra.mxu0 0
        %3723 = vmatprep.subr.bf16.mxu0 0
        %3724 = vmatpush1.bf16.msra.mxu0 0
        %3725 = vmatprep.subr.bf16.mxu0 0
        %3726 = vmatpush1.bf16.msra.mxu0 0
        %3727 = vmatprep.subr.bf16.mxu0 0
        %3728 = vmatpush1.bf16.msra.mxu0 0
        %3729 = vmatprep.subr.bf16.mxu0 0
        %3730 = vmatpush1.bf16.msra.mxu0 0
        %3731 = vmatprep.subr.bf16.mxu0 0
        %3732 = vmatpush1.bf16.msra.mxu0 0
        %3733 = vmatprep.subr.bf16.mxu0 0
        %3734 = vmatpush1.bf16.msra.mxu0 0
        %3735 = vmatprep.subr.bf16.mxu0 0
        %3736 = vmatpush1.bf16.msra.mxu0 %v3719
        %3737 = vmatprep.subr.bf16.mxu0 0
        %3738 = vmatpush2.bf16.msra.mxu0 0
        %3739 = vmatprep.subr.bf16.mxu0 0
        %3740 = vmatpush2.bf16.msra.mxu0 0
        %3741 = vmatprep.subr.bf16.mxu0 0
        %3742 = vmatpush2.bf16.msra.mxu0 0
        %3743 = vmatprep.subr.bf16.mxu0 0
        %3744 = vmatpush2.bf16.msra.mxu0 0
        %3745 = vmatprep.subr.bf16.mxu0 0
        %3746 = vmatpush2.bf16.msra.mxu0 0
        %3747 = vmatprep.subr.bf16.mxu0 0
        %3748 = vmatpush2.bf16.msra.mxu0 0
        %3749 = vmatprep.subr.bf16.mxu0 0
        %3750 = vmatpush2.bf16.msra.mxu0 0
        %3751 = vmatprep.subr.bf16.mxu0 0
        %3752 = vmatpush2.bf16.msra.mxu0 0
        %3753 = vmatprep.mubr.bf16.mxu0 0
        %3754 = vmatmul.mubr.bf16.gmra.mxu0 %v3716
        %v3755 = vpop.f32.mrf.mxu0
        %v3756 = vadd.f32 0.0, %v3755
        %v3757 = vpop.f32.mrf.mxu0
        %v3758 = vpop.f32.mrf.mxu0
        %v3759 = vpop.f32.mrf.mxu0
        %3760 = vdwg.mxu0
        %3762 = vrot.lane.b32.xlu0 %v3532, 8
        %v3763 = vpop.permute.xlu0 %3762
        %3766 = vrot.lane.b32.xlu0 %v3644, 16
        %v3767 = vpop.permute.xlu0 %3766
        %3770 = vrot.lane.b32.xlu0 %v3756, 24
        %v3771 = vpop.permute.xlu0 %3770
        %v3773 = vsel %vm854, %v3417, %v3763
        %v3774 = vsel %vm1314, %v3773, %v3767
        %v3775 = vsel %vm1316, %v3774, %v3771
        %v3776 = vpack.c.bf16 %v3775, %v3775
        %s3777 = scalar_lea.vmem %s7, 240
        %v3778 = vld [vmem:[%s3777] sm:$0xf]
        %v3779 = vld [vmem:[%s3777 + $0x4] sm:$0xf]
        %v3780 = vld [vmem:[%s3777 + $0x8] sm:$0xf]
        %v3781 = vld [vmem:[%s3777 + $0xc] sm:$0xf]
        %v3786 = vunpack.c.l.b16 %v3778
        %v3787 = vunpack.c.l.b16 %v3779
        %v3788 = vunpack.c.l.b16 %v3780
        %v3789 = vunpack.c.l.b16 %v3781
        %v3790 = vpack.c.b16 %v3787, %v3786
        %v3791 = vpack.c.b16 %v3789, %v3788
        %v3795 = vsel %vm637, %v3776, 0
        %3797 = vmatprep.subr.bf16.mxu0 0
        %3798 = vmatpush1.bf16.msra.mxu0 0
        %3799 = vmatprep.subr.bf16.mxu0 0
        %3800 = vmatpush1.bf16.msra.mxu0 0
        %3801 = vmatprep.subr.bf16.mxu0 0
        %3802 = vmatpush1.bf16.msra.mxu0 0
        %3803 = vmatprep.subr.bf16.mxu0 0
        %3804 = vmatpush1.bf16.msra.mxu0 0
        %3805 = vmatprep.subr.bf16.mxu0 0
        %3806 = vmatpush1.bf16.msra.mxu0 0
        %3807 = vmatprep.subr.bf16.mxu0 0
        %3808 = vmatpush1.bf16.msra.mxu0 0
        %3809 = vmatprep.subr.bf16.mxu0 0
        %3810 = vmatpush1.bf16.msra.mxu0 %v3791
        %3811 = vmatprep.subr.bf16.mxu0 0
        %3812 = vmatpush1.bf16.msra.mxu0 %v3790
        %3813 = vmatprep.subr.bf16.mxu0 0
        %3814 = vmatpush2.bf16.msra.mxu0 0
        %3815 = vmatprep.subr.bf16.mxu0 0
        %3816 = vmatpush2.bf16.msra.mxu0 0
        %3817 = vmatprep.subr.bf16.mxu0 0
        %3818 = vmatpush2.bf16.msra.mxu0 0
        %3819 = vmatprep.subr.bf16.mxu0 0
        %3820 = vmatpush2.bf16.msra.mxu0 0
        %3821 = vmatprep.subr.bf16.mxu0 0
        %3822 = vmatpush2.bf16.msra.mxu0 0
        %3823 = vmatprep.subr.bf16.mxu0 0
        %3824 = vmatpush2.bf16.msra.mxu0 0
        %3825 = vmatprep.subr.bf16.mxu0 0
        %3826 = vmatpush2.bf16.msra.mxu0 0
        %3827 = vmatprep.subr.bf16.mxu0 0
        %3828 = vmatpush2.bf16.msra.mxu0 0
        %3829 = vmatprep.mubr.bf16.mxu0 0
        %3830 = vmatmul.mubr.bf16.gmra.mxu0 %v3795
        %v3831 = vpop.f32.mrf.mxu0
        %v3832 = vadd.f32 0.0, %v3831
        %v3833 = vpop.f32.mrf.mxu0
        %v3834 = vpop.f32.mrf.mxu0
        %v3835 = vpop.f32.mrf.mxu0
        %3836 = vdwg.mxu0
        %v3837 = vadd.f32 %v3097, %v3832
        %v3838 = vld [vmem:[%s8 + $0x1a] sm:$0x1]
        %v3839 = vlaneseq
        %v3840 = vshrl.u32 %v3839, 7
        %v3841 = vsub.s32 0, %v3840
        %v3842 = vrot.slane %v3838, %v3841
        %v3843 = vadd.f32 %v3837, %v3842
        %v3844 = vld [vmem:[%s8 + $0x1b] sm:$0x1]
        %v3845 = vld [vmem:[%s8 + $0x1c] sm:$0x1]
        %v3846 = vsel %vm637, %v3843, 0.0
        %3847 = vadd.xlane.f32.xlu0 %v3846
        %v3848 = vpop.xlane.xlu0 %3847
        %v3849 = vmul.f32 %v3848, %v641
        %v3850 = vsub.f32 %v3843, %v3849
        %v3851 = vmul.f32 %v3850, %v3850
        %v3852 = vsel %vm637, %v3851, 0.0
        %3853 = vadd.xlane.f32.xlu0 %v3852
        %v3854 = vpop.xlane.xlu0 %3853
        %v3855 = vmul.f32 %v3854, %v641
        %v3856 = vadd.f32 %v3855, 1e-05
        %v3857 = vrsqrt.pop %v3856
        %v3858 = vmul.f32 %v3850, %v3857
        %v3859 = vlaneseq
        %v3860 = vshrl.u32 %v3859, 7
        %v3861 = vsub.s32 0, %v3860
        %v3862 = vrot.slane %v3844, %v3861
        %v3863 = vmul.f32 %v3858, %v3862
        %v3864 = vlaneseq
        %v3865 = vshrl.u32 %v3864, 7
        %v3866 = vsub.s32 0, %v3865
        %v3867 = vrot.slane %v3845, %v3866
        %v3868 = vadd.f32 %v3863, %v3867
        %v3869 = vpack.c.bf16 %v3868, %v3868
        %s3870 = scalar_lea.vmem %s9, 16
        %v3871 = vld [vmem:[%s3870] sm:$0xf]
        %v3872 = vld [vmem:[%s3870 + $0x4] sm:$0xf]
        %v3873 = vld [vmem:[%s3870 + $0x8] sm:$0xf]
        %v3874 = vld [vmem:[%s3870 + $0xc] sm:$0xf]
        %v3875 = vld [vmem:[#allocation6 + $0x1] sm:$0x1]
        %v3876 = vlaneseq
        %v3877 = vshrl.u32 %v3876, 7
        %v3878 = vsub.s32 0, %v3877
        %v3879 = vrot.slane %v3875, %v3878
        %v3884 = vunpack.c.l.b16 %v3871
        %v3885 = vunpack.c.l.b16 %v3872
        %v3886 = vunpack.c.l.b16 %v3873
        %v3887 = vunpack.c.l.b16 %v3874
        %v3888 = vpack.c.b16 %v3885, %v3884
        %v3889 = vpack.c.b16 %v3887, %v3886
        %v3893 = vsel %vm637, %v3869, 0
        %3895 = vmatprep.subr.bf16.mxu0 0
        %3896 = vmatpush1.bf16.msra.mxu0 0
        %3897 = vmatprep.subr.bf16.mxu0 0
        %3898 = vmatpush1.bf16.msra.mxu0 0
        %3899 = vmatprep.subr.bf16.mxu0 0
        %3900 = vmatpush1.bf16.msra.mxu0 0
        %3901 = vmatprep.subr.bf16.mxu0 0
        %3902 = vmatpush1.bf16.msra.mxu0 0
        %3903 = vmatprep.subr.bf16.mxu0 0
        %3904 = vmatpush1.bf16.msra.mxu0 0
        %3905 = vmatprep.subr.bf16.mxu0 0
        %3906 = vmatpush1.bf16.msra.mxu0 0
        %3907 = vmatprep.subr.bf16.mxu0 0
        %3908 = vmatpush1.bf16.msra.mxu0 %v3889
        %3909 = vmatprep.subr.bf16.mxu0 0
        %3910 = vmatpush1.bf16.msra.mxu0 %v3888
        %3911 = vmatprep.subr.bf16.mxu0 0
        %3912 = vmatpush2.bf16.msra.mxu0 0
        %3913 = vmatprep.subr.bf16.mxu0 0
        %3914 = vmatpush2.bf16.msra.mxu0 0
        %3915 = vmatprep.subr.bf16.mxu0 0
        %3916 = vmatpush2.bf16.msra.mxu0 0
        %3917 = vmatprep.subr.bf16.mxu0 0
        %3918 = vmatpush2.bf16.msra.mxu0 0
        %3919 = vmatprep.subr.bf16.mxu0 0
        %3920 = vmatpush2.bf16.msra.mxu0 0
        %3921 = vmatprep.subr.bf16.mxu0 0
        %3922 = vmatpush2.bf16.msra.mxu0 0
        %3923 = vmatprep.subr.bf16.mxu0 0
        %3924 = vmatpush2.bf16.msra.mxu0 0
        %3925 = vmatprep.subr.bf16.mxu0 0
        %3926 = vmatpush2.bf16.msra.mxu0 0
        %3927 = vmatprep.mubr.bf16.mxu0 0
        %3928 = vmatmul.mubr.bf16.gmra.mxu0 %v3893
        %v3929 = vpop.f32.mrf.mxu0
        %v3930 = vadd.f32 %v3879, %v3929
        %v3931 = vpop.f32.mrf.mxu0
        %v3932 = vpop.f32.mrf.mxu0
        %v3933 = vpop.f32.mrf.mxu0
        %3934 = vdwg.mxu0
        %v3935 = vmul.f32 %v3930, 0.5
        %v3936 = vmul.f32 %v3930, 0.044715
        %v3937 = vmul.f32 %v3936, %v3930
        %v3938 = vmul.f32 %v3937, %v3930
        %v3939 = vadd.f32 %v3930, %v3938
        %v3940 = vmul.f32 %v3939, 0.7978846
        %v3941 = vtanh.pop %v3940
        %v3942 = vadd.f32 %v3941, 1.0
        %v3943 = vmul.f32 %v3935, %v3942
        %v3944 = vpack.c.bf16 %v3943, %v3943
        %s3945 = scalar_lea.vmem %s11, 64
        %v3946 = vld [vmem:[%s3945] sm:$0xf]
        %v3947 = vld [vmem:[%s3945 + $0x4] sm:$0xf]
        %v3948 = vld [vmem:[%s3945 + $0x8] sm:$0xf]
        %v3949 = vld [vmem:[%s3945 + $0xc] sm:$0xf]
        %v3950 = vld [vmem:[%s3945 + $0x10] sm:$0xf]
        %v3951 = vld [vmem:[%s3945 + $0x14] sm:$0xf]
        %v3952 = vld [vmem:[%s3945 + $0x18] sm:$0xf]
        %v3953 = vld [vmem:[%s3945 + $0x1c] sm:$0xf]
        %v3954 = vld [vmem:[%s3945 + $0x20] sm:$0xf]
        %v3955 = vld [vmem:[%s3945 + $0x24] sm:$0xf]
        %v3956 = vld [vmem:[%s3945 + $0x28] sm:$0xf]
        %v3957 = vld [vmem:[%s3945 + $0x2c] sm:$0xf]
        %v3958 = vld [vmem:[%s3945 + $0x30] sm:$0xf]
        %v3959 = vld [vmem:[%s3945 + $0x34] sm:$0xf]
        %v3960 = vld [vmem:[%s3945 + $0x38] sm:$0xf]
        %v3961 = vld [vmem:[%s3945 + $0x3c] sm:$0xf]
        %v3978 = vunpack.c.l.b16 %v3946
        %v3979 = vunpack.c.l.b16 %v3947
        %v3980 = vunpack.c.l.b16 %v3948
        %v3981 = vunpack.c.l.b16 %v3949
        %v3982 = vunpack.c.l.b16 %v3950
        %v3983 = vunpack.c.l.b16 %v3951
        %v3984 = vunpack.c.l.b16 %v3952
        %v3985 = vunpack.c.l.b16 %v3953
        %v3986 = vunpack.c.l.b16 %v3954
        %v3987 = vunpack.c.l.b16 %v3955
        %v3988 = vunpack.c.l.b16 %v3956
        %v3989 = vunpack.c.l.b16 %v3957
        %v3990 = vunpack.c.l.b16 %v3958
        %v3991 = vunpack.c.l.b16 %v3959
        %v3992 = vunpack.c.l.b16 %v3960
        %v3993 = vunpack.c.l.b16 %v3961
        %v3994 = vpack.c.b16 %v3979, %v3978
        %v3995 = vpack.c.b16 %v3981, %v3980
        %v3996 = vpack.c.b16 %v3983, %v3982
        %v3997 = vpack.c.b16 %v3985, %v3984
        %v3998 = vpack.c.b16 %v3987, %v3986
        %v3999 = vpack.c.b16 %v3989, %v3988
        %v4000 = vpack.c.b16 %v3991, %v3990
        %v4001 = vpack.c.b16 %v3993, %v3992
        %4010 = vmatprep.subr.bf16.mxu0 0
        %4011 = vmatpush1.bf16.msra.mxu0 %v4001
        %4012 = vmatprep.subr.bf16.mxu0 0
        %4013 = vmatpush1.bf16.msra.mxu0 %v4000
        %4014 = vmatprep.subr.bf16.mxu0 0
        %4015 = vmatpush1.bf16.msra.mxu0 %v3999
        %4016 = vmatprep.subr.bf16.mxu0 0
        %4017 = vmatpush1.bf16.msra.mxu0 %v3998
        %4018 = vmatprep.subr.bf16.mxu0 0
        %4019 = vmatpush1.bf16.msra.mxu0 %v3997
        %4020 = vmatprep.subr.bf16.mxu0 0
        %4021 = vmatpush1.bf16.msra.mxu0 %v3996
        %4022 = vmatprep.subr.bf16.mxu0 0
        %4023 = vmatpush1.bf16.msra.mxu0 %v3995
        %4024 = vmatprep.subr.bf16.mxu0 0
        %4025 = vmatpush1.bf16.msra.mxu0 %v3994
        %4026 = vmatprep.subr.bf16.mxu0 0
        %4027 = vmatpush2.bf16.msra.mxu0 0
        %4028 = vmatprep.subr.bf16.mxu0 0
        %4029 = vmatpush2.bf16.msra.mxu0 0
        %4030 = vmatprep.subr.bf16.mxu0 0
        %4031 = vmatpush2.bf16.msra.mxu0 0
        %4032 = vmatprep.subr.bf16.mxu0 0
        %4033 = vmatpush2.bf16.msra.mxu0 0
        %4034 = vmatprep.subr.bf16.mxu0 0
        %4035 = vmatpush2.bf16.msra.mxu0 0
        %4036 = vmatprep.subr.bf16.mxu0 0
        %4037 = vmatpush2.bf16.msra.mxu0 0
        %4038 = vmatprep.subr.bf16.mxu0 0
        %4039 = vmatpush2.bf16.msra.mxu0 0
        %4040 = vmatprep.subr.bf16.mxu0 0
        %4041 = vmatpush2.bf16.msra.mxu0 0
        %4042 = vmatprep.mubr.bf16.mxu0 0
        %4043 = vmatmul.mubr.bf16.gmra.mxu0 %v3944
        %v4044 = vpop.f32.mrf.mxu0
        %v4045 = vadd.f32 0.0, %v4044
        %v4046 = vpop.f32.mrf.mxu0
        %v4047 = vpop.f32.mrf.mxu0
        %v4048 = vpop.f32.mrf.mxu0
        %4049 = vdwg.mxu0
        %v4050 = vadd.f32 %v3843, %v4045
        %v4051 = vld [vmem:[%s8 + $0x1d] sm:$0x1]
        %v4052 = vlaneseq
        %v4053 = vshrl.u32 %v4052, 7
        %v4054 = vsub.s32 0, %v4053
        %v4055 = vrot.slane %v4051, %v4054
        %v4056 = vadd.f32 %v4050, %v4055
        %v4057 = vld [vmem:[#allocation4] sm:$0x1]
        %v4058 = vld [vmem:[#allocation4 + $0x1] sm:$0x1]
        %v4059 = vsel %vm637, %v4056, 0.0
        %4060 = vadd.xlane.f32.xlu0 %v4059
        %v4061 = vpop.xlane.xlu0 %4060
        %v4062 = vmul.f32 %v4061, %v641
        %v4063 = vsub.f32 %v4056, %v4062
        %v4064 = vmul.f32 %v4063, %v4063
        %v4065 = vsel %vm637, %v4064, 0.0
        %4066 = vadd.xlane.f32.xlu0 %v4065
        %v4067 = vpop.xlane.xlu0 %4066
        %v4068 = vmul.f32 %v4067, %v641
        %v4069 = vadd.f32 %v4068, 1e-05
        %v4070 = vrsqrt.pop %v4069
        %v4071 = vmul.f32 %v4063, %v4070
        %v4072 = vlaneseq
        %v4073 = vshrl.u32 %v4072, 7
        %v4074 = vsub.s32 0, %v4073
        %v4075 = vrot.slane %v4057, %v4074
        %v4076 = vmul.f32 %v4071, %v4075
        %v4077 = vlaneseq
        %v4078 = vshrl.u32 %v4077, 7
        %v4079 = vsub.s32 0, %v4078
        %v4080 = vrot.slane %v4058, %v4079
        %v4081 = vadd.f32 %v4076, %v4080
        %v4082 = vpack.c.bf16 %v4081, %v4081
        %v4084 = vsel %vm637, %v4082, 0
        %v4087 = vsel %vm637, %v565, 0
        %v4090 = vsel %vm637, %v566, 0
        %v4093 = vsel %vm637, %v567, 0
        %v4096 = vsel %vm637, %v568, 0
        %v4099 = vsel %vm637, %v569, 0
        %v4102 = vsel %vm637, %v570, 0
        %v4105 = vsel %vm637, %v571, 0
        %v4108 = vsel %vm637, %v572, 0
        %4110 = vmatprep.subr.bf16.mxu0 0
        %4111 = vmatpush1.bf16.xpose.msra.mxu0 %v4108
        %4112 = vmatprep.subr.bf16.mxu0 0
        %4113 = vmatpush1.bf16.xpose.msra.mxu0 %v4105
        %4114 = vmatprep.subr.bf16.mxu0 0
        %4115 = vmatpush1.bf16.xpose.msra.mxu0 %v4102
        %4116 = vmatprep.subr.bf16.mxu0 0
        %4117 = vmatpush1.bf16.xpose.msra.mxu0 %v4099
        %4118 = vmatprep.subr.bf16.mxu0 0
        %4119 = vmatpush1.bf16.xpose.msra.mxu0 %v4096
        %4120 = vmatprep.subr.bf16.mxu0 0
        %4121 = vmatpush1.bf16.xpose.msra.mxu0 %v4093
        %4122 = vmatprep.subr.bf16.mxu0 0
        %4123 = vmatpush1.bf16.xpose.msra.mxu0 %v4090
        %4124 = vmatprep.subr.bf16.mxu0 0
        %4125 = vmatpush1.bf16.xpose.msra.mxu0 %v4087
        %4126 = vmatprep.subr.bf16.mxu0 0
        %4127 = vmatpush2.bf16.xpose.msra.mxu0 0
        %4128 = vmatprep.subr.bf16.mxu0 0
        %4129 = vmatpush2.bf16.xpose.msra.mxu0 0
        %4130 = vmatprep.subr.bf16.mxu0 0
        %4131 = vmatpush2.bf16.xpose.msra.mxu0 0
        %4132 = vmatprep.subr.bf16.mxu0 0
        %4133 = vmatpush2.bf16.xpose.msra.mxu0 0
        %4134 = vmatprep.subr.bf16.mxu0 0
        %4135 = vmatpush2.bf16.xpose.msra.mxu0 0
        %4136 = vmatprep.subr.bf16.mxu0 0
        %4137 = vmatpush2.bf16.xpose.msra.mxu0 0
        %4138 = vmatprep.subr.bf16.mxu0 0
        %4139 = vmatpush2.bf16.xpose.msra.mxu0 0
        %4140 = vmatprep.subr.bf16.mxu0 0
        %4141 = vmatpush2.bf16.xpose.msra.mxu0 0
        %4142 = vmatprep.mubr.bf16.mxu0 0
        %4143 = vmatmul.mubr.bf16.gmra.mxu0 %v4084
        %v4144 = vpop.f32.mrf.mxu0
        %v4145 = vadd.f32 0.0, %v4144
        %v4146 = vpop.f32.mrf.mxu0
        %v4147 = vpop.f32.mrf.mxu0
        %v4148 = vpop.f32.mrf.mxu0
        %4149 = vdwg.mxu0
        %4150 = vst [vmem:[%s500] sm:$0xff] %v4145
        %4151 = vmax.xlane.f32.xlu0 %v4145
        %v4152 = vpop.xlane.xlu0 %4151
        %v4153 = vsub.f32 %v4145, %v4152
        %v4154 = vmul.f32 %v4153, 1.442695
        %v4155 = vpow.pop %v4154
        %4156 = vadd.xlane.f32.xlu0 %v4155
        %v4157 = vpop.xlane.xlu0 %4156
        %v4158 = vlog2.pop %v4157
        %v4159 = vmul.f32 %v4158, 0.6931472
        %v4160 = vadd.f32 %v4159, %v4152
        %4161 = vset.pattern.permute.xlu0 1
        %4162 = vperm.xlu0 %4161, %v502
        %v4163 = vpop.permute.xlu0 %4162
        %vm4164 = vcmp.eq.s32.totalorder %v509, %v4163
        %v4165 = vsel %vm4164, %v4145, 0.0
        %4166 = vadd.xlane.f32.xlu0 %v4165
        %v4167 = vpop.xlane.xlu0 %4166
        %vm4168 = vcmp.ne.s32.totalorder %v502, 0
        %v4169 = vsel %vm4168, 1, 0
        %v4170 = vcvt.s32.f32 %v4169
        %v4171 = vsub.f32 %v4160, %v4167
        %v4172 = vmul.f32 %v4171, %v4170
        %4174 = vrot.lane.b32.xlu0 %v4172, 127
        %v4175 = vpop.permute.xlu0 %4174
        %vm4177 = vcmask 7168
        %v4178 = vsel %vm4177, %v4175, 0.0
        %4179 = vadd.xlane.f32.xlu0 %v4178
        %v4180 = vpop.xlane.xlu0 %4179
        %v4181 = vrot.slane %v4180, 4
        %v4182 = vadd.f32 %v4180, %v4181
        %v4183 = vrot.slane %v4182, 2
        %v4184 = vadd.f32 %v4182, %v4183
        %v4185 = vrot.slane %v4184, 1
        %v4186 = vadd.f32 %v4184, %v4185
        %s4187 = vtos %v4186
        %4189 = vrot.lane.b32.xlu0 %v4170, 127
        %v4190 = vpop.permute.xlu0 %4189
        %v4192 = vsel %vm4177, %v4190, 0.0
        %4193 = vadd.xlane.f32.xlu0 %v4192
        %v4194 = vpop.xlane.xlu0 %4193
        %v4195 = vrot.slane %v4194, 4
        %v4196 = vadd.f32 %v4194, %v4195
        %v4197 = vrot.slane %v4196, 2
        %v4198 = vadd.f32 %v4196, %v4197
        %v4199 = vrot.slane %v4198, 1
        %v4200 = vadd.f32 %v4198, %v4199
        %s4201 = vtos %v4200
        %vm4202 = vcmp.eq.s32.totalorder %v509, 0
        %vm4203 = vcmp.eq.s32.totalorder %v509, 1
        %v4204 = vstv %s4201
        %v4205 = vsel %vm4203, %v4204, 0.0
        %v4206 = vstv %s4187
        %v4207 = vsel %vm4202, %v4206, %v4205
        %4208 = vst [vmem:[%s500 + $0x8] sm:$0x1] %v4207
        %p4209 = scmp.lt.s32.totalorder %s27, 1
        %s4210 = scalar_select %p4209, %s27, 1
        %s4211 = smul.addr %s4210, 2
        %s4212 = smul.addr %s4211, 8
        %s4213 = scalar_lea.vmem %s12, %s4212
        // Predicated region
        $region81: #{gpt_visual_dialog_decoder_forward.1} parent=67 // pred_check
          %p4214 = pneg %p317
        $region82: #{gpt_visual_dialog_decoder_forward.1} parent=67 // pred_check_branch
          %4216 = sbr.rel (%p4214) target = $region84
        $region83: #{gpt_visual_dialog_decoder_forward.1} parent=67 // pred_region
          _
        $region84: #{gpt_visual_dialog_decoder_forward.1} parent=67 // pred_fallthru
          _
      $region68: #{gpt_visual_dialog_decoder_forward.1} parent=5 // pred_fallthru
        _
      %p4217 = scmp.le.s32.totalorder 2, %s22
      // Predicated region
      $region85: #{gpt_visual_dialog_decoder_forward.1} parent=5 // pred_check
        %p4218 = pneg %p4217
      $region86: #{gpt_visual_dialog_decoder_forward.1} parent=5 // pred_check_branch
        %4220 = sbr.rel (%p4218) target = $region88
      $region87: #{gpt_visual_dialog_decoder_forward.1} parent=5 // pred_region
        %s4221 = ssub.s32 %s22, 2
        // Predicated region
        $region89: #{gpt_visual_dialog_decoder_forward.1} parent=87 // pred_check
          %p4222 = pneg %p323
        $region90: #{gpt_visual_dialog_decoder_forward.1} parent=87 // pred_check_branch
          %4224 = sbr.rel (%p4222) target = $region92
        $region91: #{gpt_visual_dialog_decoder_forward.1} parent=87 // pred_region
          %p4225 = scmp.lt.s32.totalorder %s28, 1
          %s4226 = scalar_select %p4225, %s28, 1
          %s4227 = smul.addr %s4226, 2
          %s4228 = smul.addr %s4227, 8
          %s4229 = scalar_lea.vmem %s12, %s4228
        $region92: #{gpt_visual_dialog_decoder_forward.1} parent=87 // pred_fallthru
          _
      $region88: #{gpt_visual_dialog_decoder_forward.1} parent=5 // pred_fallthru
        _
    $region6: #{gpt_visual_dialog_decoder_forward.1} parent=1 // loop_footer
      %s26 = sadd.s32 1, %s22
    $region7: #{gpt_visual_dialog_decoder_forward.1} parent=1 // loop_footer_branch
      %21 = sbr.rel target = $region3
    $region8: #{gpt_visual_dialog_decoder_forward.1} parent=1 // loop_exit
      _
    %4230 = vsyncpa [#allocation3], 1
    %s4231 = scalar_lea.sflag [#allocation3], 1
    %4232 = vsyncpa %s4231, 1
    %4233 = vsyncpa [#allocation5], 1

</llo_original>
